<compile_context>
chip_gen: v5e
topology: v5e:2x2
jax: 0.10.0
libtpu: 0.0.40
codegen_flags: <defaults>
</compile_context>

<pallas_src>
import functools

import jax
import jax.numpy as jnp
from jax import lax
from jax.experimental import pallas as pl
from jax.experimental.pallas import tpu as pltpu


def _round_up(v, m):
    return (v + m - 1) // m * m


def _build_patch(x_ref, patch_ref, *, c_in, kc_pad, s_lanes, hp, wp, group_stores):
    """Builds the (Kc_pad, S_lanes) im2col patch in VMEM from the resident input block."""
    taps = [kd * hp * wp + kh * wp + kw
            for kd in range(3) for kh in range(3) for kw in range(3)]

    if group_stores:
        # Sublane-aligned grouped stores: concatenate taps in registers until a 16-row
        # (bf16 packed-tile) boundary, then emit one full, unmasked store.
        sub = 16

        def flush(row, pending, n_pending):
            blk = pending[0] if len(pending) == 1 else jnp.concatenate(pending, axis=0)
            patch_ref[row:row + n_pending, :] = blk
            return row + n_pending

        row, pending, n_pending = 0, [], 0
        for shift in taps:
            pending.append(x_ref[0, :, pl.ds(shift, s_lanes)])
            n_pending += c_in
            if n_pending % sub == 0:
                row = flush(row, pending, n_pending)
                pending, n_pending = [], 0
        # Final store carries the remaining taps plus the Kc -> Kc_pad zero padding rows
        # (their weight columns are zero, but uninitialized VMEM could hold NaNs, so the
        # zeroing must stay -- here it rides along an aligned store for free).
        n_zero = kc_pad - row - n_pending
        if n_zero > 0:
            pending.append(jnp.zeros((n_zero, s_lanes), jnp.bfloat16))
            n_pending += n_zero
        if n_pending > 0:
            flush(row, pending, n_pending)
    else:
        # Fallback: per-tap (partial / masked) stores -- always lowers.
        kc = len(taps) * c_in
        if kc_pad > kc:
            patch_ref[kc:kc_pad, :] = jnp.zeros((kc_pad - kc, s_lanes), jnp.bfloat16)
        row = 0
        for shift in taps:
            patch_ref[row:row + c_in, :] = x_ref[0, :, pl.ds(shift, s_lanes)]
            row += c_in


def _conv3d_gn_lrelu_kernel(x_ref, w_ref, p_ref, pool_ref, m_ref, o_ref, patch_ref, *,
                            c_in, kc_pad, s_lanes, hp, wp, eps, neg_slope, group_stores):
    # x_ref:     (1, C_in, Lpad)      bf16  zero-padded, spatially-flattened input
    # w_ref:     (C_out, Kc_pad)      bf16  (kd,kh,kw)-major / C_in-minor, K zero-padded
    # p_ref:     (C_out, 3)           f32   [conv bias, gamma, beta]
    # pool_ref:  (C_out, C_out)       f32   block-diag group pooling / (cg * D*H*W)
    # m_ref:     (1, S_lanes)         f32   1.0 where the lane is a real output voxel
    # o_ref:     (1, C_out, S_lanes)  bf16
    # patch_ref: (Kc_pad, S_lanes)    bf16  VMEM scratch: in-kernel im2col

    _build_patch(x_ref, patch_ref, c_in=c_in, kc_pad=kc_pad, s_lanes=s_lanes,
                 hp=hp, wp=wp, group_stores=group_stores)

    # Conv3d: one bf16 MXU matmul with f32 accumulation.
    y = jnp.dot(w_ref[...], patch_ref[...], preferred_element_type=jnp.float32)
    y = y + p_ref[:, 0:1]                                   # conv bias

    # ---- GroupNorm statistics (f32); only valid lanes contribute ----
    mask = m_ref[...]                                       # (1, S_lanes)
    ym = y * mask
    ch_sum = jnp.sum(ym, axis=1, keepdims=True)             # (C_out, 1)
    ch_sq = jnp.sum(ym * y, axis=1, keepdims=True)          # (C_out, 1) = sum(mask*y^2)
    # Tiny constant pooling matmuls (pool pre-scaled by 1/(cg*DHW) in the wrapper).
    mu = jnp.dot(pool_ref[...], ch_sum, preferred_element_type=jnp.float32)
    ex2 = jnp.dot(pool_ref[...], ch_sq, preferred_element_type=jnp.float32)
    var = jnp.maximum(ex2 - mu * mu, 0.0)
    inv = lax.rsqrt(var + eps)                              # (C_out, 1)

    scale = inv * p_ref[:, 1:2]                             # gamma / sigma
    bias = p_ref[:, 2:3] - mu * scale                       # beta - mu * gamma / sigma
    yn = y * scale + bias
    act = jnp.where(yn > 0, yn, neg_slope * yn)
    # Unmasked lane-dense bf16 store; padded-layout garbage lanes are sliced off in the
    # wrapper, so no output mask multiply is needed.
    o_ref[0] = act.astype(o_ref.dtype)


def conv3d_groupnorm_lrelu(x, w, b, gamma, beta, *, kernel_size=3, padding=1,
                           num_groups=8, eps=1e-5, neg_slope=0.2):
    """x: (N, C_in, D, H, W); w: (C_out, C_in, k, k, k); b/gamma/beta: (C_out,)."""
    assert kernel_size == 3 and padding == 1
    N, C_in, D, H, W = x.shape
    C_out = w.shape[0]
    assert C_out % num_groups == 0
    k = kernel_size
    Dp, Hp, Wp = D + 2 * padding, H + 2 * padding, W + 2 * padding
    Kc = C_in * k * k * k
    Kc_pad = _round_up(Kc, 128)
    cg = C_out // num_groups

    # Lane axis = flat index q = d*Hp*Wp + h*Wp + w over the *padded* layout, so every
    # (kd,kh,kw) tap is a contiguous lane slice at offset kd*Hp*Wp + kh*Wp + kw.  Lanes
    # with h >= H, w >= W or q >= D*Hp*Wp carry garbage; they are masked out of the
    # statistics and sliced off at the end.
    S_base = D * Hp * Wp
    S_lanes = _round_up(S_base, 128)
    max_shift = 2 * Hp * Wp + 2 * Wp + 2                    # deepest tap offset
    Lp = Dp * Hp * Wp
    extra_d = -(-max(S_lanes + max_shift - Lp, 0) // (Hp * Wp))
    Lpad = (Dp + extra_d) * Hp * Wp

    # Single wrapper pad (bf16 cast first): spatial halo + extra trailing D planes that
    # double as the flat-lane tail; the trailing reshape is a free dim-merge.
    xp = jnp.pad(x.astype(jnp.bfloat16),
                 ((0, 0), (0, 0),
                  (padding, padding + extra_d),
                  (padding, padding),
                  (padding, padding)))
    x_flat = xp.reshape(N, C_in, Lpad)

    # Weights: (kd,kh,kw)-major / C_in-minor, K zero-padded to 128, bf16.
    w_r = jnp.transpose(w, (0, 2, 3, 4, 1)).reshape(C_out, Kc)
    w_pad = jnp.pad(w_r, ((0, 0), (0, Kc_pad - Kc))).astype(jnp.bfloat16)

    # Conv bias + GroupNorm affine folded into a single (C_out, 3) block.
    params = jnp.stack([b, gamma, beta], axis=1).astype(jnp.float32)

    # Block-diagonal group pooling matrix, pre-scaled by 1/(cg*D*H*W), built once here
    # instead of with broadcasted_iota on every grid step.
    gidx = jnp.arange(C_out, dtype=jnp.int32) // cg
    pool = (gidx[:, None] == gidx[None, :]).astype(jnp.float32) / float(cg * D * H * W)

    # Valid-lane mask (statistics only).
    q = jnp.arange(S_lanes, dtype=jnp.int32)
    valid = (q // (Hp * Wp) < D) & ((q // Wp) % Hp < H) & (q % Wp < W)
    mask = valid.astype(jnp.float32).reshape(1, S_lanes)

    # Roofline hint so XLA schedules the surrounding pad/cast/slice ops sensibly.
    flops = 2 * N * C_out * Kc_pad * S_lanes + 10 * N * C_out * S_lanes
    bytes_accessed = (x_flat.size * 2 + w_pad.size * 2 + N * C_out * S_lanes * 2
                      + (params.size + pool.size + mask.size) * 4)
    cost = pl.CostEstimate(flops=int(flops), transcendentals=int(N * C_out),
                           bytes_accessed=int(bytes_accessed))

    # Per-generation VMEM budget: resident block + patch scratch + headroom, capped well
    # below physical capacity (64 MiB/TC on v7x, 128 MiB on v5e/v6e).
    vmem_need = (Kc_pad * S_lanes * 2            # patch scratch
                 + 2 * C_in * Lpad * 2           # double-buffered input block
                 + 2 * C_out * Kc_pad * 2        # weights
                 + 2 * C_out * S_lanes * 2       # double-buffered output block
                 + 6 * C_out * S_lanes * 4       # f32 temporaries headroom
                 + 2 * int(params.size + pool.size + mask.size) * 4)
    try:
        vmem_cap = pltpu.get_tpu_info().vmem_capacity_bytes
    except Exception:  # conservative fallback (v7x per-TC capacity)
        vmem_cap = 64 * 1024 * 1024
    vmem_limit = int(min(max(32 * 1024 * 1024, 2 * vmem_need), int(0.75 * vmem_cap)))

    def build_call(group_stores):
        kernel = functools.partial(
            _conv3d_gn_lrelu_kernel, c_in=C_in, kc_pad=Kc_pad, s_lanes=S_lanes,
            hp=Hp, wp=Wp, eps=eps, neg_slope=neg_slope, group_stores=group_stores)
        return pl.pallas_call(
            kernel,
            out_shape=jax.ShapeDtypeStruct((N, C_out, S_lanes), jnp.bfloat16),
            grid_spec=pltpu.PrefetchScalarGridSpec(
                num_scalar_prefetch=0,
                grid=(N,),
                in_specs=[
                    pl.BlockSpec((1, C_in, Lpad), lambda n: (n, 0, 0)),
                    pl.BlockSpec((C_out, Kc_pad), lambda n: (0, 0)),
                    pl.BlockSpec((C_out, 3), lambda n: (0, 0)),
                    pl.BlockSpec((C_out, C_out), lambda n: (0, 0)),
                    pl.BlockSpec((1, S_lanes), lambda n: (0, 0)),
                ],
                out_specs=pl.BlockSpec((1, C_out, S_lanes), lambda n: (n, 0, 0)),
                scratch_shapes=[pltpu.VMEM((Kc_pad, S_lanes), jnp.bfloat16)],
            ),
            compiler_params=pltpu.CompilerParams(
                dimension_semantics=("parallel",),
                vmem_limit_bytes=vmem_limit),
            cost_estimate=cost,
        )

    args = (x_flat, w_pad, params, pool, mask)
    try:
        # Preferred path: sublane-aligned grouped patch stores (requires Mosaic support
        # for unaligned sublane concatenation).  We execute eagerly, so a lowering
        # failure surfaces here and we fall back to the numerically identical per-tap
        # (masked-store) variant.
        out = jax.block_until_ready(build_call(True)(*args))
    except Exception:
        out = build_call(False)(*args)

    # Drop padded-layout garbage lanes: (N, C_out, D, Hp, Wp) -> valid (D, H, W).
    out = out[:, :, :S_base].reshape(N, C_out, D, Hp, Wp)[:, :, :, :H, :W]
    return out


def _reference(x, w, b, gamma, beta, *, num_groups=8, eps=1e-5, neg_slope=0.2):
    y = lax.conv_general_dilated(
        x, w, window_strides=(1, 1, 1), padding=((1, 1), (1, 1), (1, 1)),
        dimension_numbers=("NCDHW", "OIDHW", "NCDHW"))
    y = y + b.reshape(1, -1, 1, 1, 1)
    N, C, D, H, W = y.shape
    yg = y.reshape(N, num_groups, C // num_groups, D, H, W)
    mu = jnp.mean(yg, axis=(2, 3, 4, 5), keepdims=True)
    var = jnp.mean((yg - mu) ** 2, axis=(2, 3, 4, 5), keepdims=True)
    yn = ((yg - mu) / jnp.sqrt(var + eps)).reshape(N, C, D, H, W)
    yn = yn * gamma.reshape(1, -1, 1, 1, 1) + beta.reshape(1, -1, 1, 1, 1)
    return jnp.where(yn > 0, yn, neg_slope * yn)


if __name__ == "__main__":
    # Small shapes consistent with the module: Conv3d input is (N, C_in, D, H, W).
    N, C_in, C_out = 2, 4, 16
    D = H = W = 8
    num_groups = 8
    k = 3

    key = jax.random.PRNGKey(0)
    kx, kw, kb, kg, kbe = jax.random.split(key, 5)
    x = jax.random.normal(kx, (N, C_in, D, H, W), dtype=jnp.float32)
    w = 0.1 * jax.random.normal(kw, (C_out, C_in, k, k, k), dtype=jnp.float32)
    b = 0.1 * jax.random.normal(kb, (C_out,), dtype=jnp.float32)
    gamma = 1.0 + 0.1 * jax.random.normal(kg, (C_out,), dtype=jnp.float32)
    beta = 0.1 * jax.random.normal(kbe, (C_out,), dtype=jnp.float32)

    out = conv3d_groupnorm_lrelu(x, w, b, gamma, beta, num_groups=num_groups)
    out = jax.block_until_ready(out)

    ref = _reference(x, w, b, gamma, beta, num_groups=num_groups)
    assert out.shape == (N, C_out, D, H, W)
    out_f32 = out.astype(jnp.float32)
    assert jnp.allclose(out_f32, ref, rtol=2e-2, atol=2e-2), float(
        jnp.max(jnp.abs(out_f32 - ref)))

    print("KERNEL_OK")
</pallas_src>

<mosaic_0001>
module attributes {stable_mosaic.version = 11 : i64} {
  func.func @_conv3d_gn_lrelu_kernel(%arg0: i32, %arg1: memref<1x4x1200xbf16, #tpu.memory_space<vmem>>, %arg2: memref<16x128xbf16, #tpu.memory_space<vmem>>, %arg3: memref<16x3xf32, #tpu.memory_space<vmem>>, %arg4: memref<16x16xf32, #tpu.memory_space<vmem>>, %arg5: memref<1x896xf32, #tpu.memory_space<vmem>>, %arg6: memref<1x16x896xbf16, #tpu.memory_space<vmem>>, %arg7: memref<128x896xbf16, #tpu.memory_space<vmem>>) attributes {dimension_semantics = [#tpu.dimension_semantics<parallel>], iteration_bounds = array<i64: 2>, scalar_prefetch = 0 : i64, scratch_operands = 1 : i64, tpu.core_type = #tpu.core_type<tc>, window_params = [{transform_indices = @transform_0, window_bounds = array<i64: 1, 4, 1200>}, {pipeline_mode = #tpu.pipeline_mode<synchronous>, transform_indices = @transform_1, window_bounds = array<i64: 16, 128>}, {pipeline_mode = #tpu.pipeline_mode<synchronous>, transform_indices = @transform_2, window_bounds = array<i64: 16, 3>}, {pipeline_mode = #tpu.pipeline_mode<synchronous>, transform_indices = @transform_3, window_bounds = array<i64: 16, 16>}, {pipeline_mode = #tpu.pipeline_mode<synchronous>, transform_indices = @transform_4, window_bounds = array<i64: 1, 896>}, {transform_indices = @transform_5, window_bounds = array<i64: 1, 16, 896>}]} {
    %c0 = arith.constant 0 : index
    %c0_0 = arith.constant 0 : index
    %c0_1 = arith.constant 0 : index
    %0 = vector.load %arg1[%c0, %c0_0, %c0_1] : memref<1x4x1200xbf16, #tpu.memory_space<vmem>>, vector<1x4x896xbf16>
    %1 = vector.shape_cast %0 : vector<1x4x896xbf16> to vector<4x896xbf16>
    %c0_2 = arith.constant 0 : index
    %c0_3 = arith.constant 0 : index
    %c1 = arith.constant 1 : index
    %2 = vector.load %arg1[%c0_2, %c0_3, %c1] : memref<1x4x1200xbf16, #tpu.memory_space<vmem>>, vector<1x4x896xbf16>
    %3 = vector.shape_cast %2 : vector<1x4x896xbf16> to vector<4x896xbf16>
    %c0_4 = arith.constant 0 : index
    %c0_5 = arith.constant 0 : index
    %c2 = arith.constant 2 : index
    %4 = vector.load %arg1[%c0_4, %c0_5, %c2] : memref<1x4x1200xbf16, #tpu.memory_space<vmem>>, vector<1x4x896xbf16>
    %5 = vector.shape_cast %4 : vector<1x4x896xbf16> to vector<4x896xbf16>
    %c0_6 = arith.constant 0 : index
    %c0_7 = arith.constant 0 : index
    %c10 = arith.constant 10 : index
    %6 = vector.load %arg1[%c0_6, %c0_7, %c10] : memref<1x4x1200xbf16, #tpu.memory_space<vmem>>, vector<1x4x896xbf16>
    %7 = vector.shape_cast %6 : vector<1x4x896xbf16> to vector<4x896xbf16>
    %8 = tpu.concatenate %1, %3, %5, %7 in 0 : vector<4x896xbf16>, vector<4x896xbf16>, vector<4x896xbf16>, vector<4x896xbf16> -> vector<16x896xbf16>
    %c0_8 = arith.constant 0 : index
    %c0_9 = arith.constant 0 : index
    %9 = vector.load %arg7[%c0_8, %c0_9] : memref<128x896xbf16, #tpu.memory_space<vmem>>, vector<16x896xbf16>
    tpu.vector_store %arg7[%c0_8, %c0_9], %8 {strides = array<i32>} : memref<128x896xbf16, #tpu.memory_space<vmem>>, vector<16x896xbf16>,
    %c0_10 = arith.constant 0 : index
    %c0_11 = arith.constant 0 : index
    %c11 = arith.constant 11 : index
    %10 = vector.load %arg1[%c0_10, %c0_11, %c11] : memref<1x4x1200xbf16, #tpu.memory_space<vmem>>, vector<1x4x896xbf16>
    %11 = vector.shape_cast %10 : vector<1x4x896xbf16> to vector<4x896xbf16>
    %c0_12 = arith.constant 0 : index
    %c0_13 = arith.constant 0 : index
    %c12 = arith.constant 12 : index
    %12 = vector.load %arg1[%c0_12, %c0_13, %c12] : memref<1x4x1200xbf16, #tpu.memory_space<vmem>>, vector<1x4x896xbf16>
    %13 = vector.shape_cast %12 : vector<1x4x896xbf16> to vector<4x896xbf16>
    %c0_14 = arith.constant 0 : index
    %c0_15 = arith.constant 0 : index
    %c20 = arith.constant 20 : index
    %14 = vector.load %arg1[%c0_14, %c0_15, %c20] : memref<1x4x1200xbf16, #tpu.memory_space<vmem>>, vector<1x4x896xbf16>
    %15 = vector.shape_cast %14 : vector<1x4x896xbf16> to vector<4x896xbf16>
    %c0_16 = arith.constant 0 : index
    %c0_17 = arith.constant 0 : index
    %c21 = arith.constant 21 : index
    %16 = vector.load %arg1[%c0_16, %c0_17, %c21] : memref<1x4x1200xbf16, #tpu.memory_space<vmem>>, vector<1x4x896xbf16>
    %17 = vector.shape_cast %16 : vector<1x4x896xbf16> to vector<4x896xbf16>
    %18 = tpu.concatenate %11, %13, %15, %17 in 0 : vector<4x896xbf16>, vector<4x896xbf16>, vector<4x896xbf16>, vector<4x896xbf16> -> vector<16x896xbf16>
    %c16 = arith.constant 16 : index
    %c0_18 = arith.constant 0 : index
    %19 = vector.load %arg7[%c16, %c0_18] : memref<128x896xbf16, #tpu.memory_space<vmem>>, vector<16x896xbf16>
    tpu.vector_store %arg7[%c16, %c0_18], %18 {strides = array<i32>} : memref<128x896xbf16, #tpu.memory_space<vmem>>, vector<16x896xbf16>,
    %c0_19 = arith.constant 0 : index
    %c0_20 = arith.constant 0 : index
    %c22 = arith.constant 22 : index
    %20 = vector.load %arg1[%c0_19, %c0_20, %c22] : memref<1x4x1200xbf16, #tpu.memory_space<vmem>>, vector<1x4x896xbf16>
    %21 = vector.shape_cast %20 : vector<1x4x896xbf16> to vector<4x896xbf16>
    %c0_21 = arith.constant 0 : index
    %c0_22 = arith.constant 0 : index
    %c100 = arith.constant 100 : index
    %22 = vector.load %arg1[%c0_21, %c0_22, %c100] : memref<1x4x1200xbf16, #tpu.memory_space<vmem>>, vector<1x4x896xbf16>
    %23 = vector.shape_cast %22 : vector<1x4x896xbf16> to vector<4x896xbf16>
    %c0_23 = arith.constant 0 : index
    %c0_24 = arith.constant 0 : index
    %c101 = arith.constant 101 : index
    %24 = vector.load %arg1[%c0_23, %c0_24, %c101] : memref<1x4x1200xbf16, #tpu.memory_space<vmem>>, vector<1x4x896xbf16>
    %25 = vector.shape_cast %24 : vector<1x4x896xbf16> to vector<4x896xbf16>
    %c0_25 = arith.constant 0 : index
    %c0_26 = arith.constant 0 : index
    %c102 = arith.constant 102 : index
    %26 = vector.load %arg1[%c0_25, %c0_26, %c102] : memref<1x4x1200xbf16, #tpu.memory_space<vmem>>, vector<1x4x896xbf16>
    %27 = vector.shape_cast %26 : vector<1x4x896xbf16> to vector<4x896xbf16>
    %28 = tpu.concatenate %21, %23, %25, %27 in 0 : vector<4x896xbf16>, vector<4x896xbf16>, vector<4x896xbf16>, vector<4x896xbf16> -> vector<16x896xbf16>
    %c32 = arith.constant 32 : index
    %c0_27 = arith.constant 0 : index
    %29 = vector.load %arg7[%c32, %c0_27] : memref<128x896xbf16, #tpu.memory_space<vmem>>, vector<16x896xbf16>
    tpu.vector_store %arg7[%c32, %c0_27], %28 {strides = array<i32>} : memref<128x896xbf16, #tpu.memory_space<vmem>>, vector<16x896xbf16>,
    %c0_28 = arith.constant 0 : index
    %c0_29 = arith.constant 0 : index
    %c110 = arith.constant 110 : index
    %30 = vector.load %arg1[%c0_28, %c0_29, %c110] : memref<1x4x1200xbf16, #tpu.memory_space<vmem>>, vector<1x4x896xbf16>
    %31 = vector.shape_cast %30 : vector<1x4x896xbf16> to vector<4x896xbf16>
    %c0_30 = arith.constant 0 : index
    %c0_31 = arith.constant 0 : index
    %c111 = arith.constant 111 : index
    %32 = vector.load %arg1[%c0_30, %c0_31, %c111] : memref<1x4x1200xbf16, #tpu.memory_space<vmem>>, vector<1x4x896xbf16>
    %33 = vector.shape_cast %32 : vector<1x4x896xbf16> to vector<4x896xbf16>
    %c0_32 = arith.constant 0 : index
    %c0_33 = arith.constant 0 : index
    %c112 = arith.constant 112 : index
    %34 = vector.load %arg1[%c0_32, %c0_33, %c112] : memref<1x4x1200xbf16, #tpu.memory_space<vmem>>, vector<1x4x896xbf16>
    %35 = vector.shape_cast %34 : vector<1x4x896xbf16> to vector<4x896xbf16>
    %c0_34 = arith.constant 0 : index
    %c0_35 = arith.constant 0 : index
    %c120 = arith.constant 120 : index
    %36 = vector.load %arg1[%c0_34, %c0_35, %c120] : memref<1x4x1200xbf16, #tpu.memory_space<vmem>>, vector<1x4x896xbf16>
    %37 = vector.shape_cast %36 : vector<1x4x896xbf16> to vector<4x896xbf16>
    %38 = tpu.concatenate %31, %33, %35, %37 in 0 : vector<4x896xbf16>, vector<4x896xbf16>, vector<4x896xbf16>, vector<4x896xbf16> -> vector<16x896xbf16>
    %c48 = arith.constant 48 : index
    %c0_36 = arith.constant 0 : index
    %39 = vector.load %arg7[%c48, %c0_36] : memref<128x896xbf16, #tpu.memory_space<vmem>>, vector<16x896xbf16>
    tpu.vector_store %arg7[%c48, %c0_36], %38 {strides = array<i32>} : memref<128x896xbf16, #tpu.memory_space<vmem>>, vector<16x896xbf16>,
    %c0_37 = arith.constant 0 : index
    %c0_38 = arith.constant 0 : index
    %c121 = arith.constant 121 : index
    %40 = vector.load %arg1[%c0_37, %c0_38, %c121] : memref<1x4x1200xbf16, #tpu.memory_space<vmem>>, vector<1x4x896xbf16>
    %41 = vector.shape_cast %40 : vector<1x4x896xbf16> to vector<4x896xbf16>
    %c0_39 = arith.constant 0 : index
    %c0_40 = arith.constant 0 : index
    %c122 = arith.constant 122 : index
    %42 = vector.load %arg1[%c0_39, %c0_40, %c122] : memref<1x4x1200xbf16, #tpu.memory_space<vmem>>, vector<1x4x896xbf16>
    %43 = vector.shape_cast %42 : vector<1x4x896xbf16> to vector<4x896xbf16>
    %c0_41 = arith.constant 0 : index
    %c0_42 = arith.constant 0 : index
    %c200 = arith.constant 200 : index
    %44 = vector.load %arg1[%c0_41, %c0_42, %c200] : memref<1x4x1200xbf16, #tpu.memory_space<vmem>>, vector<1x4x896xbf16>
    %45 = vector.shape_cast %44 : vector<1x4x896xbf16> to vector<4x896xbf16>
    %c0_43 = arith.constant 0 : index
    %c0_44 = arith.constant 0 : index
    %c201 = arith.constant 201 : index
    %46 = vector.load %arg1[%c0_43, %c0_44, %c201] : memref<1x4x1200xbf16, #tpu.memory_space<vmem>>, vector<1x4x896xbf16>
    %47 = vector.shape_cast %46 : vector<1x4x896xbf16> to vector<4x896xbf16>
    %48 = tpu.concatenate %41, %43, %45, %47 in 0 : vector<4x896xbf16>, vector<4x896xbf16>, vector<4x896xbf16>, vector<4x896xbf16> -> vector<16x896xbf16>
    %c64 = arith.constant 64 : index
    %c0_45 = arith.constant 0 : index
    %49 = vector.load %arg7[%c64, %c0_45] : memref<128x896xbf16, #tpu.memory_space<vmem>>, vector<16x896xbf16>
    tpu.vector_store %arg7[%c64, %c0_45], %48 {strides = array<i32>} : memref<128x896xbf16, #tpu.memory_space<vmem>>, vector<16x896xbf16>,
    %c0_46 = arith.constant 0 : index
    %c0_47 = arith.constant 0 : index
    %c202 = arith.constant 202 : index
    %50 = vector.load %arg1[%c0_46, %c0_47, %c202] : memref<1x4x1200xbf16, #tpu.memory_space<vmem>>, vector<1x4x896xbf16>
    %51 = vector.shape_cast %50 : vector<1x4x896xbf16> to vector<4x896xbf16>
    %c0_48 = arith.constant 0 : index
    %c0_49 = arith.constant 0 : index
    %c210 = arith.constant 210 : index
    %52 = vector.load %arg1[%c0_48, %c0_49, %c210] : memref<1x4x1200xbf16, #tpu.memory_space<vmem>>, vector<1x4x896xbf16>
    %53 = vector.shape_cast %52 : vector<1x4x896xbf16> to vector<4x896xbf16>
    %c0_50 = arith.constant 0 : index
    %c0_51 = arith.constant 0 : index
    %c211 = arith.constant 211 : index
    %54 = vector.load %arg1[%c0_50, %c0_51, %c211] : memref<1x4x1200xbf16, #tpu.memory_space<vmem>>, vector<1x4x896xbf16>
    %55 = vector.shape_cast %54 : vector<1x4x896xbf16> to vector<4x896xbf16>
    %c0_52 = arith.constant 0 : index
    %c0_53 = arith.constant 0 : index
    %c212 = arith.constant 212 : index
    %56 = vector.load %arg1[%c0_52, %c0_53, %c212] : memref<1x4x1200xbf16, #tpu.memory_space<vmem>>, vector<1x4x896xbf16>
    %57 = vector.shape_cast %56 : vector<1x4x896xbf16> to vector<4x896xbf16>
    %58 = tpu.concatenate %51, %53, %55, %57 in 0 : vector<4x896xbf16>, vector<4x896xbf16>, vector<4x896xbf16>, vector<4x896xbf16> -> vector<16x896xbf16>
    %c80 = arith.constant 80 : index
    %c0_54 = arith.constant 0 : index
    %59 = vector.load %arg7[%c80, %c0_54] : memref<128x896xbf16, #tpu.memory_space<vmem>>, vector<16x896xbf16>
    tpu.vector_store %arg7[%c80, %c0_54], %58 {strides = array<i32>} : memref<128x896xbf16, #tpu.memory_space<vmem>>, vector<16x896xbf16>,
    %c0_55 = arith.constant 0 : index
    %c0_56 = arith.constant 0 : index
    %c220 = arith.constant 220 : index
    %60 = vector.load %arg1[%c0_55, %c0_56, %c220] : memref<1x4x1200xbf16, #tpu.memory_space<vmem>>, vector<1x4x896xbf16>
    %61 = vector.shape_cast %60 : vector<1x4x896xbf16> to vector<4x896xbf16>
    %c0_57 = arith.constant 0 : index
    %c0_58 = arith.constant 0 : index
    %c221 = arith.constant 221 : index
    %62 = vector.load %arg1[%c0_57, %c0_58, %c221] : memref<1x4x1200xbf16, #tpu.memory_space<vmem>>, vector<1x4x896xbf16>
    %63 = vector.shape_cast %62 : vector<1x4x896xbf16> to vector<4x896xbf16>
    %c0_59 = arith.constant 0 : index
    %c0_60 = arith.constant 0 : index
    %c222 = arith.constant 222 : index
    %64 = vector.load %arg1[%c0_59, %c0_60, %c222] : memref<1x4x1200xbf16, #tpu.memory_space<vmem>>, vector<1x4x896xbf16>
    %65 = vector.shape_cast %64 : vector<1x4x896xbf16> to vector<4x896xbf16>
    %cst = arith.constant 0.000000e+00 : bf16
    %66 = vector.broadcast %cst : bf16 to vector<20x896xbf16>
    %67 = tpu.concatenate %61, %63, %65, %66 in 0 : vector<4x896xbf16>, vector<4x896xbf16>, vector<4x896xbf16>, vector<20x896xbf16> -> vector<32x896xbf16>
    %c96 = arith.constant 96 : index
    %c0_61 = arith.constant 0 : index
    %68 = vector.load %arg7[%c96, %c0_61] : memref<128x896xbf16, #tpu.memory_space<vmem>>, vector<32x896xbf16>
    tpu.vector_store %arg7[%c96, %c0_61], %67 {strides = array<i32>} : memref<128x896xbf16, #tpu.memory_space<vmem>>, vector<32x896xbf16>,
    %c0_62 = arith.constant 0 : index
    %c0_63 = arith.constant 0 : index
    %69 = vector.load %arg2[%c0_62, %c0_63] : memref<16x128xbf16, #tpu.memory_space<vmem>>, vector<16x128xbf16>
    %c0_64 = arith.constant 0 : index
    %c0_65 = arith.constant 0 : index
    %70 = vector.load %arg7[%c0_64, %c0_65] : memref<128x896xbf16, #tpu.memory_space<vmem>>, vector<128x896xbf16>
    %cst_66 = arith.constant dense<0.000000e+00> : vector<16x896xf32>
    %71 = tpu.matmul %69, %70, %cst_66 {dimension_numbers = #tpu.dot_dimension_numbers<[1], [0], [0], [1], [0, 0, 1, 1], [], []>} : vector<16x128xbf16>, vector<128x896xbf16>, vector<16x896xf32> -> vector<16x896xf32>
    %c0_67 = arith.constant 0 : index
    %c0_68 = arith.constant 0 : index
    %72 = vector.load %arg3[%c0_67, %c0_68] : memref<16x3xf32, #tpu.memory_space<vmem>>, vector<16x1xf32>
    %73 = vector.broadcast %72 : vector<16x1xf32> to vector<16x896xf32>
    %74 = arith.addf %71, %73 : vector<16x896xf32>
    %c0_69 = arith.constant 0 : index
    %c0_70 = arith.constant 0 : index
    %75 = vector.load %arg5[%c0_69, %c0_70] : memref<1x896xf32, #tpu.memory_space<vmem>>, vector<1x896xf32>
    %76 = vector.broadcast %75 : vector<1x896xf32> to vector<16x896xf32>
    %77 = arith.mulf %74, %76 : vector<16x896xf32>
    %cst_71 = arith.constant dense<0.000000e+00> : vector<16xf32>
    %78 = vector.multi_reduction <add>, %77, %cst_71 [1] : vector<16x896xf32> to vector<16xf32>
    %79 = vector.shape_cast %78 : vector<16xf32> to vector<16x1xf32>
    %80 = arith.mulf %77, %74 : vector<16x896xf32>
    %cst_72 = arith.constant dense<0.000000e+00> : vector<16xf32>
    %81 = vector.multi_reduction <add>, %80, %cst_72 [1] : vector<16x896xf32> to vector<16xf32>
    %82 = vector.shape_cast %81 : vector<16xf32> to vector<16x1xf32>
    %c0_73 = arith.constant 0 : index
    %c0_74 = arith.constant 0 : index
    %83 = vector.load %arg4[%c0_73, %c0_74] : memref<16x16xf32, #tpu.memory_space<vmem>>, vector<16x16xf32>
    %cst_75 = arith.constant dense<0.000000e+00> : vector<16x1xf32>
    %84 = tpu.matmul %83, %79, %cst_75 {dimension_numbers = #tpu.dot_dimension_numbers<[1], [0], [0], [1], [0, 0, 1, 1], [], []>} : vector<16x16xf32>, vector<16x1xf32>, vector<16x1xf32> -> vector<16x1xf32>
    %c0_76 = arith.constant 0 : index
    %c0_77 = arith.constant 0 : index
    %85 = vector.load %arg4[%c0_76, %c0_77] : memref<16x16xf32, #tpu.memory_space<vmem>>, vector<16x16xf32>
    %cst_78 = arith.constant dense<0.000000e+00> : vector<16x1xf32>
    %86 = tpu.matmul %85, %82, %cst_78 {dimension_numbers = #tpu.dot_dimension_numbers<[1], [0], [0], [1], [0, 0, 1, 1], [], []>} : vector<16x16xf32>, vector<16x1xf32>, vector<16x1xf32> -> vector<16x1xf32>
    %87 = arith.mulf %84, %84 : vector<16x1xf32>
    %88 = arith.subf %86, %87 : vector<16x1xf32>
    %cst_79 = arith.constant 0.000000e+00 : f32
    %89 = vector.broadcast %cst_79 : f32 to vector<16x1xf32>
    %90 = arith.maximumf %88, %89 : vector<16x1xf32>
    %cst_80 = arith.constant 9.99999974E-6 : f32
    %91 = vector.broadcast %cst_80 : f32 to vector<16x1xf32>
    %92 = arith.addf %90, %91 : vector<16x1xf32>
    %93 = math.rsqrt %92 : vector<16x1xf32>
    %c0_81 = arith.constant 0 : index
    %c1_82 = arith.constant 1 : index
    %94 = vector.load %arg3[%c0_81, %c1_82] : memref<16x3xf32, #tpu.memory_space<vmem>>, vector<16x1xf32>
    %95 = arith.mulf %93, %94 : vector<16x1xf32>
    %c0_83 = arith.constant 0 : index
    %c2_84 = arith.constant 2 : index
    %96 = vector.load %arg3[%c0_83, %c2_84] : memref<16x3xf32, #tpu.memory_space<vmem>>, vector<16x1xf32>
    %97 = arith.mulf %84, %95 : vector<16x1xf32>
    %98 = arith.subf %96, %97 : vector<16x1xf32>
    %99 = vector.broadcast %95 : vector<16x1xf32> to vector<16x896xf32>
    %100 = arith.mulf %74, %99 : vector<16x896xf32>
    %101 = vector.broadcast %98 : vector<16x1xf32> to vector<16x896xf32>
    %102 = arith.addf %100, %101 : vector<16x896xf32>
    %cst_85 = arith.constant 0.000000e+00 : f32
    %103 = vector.broadcast %cst_85 : f32 to vector<16x896xf32>
    %104 = arith.cmpf ogt, %102, %103 : vector<16x896xf32>
    %cst_86 = arith.constant 2.000000e-01 : f32
    %105 = vector.broadcast %cst_86 : f32 to vector<16x896xf32>
    %106 = arith.mulf %105, %102 : vector<16x896xf32>
    %107 = arith.select %104, %102, %106 : vector<16x896xi1>, vector<16x896xf32>
    %108 = arith.truncf %107 : vector<16x896xf32> to vector<16x896xbf16>
    %c0_87 = arith.constant 0 : index
    %c0_88 = arith.constant 0 : index
    %c0_89 = arith.constant 0 : index
    %109 = vector.load %arg6[%c0_87, %c0_88, %c0_89] : memref<1x16x896xbf16, #tpu.memory_space<vmem>>, vector<1x16x896xbf16>
    %110 = vector.shape_cast %109 : vector<1x16x896xbf16> to vector<16x896xbf16>
    %111 = vector.shape_cast %108 : vector<16x896xbf16> to vector<1x16x896xbf16>
    tpu.vector_store %arg6[%c0_87, %c0_88, %c0_89], %111 {strides = array<i32>} : memref<1x16x896xbf16, #tpu.memory_space<vmem>>, vector<1x16x896xbf16>,
    return
  }
  func.func @transform_0(%arg0: i32) -> (i32, i32, i32) {
    %c0_i32 = arith.constant 0 : i32
    %c0_i32_0 = arith.constant 0 : i32
    %c0_i32_1 = arith.constant 0 : i32
    return %arg0, %c0_i32, %c0_i32_0 : i32, i32, i32
  }
  func.func @transform_1(%arg0: i32) -> (i32, i32) {
    %c0_i32 = arith.constant 0 : i32
    %c0_i32_0 = arith.constant 0 : i32
    %c0_i32_1 = arith.constant 0 : i32
    return %c0_i32, %c0_i32_0 : i32, i32
  }
  func.func @transform_2(%arg0: i32) -> (i32, i32) {
    %c0_i32 = arith.constant 0 : i32
    %c0_i32_0 = arith.constant 0 : i32
    %c0_i32_1 = arith.constant 0 : i32
    return %c0_i32, %c0_i32_0 : i32, i32
  }
  func.func @transform_3(%arg0: i32) -> (i32, i32) {
    %c0_i32 = arith.constant 0 : i32
    %c0_i32_0 = arith.constant 0 : i32
    %c0_i32_1 = arith.constant 0 : i32
    return %c0_i32, %c0_i32_0 : i32, i32
  }
  func.func @transform_4(%arg0: i32) -> (i32, i32) {
    %c0_i32 = arith.constant 0 : i32
    %c0_i32_0 = arith.constant 0 : i32
    %c0_i32_1 = arith.constant 0 : i32
    return %c0_i32, %c0_i32_0 : i32, i32
  }
  func.func @transform_5(%arg0: i32) -> (i32, i32, i32) {
    %c0_i32 = arith.constant 0 : i32
    %c0_i32_0 = arith.constant 0 : i32
    %c0_i32_1 = arith.constant 0 : i32
    return %arg0, %c0_i32, %c0_i32_0 : i32, i32, i32
  }
}

module attributes {stable_mosaic.version = 11 : i64} {
  func.func @_conv3d_gn_lrelu_kernel(%arg0: i32, %arg1: memref<1x4x1200xbf16, #tpu.memory_space<vmem>>, %arg2: memref<16x128xbf16, #tpu.memory_space<vmem>>, %arg3: memref<16x3xf32, #tpu.memory_space<vmem>>, %arg4: memref<16x16xf32, #tpu.memory_space<vmem>>, %arg5: memref<1x896xf32, #tpu.memory_space<vmem>>, %arg6: memref<1x16x896xbf16, #tpu.memory_space<vmem>>, %arg7: memref<128x896xbf16, #tpu.memory_space<vmem>>) attributes {dimension_semantics = [#tpu.dimension_semantics<parallel>], iteration_bounds = array<i64: 2>, scalar_prefetch = 0 : i64, scratch_operands = 1 : i64, tpu.core_type = #tpu.core_type<tc>, window_params = [{transform_indices = @transform_0, window_bounds = array<i64: 1, 4, 1200>}, {pipeline_mode = #tpu.pipeline_mode<synchronous>, transform_indices = @transform_1, window_bounds = array<i64: 16, 128>}, {pipeline_mode = #tpu.pipeline_mode<synchronous>, transform_indices = @transform_2, window_bounds = array<i64: 16, 3>}, {pipeline_mode = #tpu.pipeline_mode<synchronous>, transform_indices = @transform_3, window_bounds = array<i64: 16, 16>}, {pipeline_mode = #tpu.pipeline_mode<synchronous>, transform_indices = @transform_4, window_bounds = array<i64: 1, 896>}, {transform_indices = @transform_5, window_bounds = array<i64: 1, 16, 896>}]} {
    %cst = arith.constant 0.000000e+00 : bf16
    %0 = vector.broadcast %cst : bf16 to vector<20x896xbf16>
    %c108 = arith.constant 108 : index
    %c0 = arith.constant 0 : index
    %1 = vector.load %arg7[%c108, %c0] : memref<128x896xbf16, #tpu.memory_space<vmem>>, vector<20x896xbf16>
    tpu.vector_store %arg7[%c108, %c0], %0 {strides = array<i32>} : memref<128x896xbf16, #tpu.memory_space<vmem>>, vector<20x896xbf16>,
    %c0_0 = arith.constant 0 : index
    %c0_1 = arith.constant 0 : index
    %c0_2 = arith.constant 0 : index
    %2 = vector.load %arg1[%c0_0, %c0_1, %c0_2] : memref<1x4x1200xbf16, #tpu.memory_space<vmem>>, vector<1x4x896xbf16>
    %3 = vector.shape_cast %2 : vector<1x4x896xbf16> to vector<4x896xbf16>
    %c0_3 = arith.constant 0 : index
    %c0_4 = arith.constant 0 : index
    %4 = vector.load %arg7[%c0_3, %c0_4] : memref<128x896xbf16, #tpu.memory_space<vmem>>, vector<4x896xbf16>
    tpu.vector_store %arg7[%c0_3, %c0_4], %3 {strides = array<i32>} : memref<128x896xbf16, #tpu.memory_space<vmem>>, vector<4x896xbf16>,
    %c0_5 = arith.constant 0 : index
    %c0_6 = arith.constant 0 : index
    %c1 = arith.constant 1 : index
    %5 = vector.load %arg1[%c0_5, %c0_6, %c1] : memref<1x4x1200xbf16, #tpu.memory_space<vmem>>, vector<1x4x896xbf16>
    %6 = vector.shape_cast %5 : vector<1x4x896xbf16> to vector<4x896xbf16>
    %c4 = arith.constant 4 : index
    %c0_7 = arith.constant 0 : index
    %7 = vector.load %arg7[%c4, %c0_7] : memref<128x896xbf16, #tpu.memory_space<vmem>>, vector<4x896xbf16>
    tpu.vector_store %arg7[%c4, %c0_7], %6 {strides = array<i32>} : memref<128x896xbf16, #tpu.memory_space<vmem>>, vector<4x896xbf16>,
    %c0_8 = arith.constant 0 : index
    %c0_9 = arith.constant 0 : index
    %c2 = arith.constant 2 : index
    %8 = vector.load %arg1[%c0_8, %c0_9, %c2] : memref<1x4x1200xbf16, #tpu.memory_space<vmem>>, vector<1x4x896xbf16>
    %9 = vector.shape_cast %8 : vector<1x4x896xbf16> to vector<4x896xbf16>
    %c8 = arith.constant 8 : index
    %c0_10 = arith.constant 0 : index
    %10 = vector.load %arg7[%c8, %c0_10] : memref<128x896xbf16, #tpu.memory_space<vmem>>, vector<4x896xbf16>
    tpu.vector_store %arg7[%c8, %c0_10], %9 {strides = array<i32>} : memref<128x896xbf16, #tpu.memory_space<vmem>>, vector<4x896xbf16>,
    %c0_11 = arith.constant 0 : index
    %c0_12 = arith.constant 0 : index
    %c10 = arith.constant 10 : index
    %11 = vector.load %arg1[%c0_11, %c0_12, %c10] : memref<1x4x1200xbf16, #tpu.memory_space<vmem>>, vector<1x4x896xbf16>
    %12 = vector.shape_cast %11 : vector<1x4x896xbf16> to vector<4x896xbf16>
    %c12 = arith.constant 12 : index
    %c0_13 = arith.constant 0 : index
    %13 = vector.load %arg7[%c12, %c0_13] : memref<128x896xbf16, #tpu.memory_space<vmem>>, vector<4x896xbf16>
    tpu.vector_store %arg7[%c12, %c0_13], %12 {strides = array<i32>} : memref<128x896xbf16, #tpu.memory_space<vmem>>, vector<4x896xbf16>,
    %c0_14 = arith.constant 0 : index
    %c0_15 = arith.constant 0 : index
    %c11 = arith.constant 11 : index
    %14 = vector.load %arg1[%c0_14, %c0_15, %c11] : memref<1x4x1200xbf16, #tpu.memory_space<vmem>>, vector<1x4x896xbf16>
    %15 = vector.shape_cast %14 : vector<1x4x896xbf16> to vector<4x896xbf16>
    %c16 = arith.constant 16 : index
    %c0_16 = arith.constant 0 : index
    %16 = vector.load %arg7[%c16, %c0_16] : memref<128x896xbf16, #tpu.memory_space<vmem>>, vector<4x896xbf16>
    tpu.vector_store %arg7[%c16, %c0_16], %15 {strides = array<i32>} : memref<128x896xbf16, #tpu.memory_space<vmem>>, vector<4x896xbf16>,
    %c0_17 = arith.constant 0 : index
    %c0_18 = arith.constant 0 : index
    %c12_19 = arith.constant 12 : index
    %17 = vector.load %arg1[%c0_17, %c0_18, %c12_19] : memref<1x4x1200xbf16, #tpu.memory_space<vmem>>, vector<1x4x896xbf16>
    %18 = vector.shape_cast %17 : vector<1x4x896xbf16> to vector<4x896xbf16>
    %c20 = arith.constant 20 : index
    %c0_20 = arith.constant 0 : index
    %19 = vector.load %arg7[%c20, %c0_20] : memref<128x896xbf16, #tpu.memory_space<vmem>>, vector<4x896xbf16>
    tpu.vector_store %arg7[%c20, %c0_20], %18 {strides = array<i32>} : memref<128x896xbf16, #tpu.memory_space<vmem>>, vector<4x896xbf16>,
    %c0_21 = arith.constant 0 : index
    %c0_22 = arith.constant 0 : index
    %c20_23 = arith.constant 20 : index
    %20 = vector.load %arg1[%c0_21, %c0_22, %c20_23] : memref<1x4x1200xbf16, #tpu.memory_space<vmem>>, vector<1x4x896xbf16>
    %21 = vector.shape_cast %20 : vector<1x4x896xbf16> to vector<4x896xbf16>
    %c24 = arith.constant 24 : index
    %c0_24 = arith.constant 0 : index
    %22 = vector.load %arg7[%c24, %c0_24] : memref<128x896xbf16, #tpu.memory_space<vmem>>, vector<4x896xbf16>
    tpu.vector_store %arg7[%c24, %c0_24], %21 {strides = array<i32>} : memref<128x896xbf16, #tpu.memory_space<vmem>>, vector<4x896xbf16>,
    %c0_25 = arith.constant 0 : index
    %c0_26 = arith.constant 0 : index
    %c21 = arith.constant 21 : index
    %23 = vector.load %arg1[%c0_25, %c0_26, %c21] : memref<1x4x1200xbf16, #tpu.memory_space<vmem>>, vector<1x4x896xbf16>
    %24 = vector.shape_cast %23 : vector<1x4x896xbf16> to vector<4x896xbf16>
    %c28 = arith.constant 28 : index
    %c0_27 = arith.constant 0 : index
    %25 = vector.load %arg7[%c28, %c0_27] : memref<128x896xbf16, #tpu.memory_space<vmem>>, vector<4x896xbf16>
    tpu.vector_store %arg7[%c28, %c0_27], %24 {strides = array<i32>} : memref<128x896xbf16, #tpu.memory_space<vmem>>, vector<4x896xbf16>,
    %c0_28 = arith.constant 0 : index
    %c0_29 = arith.constant 0 : index
    %c22 = arith.constant 22 : index
    %26 = vector.load %arg1[%c0_28, %c0_29, %c22] : memref<1x4x1200xbf16, #tpu.memory_space<vmem>>, vector<1x4x896xbf16>
    %27 = vector.shape_cast %26 : vector<1x4x896xbf16> to vector<4x896xbf16>
    %c32 = arith.constant 32 : index
    %c0_30 = arith.constant 0 : index
    %28 = vector.load %arg7[%c32, %c0_30] : memref<128x896xbf16, #tpu.memory_space<vmem>>, vector<4x896xbf16>
    tpu.vector_store %arg7[%c32, %c0_30], %27 {strides = array<i32>} : memref<128x896xbf16, #tpu.memory_space<vmem>>, vector<4x896xbf16>,
    %c0_31 = arith.constant 0 : index
    %c0_32 = arith.constant 0 : index
    %c100 = arith.constant 100 : index
    %29 = vector.load %arg1[%c0_31, %c0_32, %c100] : memref<1x4x1200xbf16, #tpu.memory_space<vmem>>, vector<1x4x896xbf16>
    %30 = vector.shape_cast %29 : vector<1x4x896xbf16> to vector<4x896xbf16>
    %c36 = arith.constant 36 : index
    %c0_33 = arith.constant 0 : index
    %31 = vector.load %arg7[%c36, %c0_33] : memref<128x896xbf16, #tpu.memory_space<vmem>>, vector<4x896xbf16>
    tpu.vector_store %arg7[%c36, %c0_33], %30 {strides = array<i32>} : memref<128x896xbf16, #tpu.memory_space<vmem>>, vector<4x896xbf16>,
    %c0_34 = arith.constant 0 : index
    %c0_35 = arith.constant 0 : index
    %c101 = arith.constant 101 : index
    %32 = vector.load %arg1[%c0_34, %c0_35, %c101] : memref<1x4x1200xbf16, #tpu.memory_space<vmem>>, vector<1x4x896xbf16>
    %33 = vector.shape_cast %32 : vector<1x4x896xbf16> to vector<4x896xbf16>
    %c40 = arith.constant 40 : index
    %c0_36 = arith.constant 0 : index
    %34 = vector.load %arg7[%c40, %c0_36] : memref<128x896xbf16, #tpu.memory_space<vmem>>, vector<4x896xbf16>
    tpu.vector_store %arg7[%c40, %c0_36], %33 {strides = array<i32>} : memref<128x896xbf16, #tpu.memory_space<vmem>>, vector<4x896xbf16>,
    %c0_37 = arith.constant 0 : index
    %c0_38 = arith.constant 0 : index
    %c102 = arith.constant 102 : index
    %35 = vector.load %arg1[%c0_37, %c0_38, %c102] : memref<1x4x1200xbf16, #tpu.memory_space<vmem>>, vector<1x4x896xbf16>
    %36 = vector.shape_cast %35 : vector<1x4x896xbf16> to vector<4x896xbf16>
    %c44 = arith.constant 44 : index
    %c0_39 = arith.constant 0 : index
    %37 = vector.load %arg7[%c44, %c0_39] : memref<128x896xbf16, #tpu.memory_space<vmem>>, vector<4x896xbf16>
    tpu.vector_store %arg7[%c44, %c0_39], %36 {strides = array<i32>} : memref<128x896xbf16, #tpu.memory_space<vmem>>, vector<4x896xbf16>,
    %c0_40 = arith.constant 0 : index
    %c0_41 = arith.constant 0 : index
    %c110 = arith.constant 110 : index
    %38 = vector.load %arg1[%c0_40, %c0_41, %c110] : memref<1x4x1200xbf16, #tpu.memory_space<vmem>>, vector<1x4x896xbf16>
    %39 = vector.shape_cast %38 : vector<1x4x896xbf16> to vector<4x896xbf16>
    %c48 = arith.constant 48 : index
    %c0_42 = arith.constant 0 : index
    %40 = vector.load %arg7[%c48, %c0_42] : memref<128x896xbf16, #tpu.memory_space<vmem>>, vector<4x896xbf16>
    tpu.vector_store %arg7[%c48, %c0_42], %39 {strides = array<i32>} : memref<128x896xbf16, #tpu.memory_space<vmem>>, vector<4x896xbf16>,
    %c0_43 = arith.constant 0 : index
    %c0_44 = arith.constant 0 : index
    %c111 = arith.constant 111 : index
    %41 = vector.load %arg1[%c0_43, %c0_44, %c111] : memref<1x4x1200xbf16, #tpu.memory_space<vmem>>, vector<1x4x896xbf16>
    %42 = vector.shape_cast %41 : vector<1x4x896xbf16> to vector<4x896xbf16>
    %c52 = arith.constant 52 : index
    %c0_45 = arith.constant 0 : index
    %43 = vector.load %arg7[%c52, %c0_45] : memref<128x896xbf16, #tpu.memory_space<vmem>>, vector<4x896xbf16>
    tpu.vector_store %arg7[%c52, %c0_45], %42 {strides = array<i32>} : memref<128x896xbf16, #tpu.memory_space<vmem>>, vector<4x896xbf16>,
    %c0_46 = arith.constant 0 : index
    %c0_47 = arith.constant 0 : index
    %c112 = arith.constant 112 : index
    %44 = vector.load %arg1[%c0_46, %c0_47, %c112] : memref<1x4x1200xbf16, #tpu.memory_space<vmem>>, vector<1x4x896xbf16>
    %45 = vector.shape_cast %44 : vector<1x4x896xbf16> to vector<4x896xbf16>
    %c56 = arith.constant 56 : index
    %c0_48 = arith.constant 0 : index
    %46 = vector.load %arg7[%c56, %c0_48] : memref<128x896xbf16, #tpu.memory_space<vmem>>, vector<4x896xbf16>
    tpu.vector_store %arg7[%c56, %c0_48], %45 {strides = array<i32>} : memref<128x896xbf16, #tpu.memory_space<vmem>>, vector<4x896xbf16>,
    %c0_49 = arith.constant 0 : index
    %c0_50 = arith.constant 0 : index
    %c120 = arith.constant 120 : index
    %47 = vector.load %arg1[%c0_49, %c0_50, %c120] : memref<1x4x1200xbf16, #tpu.memory_space<vmem>>, vector<1x4x896xbf16>
    %48 = vector.shape_cast %47 : vector<1x4x896xbf16> to vector<4x896xbf16>
    %c60 = arith.constant 60 : index
    %c0_51 = arith.constant 0 : index
    %49 = vector.load %arg7[%c60, %c0_51] : memref<128x896xbf16, #tpu.memory_space<vmem>>, vector<4x896xbf16>
    tpu.vector_store %arg7[%c60, %c0_51], %48 {strides = array<i32>} : memref<128x896xbf16, #tpu.memory_space<vmem>>, vector<4x896xbf16>,
    %c0_52 = arith.constant 0 : index
    %c0_53 = arith.constant 0 : index
    %c121 = arith.constant 121 : index
    %50 = vector.load %arg1[%c0_52, %c0_53, %c121] : memref<1x4x1200xbf16, #tpu.memory_space<vmem>>, vector<1x4x896xbf16>
    %51 = vector.shape_cast %50 : vector<1x4x896xbf16> to vector<4x896xbf16>
    %c64 = arith.constant 64 : index
    %c0_54 = arith.constant 0 : index
    %52 = vector.load %arg7[%c64, %c0_54] : memref<128x896xbf16, #tpu.memory_space<vmem>>, vector<4x896xbf16>
    tpu.vector_store %arg7[%c64, %c0_54], %51 {strides = array<i32>} : memref<128x896xbf16, #tpu.memory_space<vmem>>, vector<4x896xbf16>,
    %c0_55 = arith.constant 0 : index
    %c0_56 = arith.constant 0 : index
    %c122 = arith.constant 122 : index
    %53 = vector.load %arg1[%c0_55, %c0_56, %c122] : memref<1x4x1200xbf16, #tpu.memory_space<vmem>>, vector<1x4x896xbf16>
    %54 = vector.shape_cast %53 : vector<1x4x896xbf16> to vector<4x896xbf16>
    %c68 = arith.constant 68 : index
    %c0_57 = arith.constant 0 : index
    %55 = vector.load %arg7[%c68, %c0_57] : memref<128x896xbf16, #tpu.memory_space<vmem>>, vector<4x896xbf16>
    tpu.vector_store %arg7[%c68, %c0_57], %54 {strides = array<i32>} : memref<128x896xbf16, #tpu.memory_space<vmem>>, vector<4x896xbf16>,
    %c0_58 = arith.constant 0 : index
    %c0_59 = arith.constant 0 : index
    %c200 = arith.constant 200 : index
    %56 = vector.load %arg1[%c0_58, %c0_59, %c200] : memref<1x4x1200xbf16, #tpu.memory_space<vmem>>, vector<1x4x896xbf16>
    %57 = vector.shape_cast %56 : vector<1x4x896xbf16> to vector<4x896xbf16>
    %c72 = arith.constant 72 : index
    %c0_60 = arith.constant 0 : index
    %58 = vector.load %arg7[%c72, %c0_60] : memref<128x896xbf16, #tpu.memory_space<vmem>>, vector<4x896xbf16>
    tpu.vector_store %arg7[%c72, %c0_60], %57 {strides = array<i32>} : memref<128x896xbf16, #tpu.memory_space<vmem>>, vector<4x896xbf16>,
    %c0_61 = arith.constant 0 : index
    %c0_62 = arith.constant 0 : index
    %c201 = arith.constant 201 : index
    %59 = vector.load %arg1[%c0_61, %c0_62, %c201] : memref<1x4x1200xbf16, #tpu.memory_space<vmem>>, vector<1x4x896xbf16>
    %60 = vector.shape_cast %59 : vector<1x4x896xbf16> to vector<4x896xbf16>
    %c76 = arith.constant 76 : index
    %c0_63 = arith.constant 0 : index
    %61 = vector.load %arg7[%c76, %c0_63] : memref<128x896xbf16, #tpu.memory_space<vmem>>, vector<4x896xbf16>
    tpu.vector_store %arg7[%c76, %c0_63], %60 {strides = array<i32>} : memref<128x896xbf16, #tpu.memory_space<vmem>>, vector<4x896xbf16>,
    %c0_64 = arith.constant 0 : index
    %c0_65 = arith.constant 0 : index
    %c202 = arith.constant 202 : index
    %62 = vector.load %arg1[%c0_64, %c0_65, %c202] : memref<1x4x1200xbf16, #tpu.memory_space<vmem>>, vector<1x4x896xbf16>
    %63 = vector.shape_cast %62 : vector<1x4x896xbf16> to vector<4x896xbf16>
    %c80 = arith.constant 80 : index
    %c0_66 = arith.constant 0 : index
    %64 = vector.load %arg7[%c80, %c0_66] : memref<128x896xbf16, #tpu.memory_space<vmem>>, vector<4x896xbf16>
    tpu.vector_store %arg7[%c80, %c0_66], %63 {strides = array<i32>} : memref<128x896xbf16, #tpu.memory_space<vmem>>, vector<4x896xbf16>,
    %c0_67 = arith.constant 0 : index
    %c0_68 = arith.constant 0 : index
    %c210 = arith.constant 210 : index
    %65 = vector.load %arg1[%c0_67, %c0_68, %c210] : memref<1x4x1200xbf16, #tpu.memory_space<vmem>>, vector<1x4x896xbf16>
    %66 = vector.shape_cast %65 : vector<1x4x896xbf16> to vector<4x896xbf16>
    %c84 = arith.constant 84 : index
    %c0_69 = arith.constant 0 : index
    %67 = vector.load %arg7[%c84, %c0_69] : memref<128x896xbf16, #tpu.memory_space<vmem>>, vector<4x896xbf16>
    tpu.vector_store %arg7[%c84, %c0_69], %66 {strides = array<i32>} : memref<128x896xbf16, #tpu.memory_space<vmem>>, vector<4x896xbf16>,
    %c0_70 = arith.constant 0 : index
    %c0_71 = arith.constant 0 : index
    %c211 = arith.constant 211 : index
    %68 = vector.load %arg1[%c0_70, %c0_71, %c211] : memref<1x4x1200xbf16, #tpu.memory_space<vmem>>, vector<1x4x896xbf16>
    %69 = vector.shape_cast %68 : vector<1x4x896xbf16> to vector<4x896xbf16>
    %c88 = arith.constant 88 : index
    %c0_72 = arith.constant 0 : index
    %70 = vector.load %arg7[%c88, %c0_72] : memref<128x896xbf16, #tpu.memory_space<vmem>>, vector<4x896xbf16>
    tpu.vector_store %arg7[%c88, %c0_72], %69 {strides = array<i32>} : memref<128x896xbf16, #tpu.memory_space<vmem>>, vector<4x896xbf16>,
    %c0_73 = arith.constant 0 : index
    %c0_74 = arith.constant 0 : index
    %c212 = arith.constant 212 : index
    %71 = vector.load %arg1[%c0_73, %c0_74, %c212] : memref<1x4x1200xbf16, #tpu.memory_space<vmem>>, vector<1x4x896xbf16>
    %72 = vector.shape_cast %71 : vector<1x4x896xbf16> to vector<4x896xbf16>
    %c92 = arith.constant 92 : index
    %c0_75 = arith.constant 0 : index
    %73 = vector.load %arg7[%c92, %c0_75] : memref<128x896xbf16, #tpu.memory_space<vmem>>, vector<4x896xbf16>
    tpu.vector_store %arg7[%c92, %c0_75], %72 {strides = array<i32>} : memref<128x896xbf16, #tpu.memory_space<vmem>>, vector<4x896xbf16>,
    %c0_76 = arith.constant 0 : index
    %c0_77 = arith.constant 0 : index
    %c220 = arith.constant 220 : index
    %74 = vector.load %arg1[%c0_76, %c0_77, %c220] : memref<1x4x1200xbf16, #tpu.memory_space<vmem>>, vector<1x4x896xbf16>
    %75 = vector.shape_cast %74 : vector<1x4x896xbf16> to vector<4x896xbf16>
    %c96 = arith.constant 96 : index
    %c0_78 = arith.constant 0 : index
    %76 = vector.load %arg7[%c96, %c0_78] : memref<128x896xbf16, #tpu.memory_space<vmem>>, vector<4x896xbf16>
    tpu.vector_store %arg7[%c96, %c0_78], %75 {strides = array<i32>} : memref<128x896xbf16, #tpu.memory_space<vmem>>, vector<4x896xbf16>,
    %c0_79 = arith.constant 0 : index
    %c0_80 = arith.constant 0 : index
    %c221 = arith.constant 221 : index
    %77 = vector.load %arg1[%c0_79, %c0_80, %c221] : memref<1x4x1200xbf16, #tpu.memory_space<vmem>>, vector<1x4x896xbf16>
    %78 = vector.shape_cast %77 : vector<1x4x896xbf16> to vector<4x896xbf16>
    %c100_81 = arith.constant 100 : index
    %c0_82 = arith.constant 0 : index
    %79 = vector.load %arg7[%c100_81, %c0_82] : memref<128x896xbf16, #tpu.memory_space<vmem>>, vector<4x896xbf16>
    tpu.vector_store %arg7[%c100_81, %c0_82], %78 {strides = array<i32>} : memref<128x896xbf16, #tpu.memory_space<vmem>>, vector<4x896xbf16>,
    %c0_83 = arith.constant 0 : index
    %c0_84 = arith.constant 0 : index
    %c222 = arith.constant 222 : index
    %80 = vector.load %arg1[%c0_83, %c0_84, %c222] : memref<1x4x1200xbf16, #tpu.memory_space<vmem>>, vector<1x4x896xbf16>
    %81 = vector.shape_cast %80 : vector<1x4x896xbf16> to vector<4x896xbf16>
    %c104 = arith.constant 104 : index
    %c0_85 = arith.constant 0 : index
    %82 = vector.load %arg7[%c104, %c0_85] : memref<128x896xbf16, #tpu.memory_space<vmem>>, vector<4x896xbf16>
    tpu.vector_store %arg7[%c104, %c0_85], %81 {strides = array<i32>} : memref<128x896xbf16, #tpu.memory_space<vmem>>, vector<4x896xbf16>,
    %c0_86 = arith.constant 0 : index
    %c0_87 = arith.constant 0 : index
    %83 = vector.load %arg2[%c0_86, %c0_87] : memref<16x128xbf16, #tpu.memory_space<vmem>>, vector<16x128xbf16>
    %c0_88 = arith.constant 0 : index
    %c0_89 = arith.constant 0 : index
    %84 = vector.load %arg7[%c0_88, %c0_89] : memref<128x896xbf16, #tpu.memory_space<vmem>>, vector<128x896xbf16>
    %cst_90 = arith.constant dense<0.000000e+00> : vector<16x896xf32>
    %85 = tpu.matmul %83, %84, %cst_90 {dimension_numbers = #tpu.dot_dimension_numbers<[1], [0], [0], [1], [0, 0, 1, 1], [], []>} : vector<16x128xbf16>, vector<128x896xbf16>, vector<16x896xf32> -> vector<16x896xf32>
    %c0_91 = arith.constant 0 : index
    %c0_92 = arith.constant 0 : index
    %86 = vector.load %arg3[%c0_91, %c0_92] : memref<16x3xf32, #tpu.memory_space<vmem>>, vector<16x1xf32>
    %87 = vector.broadcast %86 : vector<16x1xf32> to vector<16x896xf32>
    %88 = arith.addf %85, %87 : vector<16x896xf32>
    %c0_93 = arith.constant 0 : index
    %c0_94 = arith.constant 0 : index
    %89 = vector.load %arg5[%c0_93, %c0_94] : memref<1x896xf32, #tpu.memory_space<vmem>>, vector<1x896xf32>
    %90 = vector.broadcast %89 : vector<1x896xf32> to vector<16x896xf32>
    %91 = arith.mulf %88, %90 : vector<16x896xf32>
    %cst_95 = arith.constant dense<0.000000e+00> : vector<16xf32>
    %92 = vector.multi_reduction <add>, %91, %cst_95 [1] : vector<16x896xf32> to vector<16xf32>
    %93 = vector.shape_cast %92 : vector<16xf32> to vector<16x1xf32>
    %94 = arith.mulf %91, %88 : vector<16x896xf32>
    %cst_96 = arith.constant dense<0.000000e+00> : vector<16xf32>
    %95 = vector.multi_reduction <add>, %94, %cst_96 [1] : vector<16x896xf32> to vector<16xf32>
    %96 = vector.shape_cast %95 : vector<16xf32> to vector<16x1xf32>
    %c0_97 = arith.constant 0 : index
    %c0_98 = arith.constant 0 : index
    %97 = vector.load %arg4[%c0_97, %c0_98] : memref<16x16xf32, #tpu.memory_space<vmem>>, vector<16x16xf32>
    %cst_99 = arith.constant dense<0.000000e+00> : vector<16x1xf32>
    %98 = tpu.matmul %97, %93, %cst_99 {dimension_numbers = #tpu.dot_dimension_numbers<[1], [0], [0], [1], [0, 0, 1, 1], [], []>} : vector<16x16xf32>, vector<16x1xf32>, vector<16x1xf32> -> vector<16x1xf32>
    %c0_100 = arith.constant 0 : index
    %c0_101 = arith.constant 0 : index
    %99 = vector.load %arg4[%c0_100, %c0_101] : memref<16x16xf32, #tpu.memory_space<vmem>>, vector<16x16xf32>
    %cst_102 = arith.constant dense<0.000000e+00> : vector<16x1xf32>
    %100 = tpu.matmul %99, %96, %cst_102 {dimension_numbers = #tpu.dot_dimension_numbers<[1], [0], [0], [1], [0, 0, 1, 1], [], []>} : vector<16x16xf32>, vector<16x1xf32>, vector<16x1xf32> -> vector<16x1xf32>
    %101 = arith.mulf %98, %98 : vector<16x1xf32>
    %102 = arith.subf %100, %101 : vector<16x1xf32>
    %cst_103 = arith.constant 0.000000e+00 : f32
    %103 = vector.broadcast %cst_103 : f32 to vector<16x1xf32>
    %104 = arith.maximumf %102, %103 : vector<16x1xf32>
    %cst_104 = arith.constant 9.99999974E-6 : f32
    %105 = vector.broadcast %cst_104 : f32 to vector<16x1xf32>
    %106 = arith.addf %104, %105 : vector<16x1xf32>
    %107 = math.rsqrt %106 : vector<16x1xf32>
    %c0_105 = arith.constant 0 : index
    %c1_106 = arith.constant 1 : index
    %108 = vector.load %arg3[%c0_105, %c1_106] : memref<16x3xf32, #tpu.memory_space<vmem>>, vector<16x1xf32>
    %109 = arith.mulf %107, %108 : vector<16x1xf32>
    %c0_107 = arith.constant 0 : index
    %c2_108 = arith.constant 2 : index
    %110 = vector.load %arg3[%c0_107, %c2_108] : memref<16x3xf32, #tpu.memory_space<vmem>>, vector<16x1xf32>
    %111 = arith.mulf %98, %109 : vector<16x1xf32>
    %112 = arith.subf %110, %111 : vector<16x1xf32>
    %113 = vector.broadcast %109 : vector<16x1xf32> to vector<16x896xf32>
    %114 = arith.mulf %88, %113 : vector<16x896xf32>
    %115 = vector.broadcast %112 : vector<16x1xf32> to vector<16x896xf32>
    %116 = arith.addf %114, %115 : vector<16x896xf32>
    %cst_109 = arith.constant 0.000000e+00 : f32
    %117 = vector.broadcast %cst_109 : f32 to vector<16x896xf32>
    %118 = arith.cmpf ogt, %116, %117 : vector<16x896xf32>
    %cst_110 = arith.constant 2.000000e-01 : f32
    %119 = vector.broadcast %cst_110 : f32 to vector<16x896xf32>
    %120 = arith.mulf %119, %116 : vector<16x896xf32>
    %121 = arith.select %118, %116, %120 : vector<16x896xi1>, vector<16x896xf32>
    %122 = arith.truncf %121 : vector<16x896xf32> to vector<16x896xbf16>
    %c0_111 = arith.constant 0 : index
    %c0_112 = arith.constant 0 : index
    %c0_113 = arith.constant 0 : index
    %123 = vector.load %arg6[%c0_111, %c0_112, %c0_113] : memref<1x16x896xbf16, #tpu.memory_space<vmem>>, vector<1x16x896xbf16>
    %124 = vector.shape_cast %123 : vector<1x16x896xbf16> to vector<16x896xbf16>
    %125 = vector.shape_cast %122 : vector<16x896xbf16> to vector<1x16x896xbf16>
    tpu.vector_store %arg6[%c0_111, %c0_112, %c0_113], %125 {strides = array<i32>} : memref<1x16x896xbf16, #tpu.memory_space<vmem>>, vector<1x16x896xbf16>,
    return
  }
  func.func @transform_0(%arg0: i32) -> (i32, i32, i32) {
    %c0_i32 = arith.constant 0 : i32
    %c0_i32_0 = arith.constant 0 : i32
    %c0_i32_1 = arith.constant 0 : i32
    return %arg0, %c0_i32, %c0_i32_0 : i32, i32, i32
  }
  func.func @transform_1(%arg0: i32) -> (i32, i32) {
    %c0_i32 = arith.constant 0 : i32
    %c0_i32_0 = arith.constant 0 : i32
    %c0_i32_1 = arith.constant 0 : i32
    return %c0_i32, %c0_i32_0 : i32, i32
  }
  func.func @transform_2(%arg0: i32) -> (i32, i32) {
    %c0_i32 = arith.constant 0 : i32
    %c0_i32_0 = arith.constant 0 : i32
    %c0_i32_1 = arith.constant 0 : i32
    return %c0_i32, %c0_i32_0 : i32, i32
  }
  func.func @transform_3(%arg0: i32) -> (i32, i32) {
    %c0_i32 = arith.constant 0 : i32
    %c0_i32_0 = arith.constant 0 : i32
    %c0_i32_1 = arith.constant 0 : i32
    return %c0_i32, %c0_i32_0 : i32, i32
  }
  func.func @transform_4(%arg0: i32) -> (i32, i32) {
    %c0_i32 = arith.constant 0 : i32
    %c0_i32_0 = arith.constant 0 : i32
    %c0_i32_1 = arith.constant 0 : i32
    return %c0_i32, %c0_i32_0 : i32, i32
  }
  func.func @transform_5(%arg0: i32) -> (i32, i32, i32) {
    %c0_i32 = arith.constant 0 : i32
    %c0_i32_0 = arith.constant 0 : i32
    %c0_i32_1 = arith.constant 0 : i32
    return %arg0, %c0_i32, %c0_i32_0 : i32, i32, i32
  }
}

</mosaic_0001>

<llo_original>
// kernel: tpu_custom_call.1
$region0: #{tpu_custom_call.1}
  #allocation0 [shape = 'u32[]', space=smem, size = 0x4, offset = 0x4, fixed_abs, tag = 'smem constant byte address 0x4 - core index']
  #allocation1 [shape = 'u32[72,128]{1,0:T(1,128)}', space=vmem, size = 0x9000, scoped, tag = 'internal scratch']
  #allocation2 [shape = 'bf16[128,896]{1,0:T(8,128)(2,1)}', space=vmem, size = 0x38000, scoped, tag = 'scratch operand']
  %s0 = inlined_call_operand.hbm [shape: bf16[2,4,1200], index: 0, kind: input, shape index: {}]
  %s1 = inlined_call_operand.hbm [shape: bf16[16,128], index: 1, kind: input, shape index: {}]
  %s2 = inlined_call_operand.vmem [shape: f32[16,3], index: 2, kind: input, shape index: {}]
  %s3 = inlined_call_operand.vmem [shape: f32[16,16], index: 3, kind: input, shape index: {}]
  %s4 = inlined_call_operand.vmem [shape: f32[1,896], index: 4, kind: input, shape index: {}]
  %s5 = inlined_call_operand.hbm [shape: bf16[2,16,896], index: 5, kind: output, shape index: {}]
  %s6 = sld [smem:[#allocation0]]
  $region61: #{tpu_custom_call.1} parent=0
    _
  %s8 = ssub.s32 1, %s6
  %s9 = scalar_select 0, %s8, %s6
  $region1: #{tpu_custom_call.1} parent=0
    #allocation3 [shape = 'u8[20480]{0}', space=vmem, size = 0x5000, scoped, tag = 'input window, operand 0']
    #allocation4 [shape = 's32[2]{0}', space=sflag, size = 0x8, scoped, tag = 'scoped memory for tpu_custom_call.1']
    #allocation5 [shape = 's32[2]{0}', space=sflag, size = 0x8, scoped, tag = 'scoped memory for tpu_custom_call.1']
    #allocation6 [shape = 'u8[4096]{0}', space=vmem, size = 0x1000, scoped, tag = 'input window, operand 1, single buffered']
    #allocation7 [shape = 's32[1]{0}', space=sflag, size = 0x4, scoped, tag = 'scoped memory for tpu_custom_call.1']
    #allocation8 [shape = 'u8[57344]{0}', space=vmem, size = 0xe000, scoped, tag = 'output window, operand 0']
    %10 = vsyncpa [#allocation4], 0
    %s11 = scalar_lea.sflag [#allocation4], 1
    %12 = vsyncpa %s11, 0
    %13 = vsyncpa [#allocation7], 0
    %14 = vsyncpa [#allocation5], 0
    %s15 = scalar_lea.sflag [#allocation5], 1
    %16 = vsyncpa %s15, 0
    loop: start=0, step=1, limit=4
    $region2: #{tpu_custom_call.1} parent=1 // loop_pre_header
      _
    $region3: #{tpu_custom_call.1} parent=1 // loop_header
      %s18 = sphi 0, %s22
      %p19 = scmp.ge.s32.totalorder %s18, 4
      %s28 = sphi 0, %s30
      %s31 = sphi 0, %s28
      %s32 = sphi 0, %s31
      %s48 = sphi 0, %s32
      %s52 = sphi 0, %s52
      %s54 = sphi 0, %s52
      %s55 = sphi 0, %s54
      %s69 = sphi 0, %s55
      %s73 = sphi 0, %s73
      %s75 = sphi 0, %s73
      %s76 = sphi 0, %s75
      %s90 = sphi 0, %s76
      %s94 = sphi 0, %s94
      %s96 = sphi 0, %s94
      %s97 = sphi 0, %s96
      %s111 = sphi 0, %s97
      %s115 = sphi 0, %s115
      %s117 = sphi 0, %s115
      %s118 = sphi 0, %s117
      %s132 = sphi 0, %s118
      %s138 = sphi 0, %s140
      %s141 = sphi 0, %s138
      %s142 = sphi 0, %s141
      %s158 = sphi 0, %s142
    $region4: #{tpu_custom_call.1} parent=1 // loop_header_branch
      %21 = sbr.rel (%p19) target = $region8
    $region5: #{tpu_custom_call.1} parent=1 // loop_body
      %s23 = ssub.s32 %s18, 1
      %s24 = ssub.s32 %s18, 2
      %s25 = sadd.s32 %s18, 1
      %s26 = ssub.s32 %s18, %s25
      %p27 = scmp.eq.s32.totalorder %s26, 0
      %s29 = sadd.s32 %s28, 1
      %s30 = scalar_select %p27, %s28, %s29
      %p33 = pneg %p27
      %p34 = scmp.eq.s32.totalorder %s18, 1
      %p35 = por %p33, %p34
      %p36 = scmp.ne.s32.totalorder %s28, %s31
      %p37 = scmp.eq.s32.totalorder %s18, 0
      %p38 = por %p36, %p37
      %p39 = scmp.ne.s32.totalorder %s28, %s31
      %p40 = scmp.eq.s32.totalorder %s23, 1
      %p41 = por %p39, %p40
      %p42 = scmp.ne.s32.totalorder %s31, %s32
      %p43 = scmp.eq.s32.totalorder %s23, 0
      %p44 = por %p42, %p43
      %p45 = scmp.ne.s32.totalorder %s31, %s32
      %p46 = scmp.eq.s32.totalorder %s24, 1
      %p47 = por %p45, %p46
      %p49 = scmp.ne.s32.totalorder %s32, %s48
      %p50 = scmp.eq.s32.totalorder %s24, 0
      %p51 = por %p49, %p50
      %s53 = sadd.s32 %s52, 1
      %p56 = scmp.eq.s32.totalorder %s18, 1
      %p57 = scmp.ne.s32.totalorder %s52, %s54
      %p58 = scmp.eq.s32.totalorder %s18, 0
      %p59 = por %p57, %p58
      %p60 = scmp.ne.s32.totalorder %s52, %s54
      %p61 = scmp.eq.s32.totalorder %s23, 1
      %p62 = por %p60, %p61
      %p63 = scmp.ne.s32.totalorder %s54, %s55
      %p64 = scmp.eq.s32.totalorder %s23, 0
      %p65 = por %p63, %p64
      %p66 = scmp.ne.s32.totalorder %s54, %s55
      %p67 = scmp.eq.s32.totalorder %s24, 1
      %p68 = por %p66, %p67
      %p70 = scmp.ne.s32.totalorder %s55, %s69
      %p71 = scmp.eq.s32.totalorder %s24, 0
      %p72 = por %p70, %p71
      %s74 = sadd.s32 %s73, 1
      %p77 = scmp.eq.s32.totalorder %s18, 1
      %p78 = scmp.ne.s32.totalorder %s73, %s75
      %p79 = scmp.eq.s32.totalorder %s18, 0
      %p80 = por %p78, %p79
      %p81 = scmp.ne.s32.totalorder %s73, %s75
      %p82 = scmp.eq.s32.totalorder %s23, 1
      %p83 = por %p81, %p82
      %p84 = scmp.ne.s32.totalorder %s75, %s76
      %p85 = scmp.eq.s32.totalorder %s23, 0
      %p86 = por %p84, %p85
      %p87 = scmp.ne.s32.totalorder %s75, %s76
      %p88 = scmp.eq.s32.totalorder %s24, 1
      %p89 = por %p87, %p88
      %p91 = scmp.ne.s32.totalorder %s76, %s90
      %p92 = scmp.eq.s32.totalorder %s24, 0
      %p93 = por %p91, %p92
      %s95 = sadd.s32 %s94, 1
      %p98 = scmp.eq.s32.totalorder %s18, 1
      %p99 = scmp.ne.s32.totalorder %s94, %s96
      %p100 = scmp.eq.s32.totalorder %s18, 0
      %p101 = por %p99, %p100
      %p102 = scmp.ne.s32.totalorder %s94, %s96
      %p103 = scmp.eq.s32.totalorder %s23, 1
      %p104 = por %p102, %p103
      %p105 = scmp.ne.s32.totalorder %s96, %s97
      %p106 = scmp.eq.s32.totalorder %s23, 0
      %p107 = por %p105, %p106
      %p108 = scmp.ne.s32.totalorder %s96, %s97
      %p109 = scmp.eq.s32.totalorder %s24, 1
      %p110 = por %p108, %p109
      %p112 = scmp.ne.s32.totalorder %s97, %s111
      %p113 = scmp.eq.s32.totalorder %s24, 0
      %p114 = por %p112, %p113
      %s116 = sadd.s32 %s115, 1
      %p119 = scmp.eq.s32.totalorder %s18, 1
      %p120 = scmp.ne.s32.totalorder %s115, %s117
      %p121 = scmp.eq.s32.totalorder %s18, 0
      %p122 = por %p120, %p121
      %p123 = scmp.ne.s32.totalorder %s115, %s117
      %p124 = scmp.eq.s32.totalorder %s23, 1
      %p125 = por %p123, %p124
      %p126 = scmp.ne.s32.totalorder %s117, %s118
      %p127 = scmp.eq.s32.totalorder %s23, 0
      %p128 = por %p126, %p127
      %p129 = scmp.ne.s32.totalorder %s117, %s118
      %p130 = scmp.eq.s32.totalorder %s24, 1
      %p131 = por %p129, %p130
      %p133 = scmp.ne.s32.totalorder %s118, %s132
      %p134 = scmp.eq.s32.totalorder %s24, 0
      %p135 = por %p133, %p134
      %s136 = ssub.s32 %s18, %s25
      %p137 = scmp.eq.s32.totalorder %s136, 0
      %s139 = sadd.s32 %s138, 1
      %s140 = scalar_select %p137, %s138, %s139
      %p143 = pneg %p137
      %p144 = scmp.eq.s32.totalorder %s18, 1
      %p145 = por %p143, %p144
      %p146 = scmp.ne.s32.totalorder %s138, %s141
      %p147 = scmp.eq.s32.totalorder %s18, 0
      %p148 = por %p146, %p147
      %p149 = scmp.ne.s32.totalorder %s138, %s141
      %p150 = scmp.eq.s32.totalorder %s23, 1
      %p151 = por %p149, %p150
      %p152 = scmp.ne.s32.totalorder %s141, %s142
      %p153 = scmp.eq.s32.totalorder %s23, 0
      %p154 = por %p152, %p153
      %p155 = scmp.ne.s32.totalorder %s141, %s142
      %p156 = scmp.eq.s32.totalorder %s24, 1
      %p157 = por %p155, %p156
      %p159 = scmp.ne.s32.totalorder %s142, %s158
      %p160 = scmp.eq.s32.totalorder %s24, 0
      %p161 = por %p159, %p160
      %p162 = scmp.le.s32.totalorder 1, %s18
      %p163 = scmp.lt.s32.totalorder %s18, 3
      %p164 = pnand %p162, %p163
      %p165 = pneg %p164
      // Predicated region
      $region9: #{tpu_custom_call.1} parent=5 // pred_check
        _
      $region10: #{tpu_custom_call.1} parent=5 // pred_check_branch
        %167 = sbr.rel (%p164) target = $region12
      $region11: #{tpu_custom_call.1} parent=5 // pred_region
        %s168 = ssub.s32 %s18, 1
        // Predicated region
        $region13: #{tpu_custom_call.1} parent=11 // pred_check
          %p169 = pneg %p65
        $region14: #{tpu_custom_call.1} parent=11 // pred_check_branch
          %171 = sbr.rel (%p169) target = $region16
        $region15: #{tpu_custom_call.1} parent=11 // pred_region
          %173 = vsyncadd [#allocation7], 0
          %s174 = sshll.u32 %s1, 4
          %s175 = int_to_ptr.hbm [resolvable:$true] %s174
          %s176 = sshll.u32 [#allocation6], 4
          %s177 = int_to_ptr.vmem [resolvable:$true] %s176
          %182 = dma.hbm_to_vmem [thread:$0]  %s175, 128, %s177, [#allocation7], 64, 64, 4
        $region16: #{tpu_custom_call.1} parent=11 // pred_fallthru
          _
        // Predicated region
        $region17: #{tpu_custom_call.1} parent=11 // pred_check
          %p183 = pneg %p86
        $region18: #{tpu_custom_call.1} parent=11 // pred_check_branch
          %185 = sbr.rel (%p183) target = $region20
        $region19: #{tpu_custom_call.1} parent=11 // pred_region
          _
        $region20: #{tpu_custom_call.1} parent=11 // pred_fallthru
          _
        // Predicated region
        $region21: #{tpu_custom_call.1} parent=11 // pred_check
          %p186 = pneg %p107
        $region22: #{tpu_custom_call.1} parent=11 // pred_check_branch
          %188 = sbr.rel (%p186) target = $region24
        $region23: #{tpu_custom_call.1} parent=11 // pred_region
          _
        $region24: #{tpu_custom_call.1} parent=11 // pred_fallthru
          _
        // Predicated region
        $region25: #{tpu_custom_call.1} parent=11 // pred_check
          %p189 = pneg %p128
        $region26: #{tpu_custom_call.1} parent=11 // pred_check_branch
          %191 = sbr.rel (%p189) target = $region28
        $region27: #{tpu_custom_call.1} parent=11 // pred_region
          _
        $region28: #{tpu_custom_call.1} parent=11 // pred_fallthru
          _
      $region12: #{tpu_custom_call.1} parent=5 // pred_fallthru
        _
      %p192 = scmp.lt.s32.totalorder %s18, 2
      // Predicated region
      $region29: #{tpu_custom_call.1} parent=5 // pred_check
        %p193 = pneg %p192
      $region30: #{tpu_custom_call.1} parent=5 // pred_check_branch
        %195 = sbr.rel (%p193) target = $region32
      $region31: #{tpu_custom_call.1} parent=5 // pred_region
        // Predicated region
        $region33: #{tpu_custom_call.1} parent=31 // pred_check
          %p196 = pneg %p38
        $region34: #{tpu_custom_call.1} parent=31 // pred_check_branch
          %198 = sbr.rel (%p196) target = $region36
        $region35: #{tpu_custom_call.1} parent=31 // pred_region
          %s199 = sand.u32 %s28, 1
          %s200 = scalar_lea.sflag [#allocation4], %s199
          %s201 = sand.u32 %s28, 1
          %s202 = smul.addr %s201, 20
          %s203 = scalar_lea.vmem [#allocation3], %s202
          %205 = vsyncadd %s200, 0
          %s206 = smul.addr %s18, 10
          %s207 = smul.addr %s206, 2
          %s208 = scalar_lea.hbm %s0, %s207
          %s210 = sshll.u32 %s208, 4
          %s211 = int_to_ptr.hbm [resolvable:$true] %s210
          %s212 = sshll.u32 %s203, 4
          %s213 = int_to_ptr.vmem [resolvable:$true] %s212
          %215 = dma.hbm_to_vmem [thread:$0]  %s211, 320, %s213, %s200
        $region36: #{tpu_custom_call.1} parent=31 // pred_fallthru
          _
      $region32: #{tpu_custom_call.1} parent=5 // pred_fallthru
        _
      %p216 = scmp.le.s32.totalorder 1, %s18
      %p217 = scmp.lt.s32.totalorder %s18, 3
      %p218 = pnand %p216, %p217
      %p219 = pneg %p218
      // Predicated region
      $region37: #{tpu_custom_call.1} parent=5 // pred_check
        _
      $region38: #{tpu_custom_call.1} parent=5 // pred_check_branch
        %221 = sbr.rel (%p218) target = $region40
      $region39: #{tpu_custom_call.1} parent=5 // pred_region
        %s222 = ssub.s32 %s18, 1
        %s223 = sand.u32 %s31, 1
        %s224 = scalar_lea.sflag [#allocation4], %s223
        %s225 = sand.u32 %s31, 1
        %s226 = smul.addr %s225, 20
        %s227 = scalar_lea.vmem [#allocation3], %s226
        // Predicated region
        $region41: #{tpu_custom_call.1} parent=39 // pred_check
          %p228 = pneg %p44
        $region42: #{tpu_custom_call.1} parent=39 // pred_check_branch
          %230 = sbr.rel (%p228) target = $region44
        $region43: #{tpu_custom_call.1} parent=39 // pred_region
          %232 = dma.done %s224, 320
        $region44: #{tpu_custom_call.1} parent=39 // pred_fallthru
          _
        // Predicated region
        $region45: #{tpu_custom_call.1} parent=39 // pred_check
          %p233 = pneg %p65
        $region46: #{tpu_custom_call.1} parent=39 // pred_check_branch
          %235 = sbr.rel (%p233) target = $region48
        $region47: #{tpu_custom_call.1} parent=39 // pred_region
          %237 = dma.done [#allocation7], 128
        $region48: #{tpu_custom_call.1} parent=39 // pred_fallthru
          _
        %s238 = sand.u32 %s31, 1
        %s239 = scalar_lea.sflag [#allocation4], %s238
        %s240 = sand.u32 %s31, 1
        %s241 = smul.addr %s240, 20
        %s242 = scalar_lea.vmem [#allocation3], %s241
        %p243 = pneg %p44
        %p244 = pneg %p41
        %p245 = pneg %p65
        %p246 = pneg %p62
        %p247 = pneg %p86
        %p248 = pneg %p83
        %p249 = pneg %p107
        %p250 = pneg %p104
        %p251 = pneg %p128
        %p252 = pneg %p125
        %p253 = pneg %p154
        %p254 = pneg %p151
        %s255 = sand.u32 %s141, 1
        %s256 = scalar_lea.sflag [#allocation5], %s255
        %s257 = sand.u32 %s141, 1
        %s258 = smul.addr %s257, 56
        %s259 = scalar_lea.vmem [#allocation8], %s258
        %v261 = vld [vmem:[%s227] sm:$0xff]
        %v262 = vld [vmem:[%s227 + $0x8] sm:$0x3f]
        %v263 = vld [vmem:[%s227 + $0x8] sm:$0xff]
        %265 = vst [vmem:[#allocation1] ss:$4 sm:$0xff] %v261
        %s267 = scalar_lea.vmem [#allocation1], 32
        %268 = vst [vmem:[%s267] ss:$4 sm:$0xff] %v262
        %v269 = vld.sshfl [vmem:[#allocation1] sm:$0xff pattern:$0x73625140]
        %v270 = vld.sshfl [vmem:[#allocation1 + $0x8] sm:$0xff pattern:$0x73625140]
        %v271 = vld.sshfl [vmem:[#allocation1 + $0x10] sm:$0xff pattern:$0x73625140]
        %v272 = vld.sshfl [vmem:[#allocation1 + $0x18] sm:$0xff pattern:$0x73625140]
        %v273 = vld.sshfl [vmem:[#allocation1 + $0x20] sm:$0xff pattern:$0x73625140]
        %v274 = vld.sshfl [vmem:[#allocation1 + $0x28] sm:$0xff pattern:$0x73625140]
        %v275 = vld.sshfl [vmem:[#allocation1 + $0x30] sm:$0xff pattern:$0x73625140]
        %s276 = scalar_lea.vmem [#allocation1], 1
        %277 = vst [vmem:[%s276] ss:$4 sm:$0xff] %v261
        %s279 = scalar_lea.vmem [#allocation1], 33
        %280 = vst [vmem:[%s279] ss:$4 sm:$0xff] %v263
        %v281 = vld.sshfl [vmem:[#allocation1] sm:$0xff pattern:$0x73625140]
        %v283 = vld.sshfl [vmem:[#allocation1 + $0x8] sm:$0xff pattern:$0x73625140]
        %v285 = vld.sshfl [vmem:[#allocation1 + $0x10] sm:$0xff pattern:$0x73625140]
        %v287 = vld.sshfl [vmem:[#allocation1 + $0x18] sm:$0xff pattern:$0x73625140]
        %v289 = vld.sshfl [vmem:[#allocation1 + $0x20] sm:$0xff pattern:$0x73625140]
        %v291 = vld.sshfl [vmem:[#allocation1 + $0x28] sm:$0xff pattern:$0x73625140]
        %v293 = vld.sshfl [vmem:[#allocation1 + $0x30] sm:$0xff pattern:$0x73625140]
        %v295 = vld.sshfl [vmem:[#allocation1 + $0x38] sm:$0xff pattern:$0x73625140]
        %297 = vrot.lane.b32.xlu0 %v281, 127
        %v298 = vpop.permute.xlu0 %297
        %299 = vrot.lane.b32.xlu0 %v283, 127
        %v300 = vpop.permute.xlu0 %299
        %301 = vrot.lane.b32.xlu0 %v285, 127
        %v302 = vpop.permute.xlu0 %301
        %303 = vrot.lane.b32.xlu0 %v287, 127
        %v304 = vpop.permute.xlu0 %303
        %305 = vrot.lane.b32.xlu0 %v289, 127
        %v306 = vpop.permute.xlu0 %305
        %307 = vrot.lane.b32.xlu0 %v291, 127
        %v308 = vpop.permute.xlu0 %307
        %309 = vrot.lane.b32.xlu0 %v293, 127
        %v310 = vpop.permute.xlu0 %309
        %311 = vrot.lane.b32.xlu0 %v295, 127
        %v312 = vpop.permute.xlu0 %311
        %vm313 = vcmask 1039360
        %v314 = vsel %vm313, %v298, %v300
        %v315 = vsel %vm313, %v300, %v302
        %v316 = vsel %vm313, %v302, %v304
        %v317 = vsel %vm313, %v304, %v306
        %v318 = vsel %vm313, %v306, %v308
        %v319 = vsel %vm313, %v308, %v310
        %v320 = vsel %vm313, %v310, %v312
        %s321 = scalar_lea.vmem [#allocation1], 2
        %322 = vst [vmem:[%s321] ss:$4 sm:$0xff] %v261
        %s323 = scalar_lea.vmem [#allocation1], 34
        %324 = vst [vmem:[%s323] ss:$4 sm:$0xff] %v263
        %v325 = vld.sshfl [vmem:[#allocation1] sm:$0xff pattern:$0x73625140]
        %v327 = vld.sshfl [vmem:[#allocation1 + $0x8] sm:$0xff pattern:$0x73625140]
        %v329 = vld.sshfl [vmem:[#allocation1 + $0x10] sm:$0xff pattern:$0x73625140]
        %v331 = vld.sshfl [vmem:[#allocation1 + $0x18] sm:$0xff pattern:$0x73625140]
        %v333 = vld.sshfl [vmem:[#allocation1 + $0x20] sm:$0xff pattern:$0x73625140]
        %v335 = vld.sshfl [vmem:[#allocation1 + $0x28] sm:$0xff pattern:$0x73625140]
        %v337 = vld.sshfl [vmem:[#allocation1 + $0x30] sm:$0xff pattern:$0x73625140]
        %v339 = vld.sshfl [vmem:[#allocation1 + $0x38] sm:$0xff pattern:$0x73625140]
        %341 = vrot.lane.b32.xlu0 %v325, 126
        %v342 = vpop.permute.xlu0 %341
        %343 = vrot.lane.b32.xlu0 %v327, 126
        %v344 = vpop.permute.xlu0 %343
        %345 = vrot.lane.b32.xlu0 %v329, 126
        %v346 = vpop.permute.xlu0 %345
        %347 = vrot.lane.b32.xlu0 %v331, 126
        %v348 = vpop.permute.xlu0 %347
        %349 = vrot.lane.b32.xlu0 %v333, 126
        %v350 = vpop.permute.xlu0 %349
        %351 = vrot.lane.b32.xlu0 %v335, 126
        %v352 = vpop.permute.xlu0 %351
        %353 = vrot.lane.b32.xlu0 %v337, 126
        %v354 = vpop.permute.xlu0 %353
        %355 = vrot.lane.b32.xlu0 %v339, 126
        %v356 = vpop.permute.xlu0 %355
        %vm357 = vcmask 1031168
        %v358 = vsel %vm357, %v342, %v344
        %v359 = vsel %vm357, %v344, %v346
        %v360 = vsel %vm357, %v346, %v348
        %v361 = vsel %vm357, %v348, %v350
        %v362 = vsel %vm357, %v350, %v352
        %v363 = vsel %vm357, %v352, %v354
        %v364 = vsel %vm357, %v354, %v356
        %s365 = scalar_lea.vmem [#allocation1], 3
        %366 = vst [vmem:[%s365] ss:$4 sm:$0xff] %v261
        %s367 = scalar_lea.vmem [#allocation1], 35
        %368 = vst [vmem:[%s367] ss:$4 sm:$0xff] %v263
        %v369 = vld.sshfl [vmem:[#allocation1] sm:$0xff pattern:$0x73625140]
        %v371 = vld.sshfl [vmem:[#allocation1 + $0x8] sm:$0xff pattern:$0x73625140]
        %v373 = vld.sshfl [vmem:[#allocation1 + $0x10] sm:$0xff pattern:$0x73625140]
        %v375 = vld.sshfl [vmem:[#allocation1 + $0x18] sm:$0xff pattern:$0x73625140]
        %v377 = vld.sshfl [vmem:[#allocation1 + $0x20] sm:$0xff pattern:$0x73625140]
        %v379 = vld.sshfl [vmem:[#allocation1 + $0x28] sm:$0xff pattern:$0x73625140]
        %v381 = vld.sshfl [vmem:[#allocation1 + $0x30] sm:$0xff pattern:$0x73625140]
        %v383 = vld.sshfl [vmem:[#allocation1 + $0x38] sm:$0xff pattern:$0x73625140]
        %385 = vrot.lane.b32.xlu0 %v369, 118
        %v386 = vpop.permute.xlu0 %385
        %387 = vrot.lane.b32.xlu0 %v371, 118
        %v388 = vpop.permute.xlu0 %387
        %389 = vrot.lane.b32.xlu0 %v373, 118
        %v390 = vpop.permute.xlu0 %389
        %391 = vrot.lane.b32.xlu0 %v375, 118
        %v392 = vpop.permute.xlu0 %391
        %393 = vrot.lane.b32.xlu0 %v377, 118
        %v394 = vpop.permute.xlu0 %393
        %395 = vrot.lane.b32.xlu0 %v379, 118
        %v396 = vpop.permute.xlu0 %395
        %397 = vrot.lane.b32.xlu0 %v381, 118
        %v398 = vpop.permute.xlu0 %397
        %399 = vrot.lane.b32.xlu0 %v383, 118
        %v400 = vpop.permute.xlu0 %399
        %vm401 = vcmask 965632
        %v402 = vsel %vm401, %v386, %v388
        %v403 = vsel %vm401, %v388, %v390
        %v404 = vsel %vm401, %v390, %v392
        %v405 = vsel %vm401, %v392, %v394
        %v406 = vsel %vm401, %v394, %v396
        %v407 = vsel %vm401, %v396, %v398
        %v408 = vsel %vm401, %v398, %v400
        %vm409 = vcmask 1041408
        %v411 = vsel %vm409, %v269, %v314
        %v413 = vsel %vm409, %v270, %v315
        %v415 = vsel %vm409, %v271, %v316
        %v417 = vsel %vm409, %v272, %v317
        %v419 = vsel %vm409, %v273, %v318
        %v421 = vsel %vm409, %v274, %v319
        %v423 = vsel %vm409, %v275, %v320
        %vm424 = vcmask 1043456
        %v426 = vsel %vm424, %v411, %v358
        %v428 = vsel %vm424, %v413, %v359
        %v430 = vsel %vm424, %v415, %v360
        %v432 = vsel %vm424, %v417, %v361
        %v434 = vsel %vm424, %v419, %v362
        %v436 = vsel %vm424, %v421, %v363
        %v438 = vsel %vm424, %v423, %v364
        %vm439 = vcmask 1045504
        %v441 = vsel %vm439, %v426, %v402
        %v443 = vsel %vm439, %v428, %v403
        %v445 = vsel %vm439, %v430, %v404
        %v447 = vsel %vm439, %v432, %v405
        %v449 = vsel %vm439, %v434, %v406
        %v451 = vsel %vm439, %v436, %v407
        %v453 = vsel %vm439, %v438, %v408
        %v461 = vunpack.c.l.b16 %v441
        %v462 = vunpack.c.l.b16 %v443
        %v463 = vunpack.c.l.b16 %v445
        %v464 = vunpack.c.l.b16 %v447
        %v465 = vunpack.c.l.b16 %v449
        %v466 = vunpack.c.l.b16 %v451
        %v467 = vunpack.c.l.b16 %v453
        %v468 = vunpack.c.h.b16 %v441
        %v469 = vunpack.c.h.b16 %v443
        %v470 = vunpack.c.h.b16 %v445
        %v471 = vunpack.c.h.b16 %v447
        %v472 = vunpack.c.h.b16 %v449
        %v473 = vunpack.c.h.b16 %v451
        %v474 = vunpack.c.h.b16 %v453
        %v475 = vpack.c.b16 %v462, %v461
        %v476 = vpack.c.b16 %v464, %v463
        %v477 = vpack.c.b16 %v466, %v465
        %v478 = vpack.c.b16 %v467, %v467
        %v479 = vpack.c.b16 %v469, %v468
        %v480 = vpack.c.b16 %v471, %v470
        %v481 = vpack.c.b16 %v473, %v472
        %v482 = vpack.c.b16 %v474, %v474
        %491 = vst [vmem:[#allocation2] sm:$0xff] %v475
        %492 = vst [vmem:[#allocation2 + $0x8] sm:$0xff] %v476
        %493 = vst [vmem:[#allocation2 + $0x10] sm:$0xff] %v477
        %494 = vst [vmem:[#allocation2 + $0x18] sm:$0xf] %v478
        %495 = vst [vmem:[#allocation2 + $0x1c] sm:$0xff] %v479
        %496 = vst [vmem:[#allocation2 + $0x24] sm:$0xff] %v480
        %497 = vst [vmem:[#allocation2 + $0x2c] sm:$0xff] %v481
        %498 = vst [vmem:[#allocation2 + $0x34] sm:$0xf] %v482
        %v499 = vld [vmem:[%s227] sm:$0xff]
        %v500 = vld [vmem:[%s227 + $0x8] sm:$0xff]
        %502 = vst [vmem:[#allocation1] ss:$4 sm:$0xff] %v499
        %s504 = scalar_lea.vmem [#allocation1], 32
        %505 = vst [vmem:[%s504] ss:$4 sm:$0xff] %v500
        %v506 = vld.sshfl [vmem:[#allocation1] sm:$0xff pattern:$0x73625140]
        %v507 = vld.sshfl [vmem:[#allocation1 + $0x8] sm:$0xff pattern:$0x73625140]
        %v508 = vld.sshfl [vmem:[#allocation1 + $0x10] sm:$0xff pattern:$0x73625140]
        %v509 = vld.sshfl [vmem:[#allocation1 + $0x18] sm:$0xff pattern:$0x73625140]
        %v510 = vld.sshfl [vmem:[#allocation1 + $0x20] sm:$0xff pattern:$0x73625140]
        %v511 = vld.sshfl [vmem:[#allocation1 + $0x28] sm:$0xff pattern:$0x73625140]
        %v512 = vld.sshfl [vmem:[#allocation1 + $0x30] sm:$0xff pattern:$0x73625140]
        %v513 = vld.sshfl [vmem:[#allocation1 + $0x38] sm:$0xff pattern:$0x73625140]
        %s514 = scalar_lea.vmem [#allocation1], 1
        %515 = vst [vmem:[%s514] ss:$4 sm:$0xff] %v499
        %s516 = scalar_lea.vmem [#allocation1], 33
        %517 = vst [vmem:[%s516] ss:$4 sm:$0xff] %v500
        %v518 = vld.sshfl [vmem:[#allocation1] sm:$0xff pattern:$0x73625140]
        %v520 = vld.sshfl [vmem:[#allocation1 + $0x8] sm:$0xff pattern:$0x73625140]
        %v522 = vld.sshfl [vmem:[#allocation1 + $0x10] sm:$0xff pattern:$0x73625140]
        %v524 = vld.sshfl [vmem:[#allocation1 + $0x18] sm:$0xff pattern:$0x73625140]
        %v526 = vld.sshfl [vmem:[#allocation1 + $0x20] sm:$0xff pattern:$0x73625140]
        %v528 = vld.sshfl [vmem:[#allocation1 + $0x28] sm:$0xff pattern:$0x73625140]
        %v530 = vld.sshfl [vmem:[#allocation1 + $0x30] sm:$0xff pattern:$0x73625140]
        %v532 = vld.sshfl [vmem:[#allocation1 + $0x38] sm:$0xff pattern:$0x73625140]
        %534 = vrot.lane.b32.xlu0 %v518, 127
        %v535 = vpop.permute.xlu0 %534
        %536 = vrot.lane.b32.xlu0 %v520, 127
        %v537 = vpop.permute.xlu0 %536
        %538 = vrot.lane.b32.xlu0 %v522, 127
        %v539 = vpop.permute.xlu0 %538
        %540 = vrot.lane.b32.xlu0 %v524, 127
        %v541 = vpop.permute.xlu0 %540
        %542 = vrot.lane.b32.xlu0 %v526, 127
        %v543 = vpop.permute.xlu0 %542
        %544 = vrot.lane.b32.xlu0 %v528, 127
        %v545 = vpop.permute.xlu0 %544
        %546 = vrot.lane.b32.xlu0 %v530, 127
        %v547 = vpop.permute.xlu0 %546
        %548 = vrot.lane.b32.xlu0 %v532, 127
        %v549 = vpop.permute.xlu0 %548
        %v550 = vsel %vm313, %v535, %v537
        %v551 = vsel %vm313, %v537, %v539
        %v552 = vsel %vm313, %v539, %v541
        %v553 = vsel %vm313, %v541, %v543
        %v554 = vsel %vm313, %v543, %v545
        %v555 = vsel %vm313, %v545, %v547
        %v556 = vsel %vm313, %v547, %v549
        %s557 = scalar_lea.vmem [#allocation1], 2
        %558 = vst [vmem:[%s557] ss:$4 sm:$0xff] %v499
        %s559 = scalar_lea.vmem [#allocation1], 34
        %560 = vst [vmem:[%s559] ss:$4 sm:$0xff] %v500
        %v561 = vld.sshfl [vmem:[#allocation1] sm:$0xff pattern:$0x73625140]
        %v563 = vld.sshfl [vmem:[#allocation1 + $0x8] sm:$0xff pattern:$0x73625140]
        %v565 = vld.sshfl [vmem:[#allocation1 + $0x10] sm:$0xff pattern:$0x73625140]
        %v567 = vld.sshfl [vmem:[#allocation1 + $0x18] sm:$0xff pattern:$0x73625140]
        %v569 = vld.sshfl [vmem:[#allocation1 + $0x20] sm:$0xff pattern:$0x73625140]
        %v571 = vld.sshfl [vmem:[#allocation1 + $0x28] sm:$0xff pattern:$0x73625140]
        %v573 = vld.sshfl [vmem:[#allocation1 + $0x30] sm:$0xff pattern:$0x73625140]
        %v575 = vld.sshfl [vmem:[#allocation1 + $0x38] sm:$0xff pattern:$0x73625140]
        %577 = vrot.lane.b32.xlu0 %v561, 119
        %v578 = vpop.permute.xlu0 %577
        %579 = vrot.lane.b32.xlu0 %v563, 119
        %v580 = vpop.permute.xlu0 %579
        %581 = vrot.lane.b32.xlu0 %v565, 119
        %v582 = vpop.permute.xlu0 %581
        %583 = vrot.lane.b32.xlu0 %v567, 119
        %v584 = vpop.permute.xlu0 %583
        %585 = vrot.lane.b32.xlu0 %v569, 119
        %v586 = vpop.permute.xlu0 %585
        %587 = vrot.lane.b32.xlu0 %v571, 119
        %v588 = vpop.permute.xlu0 %587
        %589 = vrot.lane.b32.xlu0 %v573, 119
        %v590 = vpop.permute.xlu0 %589
        %591 = vrot.lane.b32.xlu0 %v575, 119
        %v592 = vpop.permute.xlu0 %591
        %vm593 = vcmask 973824
        %v594 = vsel %vm593, %v578, %v580
        %v595 = vsel %vm593, %v580, %v582
        %v596 = vsel %vm593, %v582, %v584
        %v597 = vsel %vm593, %v584, %v586
        %v598 = vsel %vm593, %v586, %v588
        %v599 = vsel %vm593, %v588, %v590
        %v600 = vsel %vm593, %v590, %v592
        %s601 = scalar_lea.vmem [#allocation1], 3
        %602 = vst [vmem:[%s601] ss:$4 sm:$0xff] %v499
        %s603 = scalar_lea.vmem [#allocation1], 35
        %604 = vst [vmem:[%s603] ss:$4 sm:$0xff] %v500
        %v605 = vld.sshfl [vmem:[#allocation1] sm:$0xff pattern:$0x73625140]
        %v607 = vld.sshfl [vmem:[#allocation1 + $0x8] sm:$0xff pattern:$0x73625140]
        %v609 = vld.sshfl [vmem:[#allocation1 + $0x10] sm:$0xff pattern:$0x73625140]
        %v611 = vld.sshfl [vmem:[#allocation1 + $0x18] sm:$0xff pattern:$0x73625140]
        %v613 = vld.sshfl [vmem:[#allocation1 + $0x20] sm:$0xff pattern:$0x73625140]
        %v615 = vld.sshfl [vmem:[#allocation1 + $0x28] sm:$0xff pattern:$0x73625140]
        %v617 = vld.sshfl [vmem:[#allocation1 + $0x30] sm:$0xff pattern:$0x73625140]
        %v619 = vld.sshfl [vmem:[#allocation1 + $0x38] sm:$0xff pattern:$0x73625140]
        %621 = vrot.lane.b32.xlu0 %v605, 118
        %v622 = vpop.permute.xlu0 %621
        %623 = vrot.lane.b32.xlu0 %v607, 118
        %v624 = vpop.permute.xlu0 %623
        %625 = vrot.lane.b32.xlu0 %v609, 118
        %v626 = vpop.permute.xlu0 %625
        %627 = vrot.lane.b32.xlu0 %v611, 118
        %v628 = vpop.permute.xlu0 %627
        %629 = vrot.lane.b32.xlu0 %v613, 118
        %v630 = vpop.permute.xlu0 %629
        %631 = vrot.lane.b32.xlu0 %v615, 118
        %v632 = vpop.permute.xlu0 %631
        %633 = vrot.lane.b32.xlu0 %v617, 118
        %v634 = vpop.permute.xlu0 %633
        %635 = vrot.lane.b32.xlu0 %v619, 118
        %v636 = vpop.permute.xlu0 %635
        %v637 = vsel %vm401, %v622, %v624
        %v638 = vsel %vm401, %v624, %v626
        %v639 = vsel %vm401, %v626, %v628
        %v640 = vsel %vm401, %v628, %v630
        %v641 = vsel %vm401, %v630, %v632
        %v642 = vsel %vm401, %v632, %v634
        %v643 = vsel %vm401, %v634, %v636
        %v645 = vsel %vm409, %v506, %v550
        %v647 = vsel %vm409, %v507, %v551
        %v649 = vsel %vm409, %v508, %v552
        %v651 = vsel %vm409, %v509, %v553
        %v653 = vsel %vm409, %v510, %v554
        %v655 = vsel %vm409, %v511, %v555
        %v657 = vsel %vm409, %v512, %v556
        %v659 = vsel %vm409, %v513, %v549
        %v661 = vsel %vm424, %v645, %v594
        %v663 = vsel %vm424, %v647, %v595
        %v665 = vsel %vm424, %v649, %v596
        %v667 = vsel %vm424, %v651, %v597
        %v669 = vsel %vm424, %v653, %v598
        %v671 = vsel %vm424, %v655, %v599
        %v673 = vsel %vm424, %v657, %v600
        %v675 = vsel %vm424, %v659, %v592
        %v677 = vsel %vm439, %v661, %v637
        %v679 = vsel %vm439, %v663, %v638
        %v681 = vsel %vm439, %v665, %v639
        %v683 = vsel %vm439, %v667, %v640
        %v685 = vsel %vm439, %v669, %v641
        %v687 = vsel %vm439, %v671, %v642
        %v689 = vsel %vm439, %v673, %v643
        %v691 = vsel %vm439, %v675, %v636
        %v700 = vunpack.c.l.b16 %v677
        %v701 = vunpack.c.l.b16 %v679
        %v702 = vunpack.c.l.b16 %v681
        %v703 = vunpack.c.l.b16 %v683
        %v704 = vunpack.c.l.b16 %v685
        %v705 = vunpack.c.l.b16 %v687
        %v706 = vunpack.c.l.b16 %v689
        %v707 = vunpack.c.l.b16 %v691
        %v708 = vunpack.c.h.b16 %v677
        %v709 = vunpack.c.h.b16 %v679
        %v710 = vunpack.c.h.b16 %v681
        %v711 = vunpack.c.h.b16 %v683
        %v712 = vunpack.c.h.b16 %v685
        %v713 = vunpack.c.h.b16 %v687
        %v714 = vunpack.c.h.b16 %v689
        %v715 = vunpack.c.h.b16 %v691
        %v716 = vpack.c.b16 %v701, %v700
        %v717 = vpack.c.b16 %v703, %v702
        %v718 = vpack.c.b16 %v705, %v704
        %v719 = vpack.c.b16 %v707, %v706
        %v720 = vpack.c.b16 %v709, %v708
        %v721 = vpack.c.b16 %v711, %v710
        %v722 = vpack.c.b16 %v713, %v712
        %v723 = vpack.c.b16 %v715, %v714
        %724 = vrot.lane.b32.xlu0 %v716, 117
        %v725 = vpop.permute.xlu0 %724
        %726 = vrot.lane.b32.xlu0 %v717, 117
        %v727 = vpop.permute.xlu0 %726
        %728 = vrot.lane.b32.xlu0 %v718, 117
        %v729 = vpop.permute.xlu0 %728
        %730 = vrot.lane.b32.xlu0 %v719, 117
        %v731 = vpop.permute.xlu0 %730
        %732 = vrot.lane.b32.xlu0 %v720, 117
        %v733 = vpop.permute.xlu0 %732
        %734 = vrot.lane.b32.xlu0 %v721, 117
        %v735 = vpop.permute.xlu0 %734
        %736 = vrot.lane.b32.xlu0 %v722, 117
        %v737 = vpop.permute.xlu0 %736
        %738 = vrot.lane.b32.xlu0 %v723, 117
        %v739 = vpop.permute.xlu0 %738
        %v740 = vrot.slane %v725, 4
        %v741 = vrot.slane %v727, 4
        %v742 = vrot.slane %v729, 4
        %v743 = vrot.slane %v731, 4
        %v744 = vrot.slane %v733, 4
        %v745 = vrot.slane %v735, 4
        %v746 = vrot.slane %v737, 4
        %v747 = vrot.slane %v739, 4
        %vm748 = vcmask 1043456
        %v749 = vsel %vm748, %v740, %v741
        %vm750 = vcmask 957440
        %v751 = vsel %vm750, %v725, %v749
        %v752 = vsel %vm748, %v741, %v742
        %v753 = vsel %vm750, %v727, %v752
        %v754 = vsel %vm748, %v742, %v743
        %v755 = vsel %vm750, %v729, %v754
        %v756 = vsel %vm750, %v731, %v743
        %v757 = vsel %vm748, %v744, %v745
        %v758 = vsel %vm750, %v733, %v757
        %v759 = vsel %vm748, %v745, %v746
        %v760 = vsel %vm750, %v735, %v759
        %v761 = vsel %vm748, %v746, %v747
        %v762 = vsel %vm750, %v737, %v761
        %v763 = vsel %vm750, %v739, %v747
        %772 = vst [vmem:[#allocation2 + $0x38] sm:$0xff] %v751
        %773 = vst [vmem:[#allocation2 + $0x40] sm:$0xff] %v753
        %774 = vst [vmem:[#allocation2 + $0x48] sm:$0xff] %v755
        %775 = vst [vmem:[#allocation2 + $0x50] sm:$0xf] %v756
        %776 = vst [vmem:[#allocation2 + $0x54] sm:$0xff] %v758
        %777 = vst [vmem:[#allocation2 + $0x5c] sm:$0xff] %v760
        %778 = vst [vmem:[#allocation2 + $0x64] sm:$0xff] %v762
        %779 = vst [vmem:[#allocation2 + $0x6c] sm:$0xf] %v763
        %v780 = vld [vmem:[%s227] sm:$0xff]
        %v781 = vld [vmem:[%s227 + $0x8] sm:$0xff]
        %783 = vst [vmem:[#allocation1] ss:$4 sm:$0xff] %v780
        %s785 = scalar_lea.vmem [#allocation1], 32
        %786 = vst [vmem:[%s785] ss:$4 sm:$0xff] %v781
        %v787 = vld.sshfl [vmem:[#allocation1] sm:$0xff pattern:$0x73625140]
        %v788 = vld.sshfl [vmem:[#allocation1 + $0x8] sm:$0xff pattern:$0x73625140]
        %v789 = vld.sshfl [vmem:[#allocation1 + $0x10] sm:$0xff pattern:$0x73625140]
        %v790 = vld.sshfl [vmem:[#allocation1 + $0x18] sm:$0xff pattern:$0x73625140]
        %v791 = vld.sshfl [vmem:[#allocation1 + $0x20] sm:$0xff pattern:$0x73625140]
        %v792 = vld.sshfl [vmem:[#allocation1 + $0x28] sm:$0xff pattern:$0x73625140]
        %v793 = vld.sshfl [vmem:[#allocation1 + $0x30] sm:$0xff pattern:$0x73625140]
        %v794 = vld.sshfl [vmem:[#allocation1 + $0x38] sm:$0xff pattern:$0x73625140]
        %s795 = scalar_lea.vmem [#allocation1], 1
        %796 = vst [vmem:[%s795] ss:$4 sm:$0xff] %v780
        %s797 = scalar_lea.vmem [#allocation1], 33
        %798 = vst [vmem:[%s797] ss:$4 sm:$0xff] %v781
        %v799 = vld.sshfl [vmem:[#allocation1] sm:$0xff pattern:$0x73625140]
        %v801 = vld.sshfl [vmem:[#allocation1 + $0x8] sm:$0xff pattern:$0x73625140]
        %v803 = vld.sshfl [vmem:[#allocation1 + $0x10] sm:$0xff pattern:$0x73625140]
        %v805 = vld.sshfl [vmem:[#allocation1 + $0x18] sm:$0xff pattern:$0x73625140]
        %v807 = vld.sshfl [vmem:[#allocation1 + $0x20] sm:$0xff pattern:$0x73625140]
        %v809 = vld.sshfl [vmem:[#allocation1 + $0x28] sm:$0xff pattern:$0x73625140]
        %v811 = vld.sshfl [vmem:[#allocation1 + $0x30] sm:$0xff pattern:$0x73625140]
        %v813 = vld.sshfl [vmem:[#allocation1 + $0x38] sm:$0xff pattern:$0x73625140]
        %815 = vrot.lane.b32.xlu0 %v799, 50
        %v816 = vpop.permute.xlu0 %815
        %817 = vrot.lane.b32.xlu0 %v801, 50
        %v818 = vpop.permute.xlu0 %817
        %819 = vrot.lane.b32.xlu0 %v803, 50
        %v820 = vpop.permute.xlu0 %819
        %821 = vrot.lane.b32.xlu0 %v805, 50
        %v822 = vpop.permute.xlu0 %821
        %823 = vrot.lane.b32.xlu0 %v807, 50
        %v824 = vpop.permute.xlu0 %823
        %825 = vrot.lane.b32.xlu0 %v809, 50
        %v826 = vpop.permute.xlu0 %825
        %827 = vrot.lane.b32.xlu0 %v811, 50
        %v828 = vpop.permute.xlu0 %827
        %829 = vrot.lane.b32.xlu0 %v813, 50
        %v830 = vpop.permute.xlu0 %829
        %vm831 = vcmask 408576
        %v832 = vsel %vm831, %v816, %v818
        %v833 = vsel %vm831, %v818, %v820
        %v834 = vsel %vm831, %v820, %v822
        %v835 = vsel %vm831, %v822, %v824
        %v836 = vsel %vm831, %v824, %v826
        %v837 = vsel %vm831, %v826, %v828
        %v838 = vsel %vm831, %v828, %v830
        %s839 = scalar_lea.vmem [#allocation1], 2
        %840 = vst [vmem:[%s839] ss:$4 sm:$0xff] %v780
        %s841 = scalar_lea.vmem [#allocation1], 34
        %842 = vst [vmem:[%s841] ss:$4 sm:$0xff] %v781
        %v843 = vld.sshfl [vmem:[#allocation1] sm:$0xff pattern:$0x73625140]
        %v845 = vld.sshfl [vmem:[#allocation1 + $0x8] sm:$0xff pattern:$0x73625140]
        %v847 = vld.sshfl [vmem:[#allocation1 + $0x10] sm:$0xff pattern:$0x73625140]
        %v849 = vld.sshfl [vmem:[#allocation1 + $0x18] sm:$0xff pattern:$0x73625140]
        %v851 = vld.sshfl [vmem:[#allocation1 + $0x20] sm:$0xff pattern:$0x73625140]
        %v853 = vld.sshfl [vmem:[#allocation1 + $0x28] sm:$0xff pattern:$0x73625140]
        %v855 = vld.sshfl [vmem:[#allocation1 + $0x30] sm:$0xff pattern:$0x73625140]
        %v857 = vld.sshfl [vmem:[#allocation1 + $0x38] sm:$0xff pattern:$0x73625140]
        %859 = vrot.lane.b32.xlu0 %v843, 49
        %v860 = vpop.permute.xlu0 %859
        %861 = vrot.lane.b32.xlu0 %v845, 49
        %v862 = vpop.permute.xlu0 %861
        %863 = vrot.lane.b32.xlu0 %v847, 49
        %v864 = vpop.permute.xlu0 %863
        %865 = vrot.lane.b32.xlu0 %v849, 49
        %v866 = vpop.permute.xlu0 %865
        %867 = vrot.lane.b32.xlu0 %v851, 49
        %v868 = vpop.permute.xlu0 %867
        %869 = vrot.lane.b32.xlu0 %v853, 49
        %v870 = vpop.permute.xlu0 %869
        %871 = vrot.lane.b32.xlu0 %v855, 49
        %v872 = vpop.permute.xlu0 %871
        %873 = vrot.lane.b32.xlu0 %v857, 49
        %v874 = vpop.permute.xlu0 %873
        %vm875 = vcmask 400384
        %v876 = vsel %vm875, %v860, %v862
        %v877 = vsel %vm875, %v862, %v864
        %v878 = vsel %vm875, %v864, %v866
        %v879 = vsel %vm875, %v866, %v868
        %v880 = vsel %vm875, %v868, %v870
        %v881 = vsel %vm875, %v870, %v872
        %v882 = vsel %vm875, %v872, %v874
        %s883 = scalar_lea.vmem [#allocation1], 3
        %884 = vst [vmem:[%s883] ss:$4 sm:$0xff] %v780
        %s885 = scalar_lea.vmem [#allocation1], 35
        %886 = vst [vmem:[%s885] ss:$4 sm:$0xff] %v781
        %v887 = vld.sshfl [vmem:[#allocation1] sm:$0xff pattern:$0x73625140]
        %v889 = vld.sshfl [vmem:[#allocation1 + $0x8] sm:$0xff pattern:$0x73625140]
        %v891 = vld.sshfl [vmem:[#allocation1 + $0x10] sm:$0xff pattern:$0x73625140]
        %v893 = vld.sshfl [vmem:[#allocation1 + $0x18] sm:$0xff pattern:$0x73625140]
        %v895 = vld.sshfl [vmem:[#allocation1 + $0x20] sm:$0xff pattern:$0x73625140]
        %v897 = vld.sshfl [vmem:[#allocation1 + $0x28] sm:$0xff pattern:$0x73625140]
        %v899 = vld.sshfl [vmem:[#allocation1 + $0x30] sm:$0xff pattern:$0x73625140]
        %v901 = vld.sshfl [vmem:[#allocation1 + $0x38] sm:$0xff pattern:$0x73625140]
        %903 = vrot.lane.b32.xlu0 %v887, 48
        %v904 = vpop.permute.xlu0 %903
        %905 = vrot.lane.b32.xlu0 %v889, 48
        %v906 = vpop.permute.xlu0 %905
        %907 = vrot.lane.b32.xlu0 %v891, 48
        %v908 = vpop.permute.xlu0 %907
        %909 = vrot.lane.b32.xlu0 %v893, 48
        %v910 = vpop.permute.xlu0 %909
        %911 = vrot.lane.b32.xlu0 %v895, 48
        %v912 = vpop.permute.xlu0 %911
        %913 = vrot.lane.b32.xlu0 %v897, 48
        %v914 = vpop.permute.xlu0 %913
        %915 = vrot.lane.b32.xlu0 %v899, 48
        %v916 = vpop.permute.xlu0 %915
        %917 = vrot.lane.b32.xlu0 %v901, 48
        %v918 = vpop.permute.xlu0 %917
        %vm919 = vcmask 392192
        %v920 = vsel %vm919, %v904, %v906
        %v921 = vsel %vm919, %v906, %v908
        %v922 = vsel %vm919, %v908, %v910
        %v923 = vsel %vm919, %v910, %v912
        %v924 = vsel %vm919, %v912, %v914
        %v925 = vsel %vm919, %v914, %v916
        %v926 = vsel %vm919, %v916, %v918
        %v928 = vsel %vm409, %v787, %v832
        %v930 = vsel %vm409, %v788, %v833
        %v932 = vsel %vm409, %v789, %v834
        %v934 = vsel %vm409, %v790, %v835
        %v936 = vsel %vm409, %v791, %v836
        %v938 = vsel %vm409, %v792, %v837
        %v940 = vsel %vm409, %v793, %v838
        %v942 = vsel %vm409, %v794, %v830
        %v944 = vsel %vm424, %v928, %v876
        %v946 = vsel %vm424, %v930, %v877
        %v948 = vsel %vm424, %v932, %v878
        %v950 = vsel %vm424, %v934, %v879
        %v952 = vsel %vm424, %v936, %v880
        %v954 = vsel %vm424, %v938, %v881
        %v956 = vsel %vm424, %v940, %v882
        %v958 = vsel %vm424, %v942, %v874
        %v960 = vsel %vm439, %v944, %v920
        %v962 = vsel %vm439, %v946, %v921
        %v964 = vsel %vm439, %v948, %v922
        %v966 = vsel %vm439, %v950, %v923
        %v968 = vsel %vm439, %v952, %v924
        %v970 = vsel %vm439, %v954, %v925
        %v972 = vsel %vm439, %v956, %v926
        %v974 = vsel %vm439, %v958, %v918
        %v983 = vunpack.c.l.b16 %v960
        %v984 = vunpack.c.l.b16 %v962
        %v985 = vunpack.c.l.b16 %v964
        %v986 = vunpack.c.l.b16 %v966
        %v987 = vunpack.c.l.b16 %v968
        %v988 = vunpack.c.l.b16 %v970
        %v989 = vunpack.c.l.b16 %v972
        %v990 = vunpack.c.l.b16 %v974
        %v991 = vunpack.c.h.b16 %v960
        %v992 = vunpack.c.h.b16 %v962
        %v993 = vunpack.c.h.b16 %v964
        %v994 = vunpack.c.h.b16 %v966
        %v995 = vunpack.c.h.b16 %v968
        %v996 = vunpack.c.h.b16 %v970
        %v997 = vunpack.c.h.b16 %v972
        %v998 = vunpack.c.h.b16 %v974
        %v999 = vpack.c.b16 %v984, %v983
        %v1000 = vpack.c.b16 %v986, %v985
        %v1001 = vpack.c.b16 %v988, %v987
        %v1002 = vpack.c.b16 %v990, %v989
        %v1003 = vpack.c.b16 %v992, %v991
        %v1004 = vpack.c.b16 %v994, %v993
        %v1005 = vpack.c.b16 %v996, %v995
        %v1006 = vpack.c.b16 %v998, %v997
        %1007 = vrot.lane.b32.xlu0 %v999, 106
        %v1008 = vpop.permute.xlu0 %1007
        %1009 = vrot.lane.b32.xlu0 %v1000, 106
        %v1010 = vpop.permute.xlu0 %1009
        %1011 = vrot.lane.b32.xlu0 %v1001, 106
        %v1012 = vpop.permute.xlu0 %1011
        %1013 = vrot.lane.b32.xlu0 %v1002, 106
        %v1014 = vpop.permute.xlu0 %1013
        %1015 = vrot.lane.b32.xlu0 %v1003, 106
        %v1016 = vpop.permute.xlu0 %1015
        %1017 = vrot.lane.b32.xlu0 %v1004, 106
        %v1018 = vpop.permute.xlu0 %1017
        %1019 = vrot.lane.b32.xlu0 %v1005, 106
        %v1020 = vpop.permute.xlu0 %1019
        %1021 = vrot.lane.b32.xlu0 %v1006, 106
        %v1022 = vpop.permute.xlu0 %1021
        %v1023 = vrot.slane %v1008, 4
        %v1024 = vrot.slane %v1010, 4
        %v1025 = vrot.slane %v1012, 4
        %v1026 = vrot.slane %v1014, 4
        %v1027 = vrot.slane %v1016, 4
        %v1028 = vrot.slane %v1018, 4
        %v1029 = vrot.slane %v1020, 4
        %v1030 = vrot.slane %v1022, 4
        %v1031 = vsel %vm748, %v1023, %v1024
        %vm1032 = vcmask 867328
        %v1033 = vsel %vm1032, %v1008, %v1031
        %v1034 = vsel %vm748, %v1024, %v1025
        %v1035 = vsel %vm1032, %v1010, %v1034
        %v1036 = vsel %vm748, %v1025, %v1026
        %v1037 = vsel %vm1032, %v1012, %v1036
        %v1038 = vsel %vm1032, %v1014, %v1026
        %v1039 = vsel %vm748, %v1027, %v1028
        %v1040 = vsel %vm1032, %v1016, %v1039
        %v1041 = vsel %vm748, %v1028, %v1029
        %v1042 = vsel %vm1032, %v1018, %v1041
        %v1043 = vsel %vm748, %v1029, %v1030
        %v1044 = vsel %vm1032, %v1020, %v1043
        %v1045 = vsel %vm1032, %v1022, %v1030
        %1054 = vst [vmem:[#allocation2 + $0x70] sm:$0xff] %v1033
        %1055 = vst [vmem:[#allocation2 + $0x78] sm:$0xff] %v1035
        %1056 = vst [vmem:[#allocation2 + $0x80] sm:$0xff] %v1037
        %1057 = vst [vmem:[#allocation2 + $0x88] sm:$0xf] %v1038
        %1058 = vst [vmem:[#allocation2 + $0x8c] sm:$0xff] %v1040
        %1059 = vst [vmem:[#allocation2 + $0x94] sm:$0xff] %v1042
        %1060 = vst [vmem:[#allocation2 + $0x9c] sm:$0xff] %v1044
        %1061 = vst [vmem:[#allocation2 + $0xa4] sm:$0xf] %v1045
        %v1062 = vld [vmem:[%s227] sm:$0xff]
        %v1063 = vld [vmem:[%s227 + $0x8] sm:$0xff]
        %1065 = vst [vmem:[#allocation1] ss:$4 sm:$0xff] %v1062
        %s1067 = scalar_lea.vmem [#allocation1], 32
        %1068 = vst [vmem:[%s1067] ss:$4 sm:$0xff] %v1063
        %v1069 = vld.sshfl [vmem:[#allocation1] sm:$0xff pattern:$0x73625140]
        %v1070 = vld.sshfl [vmem:[#allocation1 + $0x8] sm:$0xff pattern:$0x73625140]
        %v1071 = vld.sshfl [vmem:[#allocation1 + $0x10] sm:$0xff pattern:$0x73625140]
        %v1072 = vld.sshfl [vmem:[#allocation1 + $0x18] sm:$0xff pattern:$0x73625140]
        %v1073 = vld.sshfl [vmem:[#allocation1 + $0x20] sm:$0xff pattern:$0x73625140]
        %v1074 = vld.sshfl [vmem:[#allocation1 + $0x28] sm:$0xff pattern:$0x73625140]
        %v1075 = vld.sshfl [vmem:[#allocation1 + $0x30] sm:$0xff pattern:$0x73625140]
        %v1076 = vld.sshfl [vmem:[#allocation1 + $0x38] sm:$0xff pattern:$0x73625140]
        %s1077 = scalar_lea.vmem [#allocation1], 1
        %1078 = vst [vmem:[%s1077] ss:$4 sm:$0xff] %v1062
        %s1079 = scalar_lea.vmem [#allocation1], 33
        %1080 = vst [vmem:[%s1079] ss:$4 sm:$0xff] %v1063
        %v1081 = vld.sshfl [vmem:[#allocation1] sm:$0xff pattern:$0x73625140]
        %v1083 = vld.sshfl [vmem:[#allocation1 + $0x8] sm:$0xff pattern:$0x73625140]
        %v1085 = vld.sshfl [vmem:[#allocation1 + $0x10] sm:$0xff pattern:$0x73625140]
        %v1087 = vld.sshfl [vmem:[#allocation1 + $0x18] sm:$0xff pattern:$0x73625140]
        %v1089 = vld.sshfl [vmem:[#allocation1 + $0x20] sm:$0xff pattern:$0x73625140]
        %v1091 = vld.sshfl [vmem:[#allocation1 + $0x28] sm:$0xff pattern:$0x73625140]
        %v1093 = vld.sshfl [vmem:[#allocation1 + $0x30] sm:$0xff pattern:$0x73625140]
        %v1095 = vld.sshfl [vmem:[#allocation1 + $0x38] sm:$0xff pattern:$0x73625140]
        %1097 = vrot.lane.b32.xlu0 %v1081, 127
        %v1098 = vpop.permute.xlu0 %1097
        %1099 = vrot.lane.b32.xlu0 %v1083, 127
        %v1100 = vpop.permute.xlu0 %1099
        %1101 = vrot.lane.b32.xlu0 %v1085, 127
        %v1102 = vpop.permute.xlu0 %1101
        %1103 = vrot.lane.b32.xlu0 %v1087, 127
        %v1104 = vpop.permute.xlu0 %1103
        %1105 = vrot.lane.b32.xlu0 %v1089, 127
        %v1106 = vpop.permute.xlu0 %1105
        %1107 = vrot.lane.b32.xlu0 %v1091, 127
        %v1108 = vpop.permute.xlu0 %1107
        %1109 = vrot.lane.b32.xlu0 %v1093, 127
        %v1110 = vpop.permute.xlu0 %1109
        %1111 = vrot.lane.b32.xlu0 %v1095, 127
        %v1112 = vpop.permute.xlu0 %1111
        %v1113 = vsel %vm313, %v1098, %v1100
        %v1114 = vsel %vm313, %v1100, %v1102
        %v1115 = vsel %vm313, %v1102, %v1104
        %v1116 = vsel %vm313, %v1104, %v1106
        %v1117 = vsel %vm313, %v1106, %v1108
        %v1118 = vsel %vm313, %v1108, %v1110
        %v1119 = vsel %vm313, %v1110, %v1112
        %s1120 = scalar_lea.vmem [#allocation1], 2
        %1121 = vst [vmem:[%s1120] ss:$4 sm:$0xff] %v1062
        %s1122 = scalar_lea.vmem [#allocation1], 34
        %1123 = vst [vmem:[%s1122] ss:$4 sm:$0xff] %v1063
        %v1124 = vld.sshfl [vmem:[#allocation1] sm:$0xff pattern:$0x73625140]
        %v1126 = vld.sshfl [vmem:[#allocation1 + $0x8] sm:$0xff pattern:$0x73625140]
        %v1128 = vld.sshfl [vmem:[#allocation1 + $0x10] sm:$0xff pattern:$0x73625140]
        %v1130 = vld.sshfl [vmem:[#allocation1 + $0x18] sm:$0xff pattern:$0x73625140]
        %v1132 = vld.sshfl [vmem:[#allocation1 + $0x20] sm:$0xff pattern:$0x73625140]
        %v1134 = vld.sshfl [vmem:[#allocation1 + $0x28] sm:$0xff pattern:$0x73625140]
        %v1136 = vld.sshfl [vmem:[#allocation1 + $0x30] sm:$0xff pattern:$0x73625140]
        %v1138 = vld.sshfl [vmem:[#allocation1 + $0x38] sm:$0xff pattern:$0x73625140]
        %1140 = vrot.lane.b32.xlu0 %v1124, 126
        %v1141 = vpop.permute.xlu0 %1140
        %1142 = vrot.lane.b32.xlu0 %v1126, 126
        %v1143 = vpop.permute.xlu0 %1142
        %1144 = vrot.lane.b32.xlu0 %v1128, 126
        %v1145 = vpop.permute.xlu0 %1144
        %1146 = vrot.lane.b32.xlu0 %v1130, 126
        %v1147 = vpop.permute.xlu0 %1146
        %1148 = vrot.lane.b32.xlu0 %v1132, 126
        %v1149 = vpop.permute.xlu0 %1148
        %1150 = vrot.lane.b32.xlu0 %v1134, 126
        %v1151 = vpop.permute.xlu0 %1150
        %1152 = vrot.lane.b32.xlu0 %v1136, 126
        %v1153 = vpop.permute.xlu0 %1152
        %1154 = vrot.lane.b32.xlu0 %v1138, 126
        %v1155 = vpop.permute.xlu0 %1154
        %v1156 = vsel %vm357, %v1141, %v1143
        %v1157 = vsel %vm357, %v1143, %v1145
        %v1158 = vsel %vm357, %v1145, %v1147
        %v1159 = vsel %vm357, %v1147, %v1149
        %v1160 = vsel %vm357, %v1149, %v1151
        %v1161 = vsel %vm357, %v1151, %v1153
        %v1162 = vsel %vm357, %v1153, %v1155
        %s1163 = scalar_lea.vmem [#allocation1], 3
        %1164 = vst [vmem:[%s1163] ss:$4 sm:$0xff] %v1062
        %s1165 = scalar_lea.vmem [#allocation1], 35
        %1166 = vst [vmem:[%s1165] ss:$4 sm:$0xff] %v1063
        %v1167 = vld.sshfl [vmem:[#allocation1] sm:$0xff pattern:$0x73625140]
        %v1169 = vld.sshfl [vmem:[#allocation1 + $0x8] sm:$0xff pattern:$0x73625140]
        %v1171 = vld.sshfl [vmem:[#allocation1 + $0x10] sm:$0xff pattern:$0x73625140]
        %v1173 = vld.sshfl [vmem:[#allocation1 + $0x18] sm:$0xff pattern:$0x73625140]
        %v1175 = vld.sshfl [vmem:[#allocation1 + $0x20] sm:$0xff pattern:$0x73625140]
        %v1177 = vld.sshfl [vmem:[#allocation1 + $0x28] sm:$0xff pattern:$0x73625140]
        %v1179 = vld.sshfl [vmem:[#allocation1 + $0x30] sm:$0xff pattern:$0x73625140]
        %v1181 = vld.sshfl [vmem:[#allocation1 + $0x38] sm:$0xff pattern:$0x73625140]
        %1183 = vrot.lane.b32.xlu0 %v1167, 118
        %v1184 = vpop.permute.xlu0 %1183
        %1185 = vrot.lane.b32.xlu0 %v1169, 118
        %v1186 = vpop.permute.xlu0 %1185
        %1187 = vrot.lane.b32.xlu0 %v1171, 118
        %v1188 = vpop.permute.xlu0 %1187
        %1189 = vrot.lane.b32.xlu0 %v1173, 118
        %v1190 = vpop.permute.xlu0 %1189
        %1191 = vrot.lane.b32.xlu0 %v1175, 118
        %v1192 = vpop.permute.xlu0 %1191
        %1193 = vrot.lane.b32.xlu0 %v1177, 118
        %v1194 = vpop.permute.xlu0 %1193
        %1195 = vrot.lane.b32.xlu0 %v1179, 118
        %v1196 = vpop.permute.xlu0 %1195
        %1197 = vrot.lane.b32.xlu0 %v1181, 118
        %v1198 = vpop.permute.xlu0 %1197
        %v1199 = vsel %vm401, %v1184, %v1186
        %v1200 = vsel %vm401, %v1186, %v1188
        %v1201 = vsel %vm401, %v1188, %v1190
        %v1202 = vsel %vm401, %v1190, %v1192
        %v1203 = vsel %vm401, %v1192, %v1194
        %v1204 = vsel %vm401, %v1194, %v1196
        %v1205 = vsel %vm401, %v1196, %v1198
        %v1207 = vsel %vm409, %v1069, %v1113
        %v1209 = vsel %vm409, %v1070, %v1114
        %v1211 = vsel %vm409, %v1071, %v1115
        %v1213 = vsel %vm409, %v1072, %v1116
        %v1215 = vsel %vm409, %v1073, %v1117
        %v1217 = vsel %vm409, %v1074, %v1118
        %v1219 = vsel %vm409, %v1075, %v1119
        %v1221 = vsel %vm409, %v1076, %v1112
        %v1223 = vsel %vm424, %v1207, %v1156
        %v1225 = vsel %vm424, %v1209, %v1157
        %v1227 = vsel %vm424, %v1211, %v1158
        %v1229 = vsel %vm424, %v1213, %v1159
        %v1231 = vsel %vm424, %v1215, %v1160
        %v1233 = vsel %vm424, %v1217, %v1161
        %v1235 = vsel %vm424, %v1219, %v1162
        %v1237 = vsel %vm424, %v1221, %v1155
        %v1239 = vsel %vm439, %v1223, %v1199
        %v1241 = vsel %vm439, %v1225, %v1200
        %v1243 = vsel %vm439, %v1227, %v1201
        %v1245 = vsel %vm439, %v1229, %v1202
        %v1247 = vsel %vm439, %v1231, %v1203
        %v1249 = vsel %vm439, %v1233, %v1204
        %v1251 = vsel %vm439, %v1235, %v1205
        %v1253 = vsel %vm439, %v1237, %v1198
        %v1262 = vunpack.c.l.b16 %v1239
        %v1263 = vunpack.c.l.b16 %v1241
        %v1264 = vunpack.c.l.b16 %v1243
        %v1265 = vunpack.c.l.b16 %v1245
        %v1266 = vunpack.c.l.b16 %v1247
        %v1267 = vunpack.c.l.b16 %v1249
        %v1268 = vunpack.c.l.b16 %v1251
        %v1269 = vunpack.c.l.b16 %v1253
        %v1270 = vunpack.c.h.b16 %v1239
        %v1271 = vunpack.c.h.b16 %v1241
        %v1272 = vunpack.c.h.b16 %v1243
        %v1273 = vunpack.c.h.b16 %v1245
        %v1274 = vunpack.c.h.b16 %v1247
        %v1275 = vunpack.c.h.b16 %v1249
        %v1276 = vunpack.c.h.b16 %v1251
        %v1277 = vunpack.c.h.b16 %v1253
        %v1278 = vpack.c.b16 %v1263, %v1262
        %v1279 = vpack.c.b16 %v1265, %v1264
        %v1280 = vpack.c.b16 %v1267, %v1266
        %v1281 = vpack.c.b16 %v1269, %v1268
        %v1282 = vpack.c.b16 %v1271, %v1270
        %v1283 = vpack.c.b16 %v1273, %v1272
        %v1284 = vpack.c.b16 %v1275, %v1274
        %v1285 = vpack.c.b16 %v1277, %v1276
        %1286 = vrot.lane.b32.xlu0 %v1278, 18
        %v1287 = vpop.permute.xlu0 %1286
        %1288 = vrot.lane.b32.xlu0 %v1279, 18
        %v1289 = vpop.permute.xlu0 %1288
        %1290 = vrot.lane.b32.xlu0 %v1280, 18
        %v1291 = vpop.permute.xlu0 %1290
        %1292 = vrot.lane.b32.xlu0 %v1281, 18
        %v1293 = vpop.permute.xlu0 %1292
        %1294 = vrot.lane.b32.xlu0 %v1282, 18
        %v1295 = vpop.permute.xlu0 %1294
        %1296 = vrot.lane.b32.xlu0 %v1283, 18
        %v1297 = vpop.permute.xlu0 %1296
        %1298 = vrot.lane.b32.xlu0 %v1284, 18
        %v1299 = vpop.permute.xlu0 %1298
        %1300 = vrot.lane.b32.xlu0 %v1285, 18
        %v1301 = vpop.permute.xlu0 %1300
        %v1302 = vrot.slane %v1287, 4
        %v1303 = vrot.slane %v1289, 4
        %v1304 = vrot.slane %v1291, 4
        %v1305 = vrot.slane %v1293, 4
        %v1306 = vrot.slane %v1295, 4
        %v1307 = vrot.slane %v1297, 4
        %v1308 = vrot.slane %v1299, 4
        %v1309 = vrot.slane %v1301, 4
        %v1310 = vsel %vm748, %v1302, %v1303
        %vm1311 = vcmask 146432
        %v1312 = vsel %vm1311, %v1287, %v1310
        %v1313 = vsel %vm748, %v1303, %v1304
        %v1314 = vsel %vm1311, %v1289, %v1313
        %v1315 = vsel %vm748, %v1304, %v1305
        %v1316 = vsel %vm1311, %v1291, %v1315
        %v1317 = vsel %vm1311, %v1293, %v1305
        %v1318 = vsel %vm748, %v1306, %v1307
        %v1319 = vsel %vm1311, %v1295, %v1318
        %v1320 = vsel %vm748, %v1307, %v1308
        %v1321 = vsel %vm1311, %v1297, %v1320
        %v1322 = vsel %vm748, %v1308, %v1309
        %v1323 = vsel %vm1311, %v1299, %v1322
        %v1324 = vsel %vm1311, %v1301, %v1309
        %1333 = vst [vmem:[#allocation2 + $0xa8] sm:$0xff] %v1312
        %1334 = vst [vmem:[#allocation2 + $0xb0] sm:$0xff] %v1314
        %1335 = vst [vmem:[#allocation2 + $0xb8] sm:$0xff] %v1316
        %1336 = vst [vmem:[#allocation2 + $0xc0] sm:$0xf] %v1317
        %1337 = vst [vmem:[#allocation2 + $0xc4] sm:$0xff] %v1319
        %1338 = vst [vmem:[#allocation2 + $0xcc] sm:$0xff] %v1321
        %1339 = vst [vmem:[#allocation2 + $0xd4] sm:$0xff] %v1323
        %1340 = vst [vmem:[#allocation2 + $0xdc] sm:$0xf] %v1324
        %v1341 = vld [vmem:[%s227] sm:$0xff]
        %v1342 = vld [vmem:[%s227 + $0x8] sm:$0xff]
        %v1343 = vld [vmem:[%s227 + $0x2] sm:$0xff]
        %v1344 = vld [vmem:[%s227 + $0xa] sm:$0xff]
        %1346 = vst [vmem:[#allocation1] ss:$4 sm:$0xff] %v1341
        %s1348 = scalar_lea.vmem [#allocation1], 32
        %1349 = vst [vmem:[%s1348] ss:$4 sm:$0xff] %v1342
        %v1350 = vld.sshfl [vmem:[#allocation1] sm:$0xff pattern:$0x73625140]
        %v1351 = vld.sshfl [vmem:[#allocation1 + $0x8] sm:$0xff pattern:$0x73625140]
        %v1352 = vld.sshfl [vmem:[#allocation1 + $0x10] sm:$0xff pattern:$0x73625140]
        %v1353 = vld.sshfl [vmem:[#allocation1 + $0x18] sm:$0xff pattern:$0x73625140]
        %v1354 = vld.sshfl [vmem:[#allocation1 + $0x20] sm:$0xff pattern:$0x73625140]
        %v1355 = vld.sshfl [vmem:[#allocation1 + $0x28] sm:$0xff pattern:$0x73625140]
        %v1356 = vld.sshfl [vmem:[#allocation1 + $0x30] sm:$0xff pattern:$0x73625140]
        %v1357 = vld.sshfl [vmem:[#allocation1 + $0x38] sm:$0xff pattern:$0x73625140]
        %s1358 = scalar_lea.vmem [#allocation1], 1
        %1359 = vst [vmem:[%s1358] ss:$4 sm:$0xff] %v1341
        %s1360 = scalar_lea.vmem [#allocation1], 33
        %1361 = vst [vmem:[%s1360] ss:$4 sm:$0xff] %v1342
        %v1362 = vld.sshfl [vmem:[#allocation1] sm:$0xff pattern:$0x73625140]
        %v1364 = vld.sshfl [vmem:[#allocation1 + $0x8] sm:$0xff pattern:$0x73625140]
        %v1366 = vld.sshfl [vmem:[#allocation1 + $0x10] sm:$0xff pattern:$0x73625140]
        %v1368 = vld.sshfl [vmem:[#allocation1 + $0x18] sm:$0xff pattern:$0x73625140]
        %v1370 = vld.sshfl [vmem:[#allocation1 + $0x20] sm:$0xff pattern:$0x73625140]
        %v1372 = vld.sshfl [vmem:[#allocation1 + $0x28] sm:$0xff pattern:$0x73625140]
        %v1374 = vld.sshfl [vmem:[#allocation1 + $0x30] sm:$0xff pattern:$0x73625140]
        %v1376 = vld.sshfl [vmem:[#allocation1 + $0x38] sm:$0xff pattern:$0x73625140]
        %1378 = vrot.lane.b32.xlu0 %v1362, 127
        %v1379 = vpop.permute.xlu0 %1378
        %1380 = vrot.lane.b32.xlu0 %v1364, 127
        %v1381 = vpop.permute.xlu0 %1380
        %1382 = vrot.lane.b32.xlu0 %v1366, 127
        %v1383 = vpop.permute.xlu0 %1382
        %1384 = vrot.lane.b32.xlu0 %v1368, 127
        %v1385 = vpop.permute.xlu0 %1384
        %1386 = vrot.lane.b32.xlu0 %v1370, 127
        %v1387 = vpop.permute.xlu0 %1386
        %1388 = vrot.lane.b32.xlu0 %v1372, 127
        %v1389 = vpop.permute.xlu0 %1388
        %1390 = vrot.lane.b32.xlu0 %v1374, 127
        %v1391 = vpop.permute.xlu0 %1390
        %1392 = vrot.lane.b32.xlu0 %v1376, 127
        %v1393 = vpop.permute.xlu0 %1392
        %v1394 = vsel %vm313, %v1379, %v1381
        %v1395 = vsel %vm313, %v1381, %v1383
        %v1396 = vsel %vm313, %v1383, %v1385
        %v1397 = vsel %vm313, %v1385, %v1387
        %v1398 = vsel %vm313, %v1387, %v1389
        %v1399 = vsel %vm313, %v1389, %v1391
        %v1400 = vsel %vm313, %v1391, %v1393
        %s1402 = scalar_lea.vmem [#allocation1], 2
        %1403 = vst [vmem:[%s1402] ss:$4 sm:$0xff] %v1343
        %s1405 = scalar_lea.vmem [#allocation1], 34
        %1406 = vst [vmem:[%s1405] ss:$4 sm:$0xff] %v1344
        %v1407 = vld.sshfl [vmem:[#allocation1] sm:$0xff pattern:$0x73625140]
        %v1409 = vld.sshfl [vmem:[#allocation1 + $0x8] sm:$0xff pattern:$0x73625140]
        %v1411 = vld.sshfl [vmem:[#allocation1 + $0x10] sm:$0xff pattern:$0x73625140]
        %v1413 = vld.sshfl [vmem:[#allocation1 + $0x18] sm:$0xff pattern:$0x73625140]
        %v1415 = vld.sshfl [vmem:[#allocation1 + $0x20] sm:$0xff pattern:$0x73625140]
        %v1417 = vld.sshfl [vmem:[#allocation1 + $0x28] sm:$0xff pattern:$0x73625140]
        %v1419 = vld.sshfl [vmem:[#allocation1 + $0x30] sm:$0xff pattern:$0x73625140]
        %v1421 = vld.sshfl [vmem:[#allocation1 + $0x38] sm:$0xff pattern:$0x73625140]
        %1423 = vrot.lane.b32.xlu0 %v1407, 49
        %v1424 = vpop.permute.xlu0 %1423
        %1425 = vrot.lane.b32.xlu0 %v1409, 49
        %v1426 = vpop.permute.xlu0 %1425
        %1427 = vrot.lane.b32.xlu0 %v1411, 49
        %v1428 = vpop.permute.xlu0 %1427
        %1429 = vrot.lane.b32.xlu0 %v1413, 49
        %v1430 = vpop.permute.xlu0 %1429
        %1431 = vrot.lane.b32.xlu0 %v1415, 49
        %v1432 = vpop.permute.xlu0 %1431
        %1433 = vrot.lane.b32.xlu0 %v1417, 49
        %v1434 = vpop.permute.xlu0 %1433
        %1435 = vrot.lane.b32.xlu0 %v1419, 49
        %v1436 = vpop.permute.xlu0 %1435
        %1437 = vrot.lane.b32.xlu0 %v1421, 49
        %v1438 = vpop.permute.xlu0 %1437
        %v1439 = vsel %vm875, %v1424, %v1426
        %v1440 = vsel %vm875, %v1426, %v1428
        %v1441 = vsel %vm875, %v1428, %v1430
        %v1442 = vsel %vm875, %v1430, %v1432
        %v1443 = vsel %vm875, %v1432, %v1434
        %v1444 = vsel %vm875, %v1434, %v1436
        %v1445 = vsel %vm875, %v1436, %v1438
        %s1446 = scalar_lea.vmem [#allocation1], 3
        %1447 = vst [vmem:[%s1446] ss:$4 sm:$0xff] %v1343
        %s1448 = scalar_lea.vmem [#allocation1], 35
        %1449 = vst [vmem:[%s1448] ss:$4 sm:$0xff] %v1344
        %v1450 = vld.sshfl [vmem:[#allocation1] sm:$0xff pattern:$0x73625140]
        %v1452 = vld.sshfl [vmem:[#allocation1 + $0x8] sm:$0xff pattern:$0x73625140]
        %v1454 = vld.sshfl [vmem:[#allocation1 + $0x10] sm:$0xff pattern:$0x73625140]
        %v1456 = vld.sshfl [vmem:[#allocation1 + $0x18] sm:$0xff pattern:$0x73625140]
        %v1458 = vld.sshfl [vmem:[#allocation1 + $0x20] sm:$0xff pattern:$0x73625140]
        %v1460 = vld.sshfl [vmem:[#allocation1 + $0x28] sm:$0xff pattern:$0x73625140]
        %v1462 = vld.sshfl [vmem:[#allocation1 + $0x30] sm:$0xff pattern:$0x73625140]
        %v1464 = vld.sshfl [vmem:[#allocation1 + $0x38] sm:$0xff pattern:$0x73625140]
        %1466 = vrot.lane.b32.xlu0 %v1450, 48
        %v1467 = vpop.permute.xlu0 %1466
        %1468 = vrot.lane.b32.xlu0 %v1452, 48
        %v1469 = vpop.permute.xlu0 %1468
        %1470 = vrot.lane.b32.xlu0 %v1454, 48
        %v1471 = vpop.permute.xlu0 %1470
        %1472 = vrot.lane.b32.xlu0 %v1456, 48
        %v1473 = vpop.permute.xlu0 %1472
        %1474 = vrot.lane.b32.xlu0 %v1458, 48
        %v1475 = vpop.permute.xlu0 %1474
        %1476 = vrot.lane.b32.xlu0 %v1460, 48
        %v1477 = vpop.permute.xlu0 %1476
        %1478 = vrot.lane.b32.xlu0 %v1462, 48
        %v1479 = vpop.permute.xlu0 %1478
        %1480 = vrot.lane.b32.xlu0 %v1464, 48
        %v1481 = vpop.permute.xlu0 %1480
        %v1482 = vsel %vm919, %v1467, %v1469
        %v1483 = vsel %vm919, %v1469, %v1471
        %v1484 = vsel %vm919, %v1471, %v1473
        %v1485 = vsel %vm919, %v1473, %v1475
        %v1486 = vsel %vm919, %v1475, %v1477
        %v1487 = vsel %vm919, %v1477, %v1479
        %v1488 = vsel %vm919, %v1479, %v1481
        %v1490 = vsel %vm409, %v1350, %v1394
        %v1492 = vsel %vm409, %v1351, %v1395
        %v1494 = vsel %vm409, %v1352, %v1396
        %v1496 = vsel %vm409, %v1353, %v1397
        %v1498 = vsel %vm409, %v1354, %v1398
        %v1500 = vsel %vm409, %v1355, %v1399
        %v1502 = vsel %vm409, %v1356, %v1400
        %v1504 = vsel %vm409, %v1357, %v1393
        %v1506 = vsel %vm424, %v1490, %v1424
        %v1508 = vsel %vm424, %v1492, %v1439
        %v1510 = vsel %vm424, %v1494, %v1440
        %v1512 = vsel %vm424, %v1496, %v1441
        %v1514 = vsel %vm424, %v1498, %v1442
        %v1516 = vsel %vm424, %v1500, %v1443
        %v1518 = vsel %vm424, %v1502, %v1444
        %v1520 = vsel %vm424, %v1504, %v1445
        %v1522 = vsel %vm439, %v1506, %v1467
        %v1524 = vsel %vm439, %v1508, %v1482
        %v1526 = vsel %vm439, %v1510, %v1483
        %v1528 = vsel %vm439, %v1512, %v1484
        %v1530 = vsel %vm439, %v1514, %v1485
        %v1532 = vsel %vm439, %v1516, %v1486
        %v1534 = vsel %vm439, %v1518, %v1487
        %v1536 = vsel %vm439, %v1520, %v1488
        %v1545 = vunpack.c.l.b16 %v1522
        %v1546 = vunpack.c.l.b16 %v1524
        %v1547 = vunpack.c.l.b16 %v1526
        %v1548 = vunpack.c.l.b16 %v1528
        %v1549 = vunpack.c.l.b16 %v1530
        %v1550 = vunpack.c.l.b16 %v1532
        %v1551 = vunpack.c.l.b16 %v1534
        %v1552 = vunpack.c.l.b16 %v1536
        %v1553 = vunpack.c.h.b16 %v1522
        %v1554 = vunpack.c.h.b16 %v1524
        %v1555 = vunpack.c.h.b16 %v1526
        %v1556 = vunpack.c.h.b16 %v1528
        %v1557 = vunpack.c.h.b16 %v1530
        %v1558 = vunpack.c.h.b16 %v1532
        %v1559 = vunpack.c.h.b16 %v1534
        %v1560 = vunpack.c.h.b16 %v1536
        %v1561 = vpack.c.b16 %v1546, %v1545
        %v1562 = vpack.c.b16 %v1548, %v1547
        %v1563 = vpack.c.b16 %v1550, %v1549
        %v1564 = vpack.c.b16 %v1552, %v1551
        %v1565 = vpack.c.b16 %v1554, %v1553
        %v1566 = vpack.c.b16 %v1556, %v1555
        %v1567 = vpack.c.b16 %v1558, %v1557
        %v1568 = vpack.c.b16 %v1560, %v1559
        %1569 = vrot.lane.b32.xlu0 %v1561, 7
        %v1570 = vpop.permute.xlu0 %1569
        %1571 = vrot.lane.b32.xlu0 %v1562, 7
        %v1572 = vpop.permute.xlu0 %1571
        %1573 = vrot.lane.b32.xlu0 %v1563, 7
        %v1574 = vpop.permute.xlu0 %1573
        %1575 = vrot.lane.b32.xlu0 %v1564, 7
        %v1576 = vpop.permute.xlu0 %1575
        %1577 = vrot.lane.b32.xlu0 %v1565, 7
        %v1578 = vpop.permute.xlu0 %1577
        %1579 = vrot.lane.b32.xlu0 %v1566, 7
        %v1580 = vpop.permute.xlu0 %1579
        %1581 = vrot.lane.b32.xlu0 %v1567, 7
        %v1582 = vpop.permute.xlu0 %1581
        %1583 = vrot.lane.b32.xlu0 %v1568, 7
        %v1584 = vpop.permute.xlu0 %1583
        %v1585 = vrot.slane %v1570, 4
        %v1586 = vrot.slane %v1572, 4
        %v1587 = vrot.slane %v1574, 4
        %v1588 = vrot.slane %v1576, 4
        %v1589 = vrot.slane %v1578, 4
        %v1590 = vrot.slane %v1580, 4
        %v1591 = vrot.slane %v1582, 4
        %v1592 = vrot.slane %v1584, 4
        %v1593 = vsel %vm748, %v1585, %v1586
        %vm1594 = vcmask 56320
        %v1595 = vsel %vm1594, %v1570, %v1593
        %v1596 = vsel %vm748, %v1586, %v1587
        %v1597 = vsel %vm1594, %v1572, %v1596
        %v1598 = vsel %vm748, %v1587, %v1588
        %v1599 = vsel %vm1594, %v1574, %v1598
        %v1600 = vsel %vm1594, %v1576, %v1588
        %v1601 = vsel %vm748, %v1589, %v1590
        %v1602 = vsel %vm1594, %v1578, %v1601
        %v1603 = vsel %vm748, %v1590, %v1591
        %v1604 = vsel %vm1594, %v1580, %v1603
        %v1605 = vsel %vm748, %v1591, %v1592
        %v1606 = vsel %vm1594, %v1582, %v1605
        %v1607 = vsel %vm1594, %v1584, %v1592
        %1616 = vst [vmem:[#allocation2 + $0xe0] sm:$0xff] %v1595
        %1617 = vst [vmem:[#allocation2 + $0xe8] sm:$0xff] %v1597
        %1618 = vst [vmem:[#allocation2 + $0xf0] sm:$0xff] %v1599
        %1619 = vst [vmem:[#allocation2 + $0xf8] sm:$0xf] %v1600
        %1620 = vst [vmem:[#allocation2 + $0xfc] sm:$0xff] %v1602
        %1621 = vst [vmem:[#allocation2 + $0x104] sm:$0xff] %v1604
        %1622 = vst [vmem:[#allocation2 + $0x10c] sm:$0xff] %v1606
        %1623 = vst [vmem:[#allocation2 + $0x114] sm:$0xf] %v1607
        %v1624 = vld [vmem:[%s227 + $0x2] sm:$0xff]
        %v1625 = vld [vmem:[%s227 + $0xa] sm:$0xff]
        %1627 = vst [vmem:[#allocation1] ss:$4 sm:$0xff] %v1624
        %s1629 = scalar_lea.vmem [#allocation1], 32
        %1630 = vst [vmem:[%s1629] ss:$4 sm:$0xff] %v1625
        %v1631 = vld.sshfl [vmem:[#allocation1] sm:$0xff pattern:$0x73625140]
        %v1632 = vld.sshfl [vmem:[#allocation1 + $0x8] sm:$0xff pattern:$0x73625140]
        %v1633 = vld.sshfl [vmem:[#allocation1 + $0x10] sm:$0xff pattern:$0x73625140]
        %v1634 = vld.sshfl [vmem:[#allocation1 + $0x18] sm:$0xff pattern:$0x73625140]
        %v1635 = vld.sshfl [vmem:[#allocation1 + $0x20] sm:$0xff pattern:$0x73625140]
        %v1636 = vld.sshfl [vmem:[#allocation1 + $0x28] sm:$0xff pattern:$0x73625140]
        %v1637 = vld.sshfl [vmem:[#allocation1 + $0x30] sm:$0xff pattern:$0x73625140]
        %v1638 = vld.sshfl [vmem:[#allocation1 + $0x38] sm:$0xff pattern:$0x73625140]
        %s1639 = scalar_lea.vmem [#allocation1], 1
        %1640 = vst [vmem:[%s1639] ss:$4 sm:$0xff] %v1624
        %s1641 = scalar_lea.vmem [#allocation1], 33
        %1642 = vst [vmem:[%s1641] ss:$4 sm:$0xff] %v1625
        %v1643 = vld.sshfl [vmem:[#allocation1] sm:$0xff pattern:$0x73625140]
        %v1645 = vld.sshfl [vmem:[#allocation1 + $0x8] sm:$0xff pattern:$0x73625140]
        %v1647 = vld.sshfl [vmem:[#allocation1 + $0x10] sm:$0xff pattern:$0x73625140]
        %v1649 = vld.sshfl [vmem:[#allocation1 + $0x18] sm:$0xff pattern:$0x73625140]
        %v1651 = vld.sshfl [vmem:[#allocation1 + $0x20] sm:$0xff pattern:$0x73625140]
        %v1653 = vld.sshfl [vmem:[#allocation1 + $0x28] sm:$0xff pattern:$0x73625140]
        %v1655 = vld.sshfl [vmem:[#allocation1 + $0x30] sm:$0xff pattern:$0x73625140]
        %v1657 = vld.sshfl [vmem:[#allocation1 + $0x38] sm:$0xff pattern:$0x73625140]
        %1659 = vrot.lane.b32.xlu0 %v1643, 120
        %v1660 = vpop.permute.xlu0 %1659
        %1661 = vrot.lane.b32.xlu0 %v1645, 120
        %v1662 = vpop.permute.xlu0 %1661
        %1663 = vrot.lane.b32.xlu0 %v1647, 120
        %v1664 = vpop.permute.xlu0 %1663
        %1665 = vrot.lane.b32.xlu0 %v1649, 120
        %v1666 = vpop.permute.xlu0 %1665
        %1667 = vrot.lane.b32.xlu0 %v1651, 120
        %v1668 = vpop.permute.xlu0 %1667
        %1669 = vrot.lane.b32.xlu0 %v1653, 120
        %v1670 = vpop.permute.xlu0 %1669
        %1671 = vrot.lane.b32.xlu0 %v1655, 120
        %v1672 = vpop.permute.xlu0 %1671
        %1673 = vrot.lane.b32.xlu0 %v1657, 120
        %v1674 = vpop.permute.xlu0 %1673
        %vm1675 = vcmask 982016
        %v1676 = vsel %vm1675, %v1660, %v1662
        %v1677 = vsel %vm1675, %v1662, %v1664
        %v1678 = vsel %vm1675, %v1664, %v1666
        %v1679 = vsel %vm1675, %v1666, %v1668
        %v1680 = vsel %vm1675, %v1668, %v1670
        %v1681 = vsel %vm1675, %v1670, %v1672
        %v1682 = vsel %vm1675, %v1672, %v1674
        %s1683 = scalar_lea.vmem [#allocation1], 2
        %1684 = vst [vmem:[%s1683] ss:$4 sm:$0xff] %v1624
        %s1685 = scalar_lea.vmem [#allocation1], 34
        %1686 = vst [vmem:[%s1685] ss:$4 sm:$0xff] %v1625
        %v1687 = vld.sshfl [vmem:[#allocation1] sm:$0xff pattern:$0x73625140]
        %v1689 = vld.sshfl [vmem:[#allocation1 + $0x8] sm:$0xff pattern:$0x73625140]
        %v1691 = vld.sshfl [vmem:[#allocation1 + $0x10] sm:$0xff pattern:$0x73625140]
        %v1693 = vld.sshfl [vmem:[#allocation1 + $0x18] sm:$0xff pattern:$0x73625140]
        %v1695 = vld.sshfl [vmem:[#allocation1 + $0x20] sm:$0xff pattern:$0x73625140]
        %v1697 = vld.sshfl [vmem:[#allocation1 + $0x28] sm:$0xff pattern:$0x73625140]
        %v1699 = vld.sshfl [vmem:[#allocation1 + $0x30] sm:$0xff pattern:$0x73625140]
        %v1701 = vld.sshfl [vmem:[#allocation1 + $0x38] sm:$0xff pattern:$0x73625140]
        %1703 = vrot.lane.b32.xlu0 %v1687, 119
        %v1704 = vpop.permute.xlu0 %1703
        %1705 = vrot.lane.b32.xlu0 %v1689, 119
        %v1706 = vpop.permute.xlu0 %1705
        %1707 = vrot.lane.b32.xlu0 %v1691, 119
        %v1708 = vpop.permute.xlu0 %1707
        %1709 = vrot.lane.b32.xlu0 %v1693, 119
        %v1710 = vpop.permute.xlu0 %1709
        %1711 = vrot.lane.b32.xlu0 %v1695, 119
        %v1712 = vpop.permute.xlu0 %1711
        %1713 = vrot.lane.b32.xlu0 %v1697, 119
        %v1714 = vpop.permute.xlu0 %1713
        %1715 = vrot.lane.b32.xlu0 %v1699, 119
        %v1716 = vpop.permute.xlu0 %1715
        %1717 = vrot.lane.b32.xlu0 %v1701, 119
        %v1718 = vpop.permute.xlu0 %1717
        %v1719 = vsel %vm593, %v1704, %v1706
        %v1720 = vsel %vm593, %v1706, %v1708
        %v1721 = vsel %vm593, %v1708, %v1710
        %v1722 = vsel %vm593, %v1710, %v1712
        %v1723 = vsel %vm593, %v1712, %v1714
        %v1724 = vsel %vm593, %v1714, %v1716
        %v1725 = vsel %vm593, %v1716, %v1718
        %s1726 = scalar_lea.vmem [#allocation1], 3
        %1727 = vst [vmem:[%s1726] ss:$4 sm:$0xff] %v1624
        %s1728 = scalar_lea.vmem [#allocation1], 35
        %1729 = vst [vmem:[%s1728] ss:$4 sm:$0xff] %v1625
        %v1730 = vld.sshfl [vmem:[#allocation1] sm:$0xff pattern:$0x73625140]
        %v1732 = vld.sshfl [vmem:[#allocation1 + $0x8] sm:$0xff pattern:$0x73625140]
        %v1734 = vld.sshfl [vmem:[#allocation1 + $0x10] sm:$0xff pattern:$0x73625140]
        %v1736 = vld.sshfl [vmem:[#allocation1 + $0x18] sm:$0xff pattern:$0x73625140]
        %v1738 = vld.sshfl [vmem:[#allocation1 + $0x20] sm:$0xff pattern:$0x73625140]
        %v1740 = vld.sshfl [vmem:[#allocation1 + $0x28] sm:$0xff pattern:$0x73625140]
        %v1742 = vld.sshfl [vmem:[#allocation1 + $0x30] sm:$0xff pattern:$0x73625140]
        %v1744 = vld.sshfl [vmem:[#allocation1 + $0x38] sm:$0xff pattern:$0x73625140]
        %1746 = vrot.lane.b32.xlu0 %v1730, 118
        %v1747 = vpop.permute.xlu0 %1746
        %1748 = vrot.lane.b32.xlu0 %v1732, 118
        %v1749 = vpop.permute.xlu0 %1748
        %1750 = vrot.lane.b32.xlu0 %v1734, 118
        %v1751 = vpop.permute.xlu0 %1750
        %1752 = vrot.lane.b32.xlu0 %v1736, 118
        %v1753 = vpop.permute.xlu0 %1752
        %1754 = vrot.lane.b32.xlu0 %v1738, 118
        %v1755 = vpop.permute.xlu0 %1754
        %1756 = vrot.lane.b32.xlu0 %v1740, 118
        %v1757 = vpop.permute.xlu0 %1756
        %1758 = vrot.lane.b32.xlu0 %v1742, 118
        %v1759 = vpop.permute.xlu0 %1758
        %1760 = vrot.lane.b32.xlu0 %v1744, 118
        %v1761 = vpop.permute.xlu0 %1760
        %v1762 = vsel %vm401, %v1747, %v1749
        %v1763 = vsel %vm401, %v1749, %v1751
        %v1764 = vsel %vm401, %v1751, %v1753
        %v1765 = vsel %vm401, %v1753, %v1755
        %v1766 = vsel %vm401, %v1755, %v1757
        %v1767 = vsel %vm401, %v1757, %v1759
        %v1768 = vsel %vm401, %v1759, %v1761
        %v1770 = vsel %vm409, %v1631, %v1676
        %v1772 = vsel %vm409, %v1632, %v1677
        %v1774 = vsel %vm409, %v1633, %v1678
        %v1776 = vsel %vm409, %v1634, %v1679
        %v1778 = vsel %vm409, %v1635, %v1680
        %v1780 = vsel %vm409, %v1636, %v1681
        %v1782 = vsel %vm409, %v1637, %v1682
        %v1784 = vsel %vm409, %v1638, %v1674
        %v1786 = vsel %vm424, %v1770, %v1719
        %v1788 = vsel %vm424, %v1772, %v1720
        %v1790 = vsel %vm424, %v1774, %v1721
        %v1792 = vsel %vm424, %v1776, %v1722
        %v1794 = vsel %vm424, %v1778, %v1723
        %v1796 = vsel %vm424, %v1780, %v1724
        %v1798 = vsel %vm424, %v1782, %v1725
        %v1800 = vsel %vm424, %v1784, %v1718
        %v1802 = vsel %vm439, %v1786, %v1762
        %v1804 = vsel %vm439, %v1788, %v1763
        %v1806 = vsel %vm439, %v1790, %v1764
        %v1808 = vsel %vm439, %v1792, %v1765
        %v1810 = vsel %vm439, %v1794, %v1766
        %v1812 = vsel %vm439, %v1796, %v1767
        %v1814 = vsel %vm439, %v1798, %v1768
        %v1816 = vsel %vm439, %v1800, %v1761
        %v1825 = vunpack.c.l.b16 %v1802
        %v1826 = vunpack.c.l.b16 %v1804
        %v1827 = vunpack.c.l.b16 %v1806
        %v1828 = vunpack.c.l.b16 %v1808
        %v1829 = vunpack.c.l.b16 %v1810
        %v1830 = vunpack.c.l.b16 %v1812
        %v1831 = vunpack.c.l.b16 %v1814
        %v1832 = vunpack.c.l.b16 %v1816
        %v1833 = vunpack.c.h.b16 %v1802
        %v1834 = vunpack.c.h.b16 %v1804
        %v1835 = vunpack.c.h.b16 %v1806
        %v1836 = vunpack.c.h.b16 %v1808
        %v1837 = vunpack.c.h.b16 %v1810
        %v1838 = vunpack.c.h.b16 %v1812
        %v1839 = vunpack.c.h.b16 %v1814
        %v1840 = vunpack.c.h.b16 %v1816
        %v1841 = vpack.c.b16 %v1826, %v1825
        %v1842 = vpack.c.b16 %v1828, %v1827
        %v1843 = vpack.c.b16 %v1830, %v1829
        %v1844 = vpack.c.b16 %v1832, %v1831
        %v1845 = vpack.c.b16 %v1834, %v1833
        %v1846 = vpack.c.b16 %v1836, %v1835
        %v1847 = vpack.c.b16 %v1838, %v1837
        %v1848 = vpack.c.b16 %v1840, %v1839
        %1849 = vrot.lane.b32.xlu0 %v1841, 54
        %v1850 = vpop.permute.xlu0 %1849
        %1851 = vrot.lane.b32.xlu0 %v1842, 54
        %v1852 = vpop.permute.xlu0 %1851
        %1853 = vrot.lane.b32.xlu0 %v1843, 54
        %v1854 = vpop.permute.xlu0 %1853
        %1855 = vrot.lane.b32.xlu0 %v1844, 54
        %v1856 = vpop.permute.xlu0 %1855
        %1857 = vrot.lane.b32.xlu0 %v1845, 54
        %v1858 = vpop.permute.xlu0 %1857
        %1859 = vrot.lane.b32.xlu0 %v1846, 54
        %v1860 = vpop.permute.xlu0 %1859
        %1861 = vrot.lane.b32.xlu0 %v1847, 54
        %v1862 = vpop.permute.xlu0 %1861
        %1863 = vrot.lane.b32.xlu0 %v1848, 54
        %v1864 = vpop.permute.xlu0 %1863
        %v1865 = vrot.slane %v1850, 4
        %v1866 = vrot.slane %v1852, 4
        %v1867 = vrot.slane %v1854, 4
        %v1868 = vrot.slane %v1856, 4
        %v1869 = vrot.slane %v1858, 4
        %v1870 = vrot.slane %v1860, 4
        %v1871 = vrot.slane %v1862, 4
        %v1872 = vrot.slane %v1864, 4
        %v1873 = vsel %vm748, %v1865, %v1866
        %vm1874 = vcmask 441344
        %v1875 = vsel %vm1874, %v1850, %v1873
        %v1876 = vsel %vm748, %v1866, %v1867
        %v1877 = vsel %vm1874, %v1852, %v1876
        %v1878 = vsel %vm748, %v1867, %v1868
        %v1879 = vsel %vm1874, %v1854, %v1878
        %v1880 = vsel %vm1874, %v1856, %v1868
        %v1881 = vsel %vm748, %v1869, %v1870
        %v1882 = vsel %vm1874, %v1858, %v1881
        %v1883 = vsel %vm748, %v1870, %v1871
        %v1884 = vsel %vm1874, %v1860, %v1883
        %v1885 = vsel %vm748, %v1871, %v1872
        %v1886 = vsel %vm1874, %v1862, %v1885
        %v1887 = vsel %vm1874, %v1864, %v1872
        %1896 = vst [vmem:[#allocation2 + $0x118] sm:$0xff] %v1875
        %1897 = vst [vmem:[#allocation2 + $0x120] sm:$0xff] %v1877
        %1898 = vst [vmem:[#allocation2 + $0x128] sm:$0xff] %v1879
        %1899 = vst [vmem:[#allocation2 + $0x130] sm:$0xf] %v1880
        %1900 = vst [vmem:[#allocation2 + $0x134] sm:$0xff] %v1882
        %1901 = vst [vmem:[#allocation2 + $0x13c] sm:$0xff] %v1884
        %1902 = vst [vmem:[#allocation2 + $0x144] sm:$0xff] %v1886
        %1903 = vst [vmem:[#allocation2 + $0x14c] sm:$0xf] %v1887
        %v1904 = vld [vmem:[%s227 + $0x2] sm:$0xff]
        %v1905 = vld [vmem:[%s227 + $0xa] sm:$0xff]
        %1907 = vst [vmem:[#allocation1] ss:$4 sm:$0xff] %v1904
        %s1909 = scalar_lea.vmem [#allocation1], 32
        %1910 = vst [vmem:[%s1909] ss:$4 sm:$0xff] %v1905
        %v1911 = vld.sshfl [vmem:[#allocation1] sm:$0xff pattern:$0x73625140]
        %v1912 = vld.sshfl [vmem:[#allocation1 + $0x8] sm:$0xff pattern:$0x73625140]
        %v1913 = vld.sshfl [vmem:[#allocation1 + $0x10] sm:$0xff pattern:$0x73625140]
        %v1914 = vld.sshfl [vmem:[#allocation1 + $0x18] sm:$0xff pattern:$0x73625140]
        %v1915 = vld.sshfl [vmem:[#allocation1 + $0x20] sm:$0xff pattern:$0x73625140]
        %v1916 = vld.sshfl [vmem:[#allocation1 + $0x28] sm:$0xff pattern:$0x73625140]
        %v1917 = vld.sshfl [vmem:[#allocation1 + $0x30] sm:$0xff pattern:$0x73625140]
        %v1918 = vld.sshfl [vmem:[#allocation1 + $0x38] sm:$0xff pattern:$0x73625140]
        %s1919 = scalar_lea.vmem [#allocation1], 1
        %1920 = vst [vmem:[%s1919] ss:$4 sm:$0xff] %v1904
        %s1921 = scalar_lea.vmem [#allocation1], 33
        %1922 = vst [vmem:[%s1921] ss:$4 sm:$0xff] %v1905
        %v1923 = vld.sshfl [vmem:[#allocation1] sm:$0xff pattern:$0x73625140]
        %v1925 = vld.sshfl [vmem:[#allocation1 + $0x8] sm:$0xff pattern:$0x73625140]
        %v1927 = vld.sshfl [vmem:[#allocation1 + $0x10] sm:$0xff pattern:$0x73625140]
        %v1929 = vld.sshfl [vmem:[#allocation1 + $0x18] sm:$0xff pattern:$0x73625140]
        %v1931 = vld.sshfl [vmem:[#allocation1 + $0x20] sm:$0xff pattern:$0x73625140]
        %v1933 = vld.sshfl [vmem:[#allocation1 + $0x28] sm:$0xff pattern:$0x73625140]
        %v1935 = vld.sshfl [vmem:[#allocation1 + $0x30] sm:$0xff pattern:$0x73625140]
        %v1937 = vld.sshfl [vmem:[#allocation1 + $0x38] sm:$0xff pattern:$0x73625140]
        %1939 = vrot.lane.b32.xlu0 %v1923, 127
        %v1940 = vpop.permute.xlu0 %1939
        %1941 = vrot.lane.b32.xlu0 %v1925, 127
        %v1942 = vpop.permute.xlu0 %1941
        %1943 = vrot.lane.b32.xlu0 %v1927, 127
        %v1944 = vpop.permute.xlu0 %1943
        %1945 = vrot.lane.b32.xlu0 %v1929, 127
        %v1946 = vpop.permute.xlu0 %1945
        %1947 = vrot.lane.b32.xlu0 %v1931, 127
        %v1948 = vpop.permute.xlu0 %1947
        %1949 = vrot.lane.b32.xlu0 %v1933, 127
        %v1950 = vpop.permute.xlu0 %1949
        %1951 = vrot.lane.b32.xlu0 %v1935, 127
        %v1952 = vpop.permute.xlu0 %1951
        %1953 = vrot.lane.b32.xlu0 %v1937, 127
        %v1954 = vpop.permute.xlu0 %1953
        %v1955 = vsel %vm313, %v1940, %v1942
        %v1956 = vsel %vm313, %v1942, %v1944
        %v1957 = vsel %vm313, %v1944, %v1946
        %v1958 = vsel %vm313, %v1946, %v1948
        %v1959 = vsel %vm313, %v1948, %v1950
        %v1960 = vsel %vm313, %v1950, %v1952
        %v1961 = vsel %vm313, %v1952, %v1954
        %s1962 = scalar_lea.vmem [#allocation1], 2
        %1963 = vst [vmem:[%s1962] ss:$4 sm:$0xff] %v1904
        %s1964 = scalar_lea.vmem [#allocation1], 34
        %1965 = vst [vmem:[%s1964] ss:$4 sm:$0xff] %v1905
        %v1966 = vld.sshfl [vmem:[#allocation1] sm:$0xff pattern:$0x73625140]
        %v1968 = vld.sshfl [vmem:[#allocation1 + $0x8] sm:$0xff pattern:$0x73625140]
        %v1970 = vld.sshfl [vmem:[#allocation1 + $0x10] sm:$0xff pattern:$0x73625140]
        %v1972 = vld.sshfl [vmem:[#allocation1 + $0x18] sm:$0xff pattern:$0x73625140]
        %v1974 = vld.sshfl [vmem:[#allocation1 + $0x20] sm:$0xff pattern:$0x73625140]
        %v1976 = vld.sshfl [vmem:[#allocation1 + $0x28] sm:$0xff pattern:$0x73625140]
        %v1978 = vld.sshfl [vmem:[#allocation1 + $0x30] sm:$0xff pattern:$0x73625140]
        %v1980 = vld.sshfl [vmem:[#allocation1 + $0x38] sm:$0xff pattern:$0x73625140]
        %1982 = vrot.lane.b32.xlu0 %v1966, 126
        %v1983 = vpop.permute.xlu0 %1982
        %1984 = vrot.lane.b32.xlu0 %v1968, 126
        %v1985 = vpop.permute.xlu0 %1984
        %1986 = vrot.lane.b32.xlu0 %v1970, 126
        %v1987 = vpop.permute.xlu0 %1986
        %1988 = vrot.lane.b32.xlu0 %v1972, 126
        %v1989 = vpop.permute.xlu0 %1988
        %1990 = vrot.lane.b32.xlu0 %v1974, 126
        %v1991 = vpop.permute.xlu0 %1990
        %1992 = vrot.lane.b32.xlu0 %v1976, 126
        %v1993 = vpop.permute.xlu0 %1992
        %1994 = vrot.lane.b32.xlu0 %v1978, 126
        %v1995 = vpop.permute.xlu0 %1994
        %1996 = vrot.lane.b32.xlu0 %v1980, 126
        %v1997 = vpop.permute.xlu0 %1996
        %v1998 = vsel %vm357, %v1983, %v1985
        %v1999 = vsel %vm357, %v1985, %v1987
        %v2000 = vsel %vm357, %v1987, %v1989
        %v2001 = vsel %vm357, %v1989, %v1991
        %v2002 = vsel %vm357, %v1991, %v1993
        %v2003 = vsel %vm357, %v1993, %v1995
        %v2004 = vsel %vm357, %v1995, %v1997
        %v2006 = vsel %vm409, %v1911, %v1955
        %v2008 = vsel %vm409, %v1912, %v1956
        %v2010 = vsel %vm409, %v1913, %v1957
        %v2012 = vsel %vm409, %v1914, %v1958
        %v2014 = vsel %vm409, %v1915, %v1959
        %v2016 = vsel %vm409, %v1916, %v1960
        %v2018 = vsel %vm409, %v1917, %v1961
        %v2020 = vsel %vm409, %v1918, %v1954
        %v2022 = vsel %vm424, %v2006, %v1998
        %v2024 = vsel %vm424, %v2008, %v1999
        %v2026 = vsel %vm424, %v2010, %v2000
        %v2028 = vsel %vm424, %v2012, %v2001
        %v2030 = vsel %vm424, %v2014, %v2002
        %v2032 = vsel %vm424, %v2016, %v2003
        %v2034 = vsel %vm424, %v2018, %v2004
        %v2036 = vsel %vm424, %v2020, %v1997
        %v2038 = vsel %vm439, %v2022, 0
        %v2039 = vsel %vm439, %v2024, 0
        %v2040 = vsel %vm439, %v2026, 0
        %v2041 = vsel %vm439, %v2028, 0
        %v2042 = vsel %vm439, %v2030, 0
        %v2043 = vsel %vm439, %v2032, 0
        %v2044 = vsel %vm439, %v2034, 0
        %v2045 = vsel %vm439, %v2036, 0
        %v2055 = vunpack.c.l.b16 %v2038
        %v2056 = vunpack.c.l.b16 %v2039
        %v2057 = vunpack.c.l.b16 %v2040
        %v2058 = vunpack.c.l.b16 %v2041
        %v2059 = vunpack.c.l.b16 %v2042
        %v2060 = vunpack.c.l.b16 %v2043
        %v2061 = vunpack.c.l.b16 %v2044
        %v2062 = vunpack.c.l.b16 %v2045
        %v2063 = vunpack.c.h.b16 %v2038
        %v2064 = vunpack.c.h.b16 %v2039
        %v2065 = vunpack.c.h.b16 %v2040
        %v2066 = vunpack.c.h.b16 %v2041
        %v2067 = vunpack.c.h.b16 %v2042
        %v2068 = vunpack.c.h.b16 %v2043
        %v2069 = vunpack.c.h.b16 %v2044
        %v2070 = vunpack.c.h.b16 %v2045
        %v2071 = vunpack.c.l.b16 0
        %v2072 = vunpack.c.h.b16 0
        %v2073 = vpack.c.b16 %v2056, %v2055
        %v2074 = vpack.c.b16 %v2058, %v2057
        %v2075 = vpack.c.b16 %v2060, %v2059
        %v2076 = vpack.c.b16 %v2062, %v2061
        %v2077 = vpack.c.b16 %v2064, %v2063
        %v2078 = vpack.c.b16 %v2066, %v2065
        %v2079 = vpack.c.b16 %v2068, %v2067
        %v2080 = vpack.c.b16 %v2070, %v2069
        %v2081 = vpack.c.b16 %v2071, %v2071
        %v2082 = vpack.c.b16 %v2072, %v2072
        %2083 = vrot.lane.b32.xlu0 %v2073, 36
        %v2084 = vpop.permute.xlu0 %2083
        %2085 = vrot.lane.b32.xlu0 %v2074, 36
        %v2086 = vpop.permute.xlu0 %2085
        %2087 = vrot.lane.b32.xlu0 %v2075, 36
        %v2088 = vpop.permute.xlu0 %2087
        %2089 = vrot.lane.b32.xlu0 %v2076, 36
        %v2090 = vpop.permute.xlu0 %2089
        %2091 = vrot.lane.b32.xlu0 %v2077, 36
        %v2092 = vpop.permute.xlu0 %2091
        %2093 = vrot.lane.b32.xlu0 %v2078, 36
        %v2094 = vpop.permute.xlu0 %2093
        %2095 = vrot.lane.b32.xlu0 %v2079, 36
        %v2096 = vpop.permute.xlu0 %2095
        %2097 = vrot.lane.b32.xlu0 %v2080, 36
        %v2098 = vpop.permute.xlu0 %2097
        %2099 = vrot.lane.b32.xlu0 %v2081, 36
        %v2100 = vpop.permute.xlu0 %2099
        %2101 = vrot.lane.b32.xlu0 %v2082, 36
        %v2102 = vpop.permute.xlu0 %2101
        %v2103 = vrot.slane %v2084, 4
        %v2104 = vrot.slane %v2086, 4
        %v2105 = vrot.slane %v2088, 4
        %v2106 = vrot.slane %v2090, 4
        %v2107 = vrot.slane %v2092, 4
        %v2108 = vrot.slane %v2094, 4
        %v2109 = vrot.slane %v2096, 4
        %v2110 = vrot.slane %v2098, 4
        %v2111 = vrot.slane %v2100, 4
        %v2112 = vrot.slane %v2102, 4
        %v2113 = vsel %vm748, %v2103, %v2104
        %vm2114 = vcmask 293888
        %v2115 = vsel %vm2114, %v2084, %v2113
        %v2116 = vsel %vm748, %v2104, %v2105
        %v2117 = vsel %vm2114, %v2086, %v2116
        %v2118 = vsel %vm748, %v2105, %v2106
        %v2119 = vsel %vm2114, %v2088, %v2118
        %v2120 = vsel %vm2114, %v2090, %v2106
        %v2121 = vsel %vm748, %v2107, %v2108
        %v2122 = vsel %vm2114, %v2092, %v2121
        %v2123 = vsel %vm748, %v2108, %v2109
        %v2124 = vsel %vm2114, %v2094, %v2123
        %v2125 = vsel %vm748, %v2109, %v2110
        %v2126 = vsel %vm2114, %v2096, %v2125
        %v2127 = vsel %vm2114, %v2098, %v2110
        %v2128 = vsel %vm2114, %v2100, %v2111
        %v2129 = vsel %vm2114, %v2102, %v2112
        %2140 = vst [vmem:[#allocation2 + $0x150] sm:$0xff] %v2115
        %2141 = vst [vmem:[#allocation2 + $0x158] sm:$0xff] %v2117
        %2142 = vst [vmem:[#allocation2 + $0x160] sm:$0xff] %v2119
        %2143 = vst [vmem:[#allocation2 + $0x168] sm:$0xf] %v2120
        %2144 = vst [vmem:[#allocation2 + $0x16c] sm:$0xff] %v2122
        %2145 = vst [vmem:[#allocation2 + $0x174] sm:$0xff] %v2124
        %2146 = vst [vmem:[#allocation2 + $0x17c] sm:$0xff] %v2126
        %2147 = vst [vmem:[#allocation2 + $0x184] sm:$0xf] %v2127
        %2148 = vst [vmem:[#allocation2 + $0x188] sm:$0xff] %v2128
        %2149 = vst [vmem:[#allocation2 + $0x190] sm:$0xff] %v2128
        %2150 = vst [vmem:[#allocation2 + $0x198] sm:$0xff] %v2128
        %2151 = vst [vmem:[#allocation2 + $0x1a0] sm:$0xf] %v2128
        %2152 = vst [vmem:[#allocation2 + $0x1a4] sm:$0xff] %v2129
        %2153 = vst [vmem:[#allocation2 + $0x1ac] sm:$0xff] %v2129
        %2154 = vst [vmem:[#allocation2 + $0x1b4] sm:$0xff] %v2129
        %2155 = vst [vmem:[#allocation2 + $0x1bc] sm:$0xf] %v2129
        %v2156 = vld [vmem:[#allocation6] sm:$0xf]
        %v2157 = vld [vmem:[#allocation6 + $0x4] sm:$0xf]
        %v2158 = vld [vmem:[#allocation2] sm:$0xff]
        %v2159 = vld [vmem:[#allocation2 + $0x8] sm:$0xff]
        %v2160 = vld [vmem:[#allocation2 + $0x10] sm:$0xff]
        %v2161 = vld [vmem:[#allocation2 + $0x18] sm:$0xf]
        %v2162 = vld [vmem:[#allocation2 + $0x1c] sm:$0xff]
        %v2163 = vld [vmem:[#allocation2 + $0x24] sm:$0xff]
        %v2164 = vld [vmem:[#allocation2 + $0x2c] sm:$0xff]
        %v2165 = vld [vmem:[#allocation2 + $0x34] sm:$0xf]
        %v2166 = vld [vmem:[#allocation2 + $0x38] sm:$0xff]
        %v2167 = vld [vmem:[#allocation2 + $0x40] sm:$0xff]
        %v2168 = vld [vmem:[#allocation2 + $0x48] sm:$0xff]
        %v2169 = vld [vmem:[#allocation2 + $0x50] sm:$0xf]
        %v2170 = vld [vmem:[#allocation2 + $0x54] sm:$0xff]
        %v2171 = vld [vmem:[#allocation2 + $0x5c] sm:$0xff]
        %v2172 = vld [vmem:[#allocation2 + $0x64] sm:$0xff]
        %v2173 = vld [vmem:[#allocation2 + $0x6c] sm:$0xf]
        %v2174 = vld [vmem:[#allocation2 + $0x70] sm:$0xff]
        %v2175 = vld [vmem:[#allocation2 + $0x78] sm:$0xff]
        %v2176 = vld [vmem:[#allocation2 + $0x80] sm:$0xff]
        %v2177 = vld [vmem:[#allocation2 + $0x88] sm:$0xf]
        %v2178 = vld [vmem:[#allocation2 + $0x8c] sm:$0xff]
        %v2179 = vld [vmem:[#allocation2 + $0x94] sm:$0xff]
        %v2180 = vld [vmem:[#allocation2 + $0x9c] sm:$0xff]
        %v2181 = vld [vmem:[#allocation2 + $0xa4] sm:$0xf]
        %v2182 = vld [vmem:[#allocation2 + $0xa8] sm:$0xff]
        %v2183 = vld [vmem:[#allocation2 + $0xb0] sm:$0xff]
        %v2184 = vld [vmem:[#allocation2 + $0xb8] sm:$0xff]
        %v2185 = vld [vmem:[#allocation2 + $0xc0] sm:$0xf]
        %v2186 = vld [vmem:[#allocation2 + $0xc4] sm:$0xff]
        %v2187 = vld [vmem:[#allocation2 + $0xcc] sm:$0xff]
        %v2188 = vld [vmem:[#allocation2 + $0xd4] sm:$0xff]
        %v2189 = vld [vmem:[#allocation2 + $0xdc] sm:$0xf]
        %v2190 = vld [vmem:[#allocation2 + $0xe0] sm:$0xff]
        %v2191 = vld [vmem:[#allocation2 + $0xe8] sm:$0xff]
        %v2192 = vld [vmem:[#allocation2 + $0xf0] sm:$0xff]
        %v2193 = vld [vmem:[#allocation2 + $0xf8] sm:$0xf]
        %v2194 = vld [vmem:[#allocation2 + $0xfc] sm:$0xff]
        %v2195 = vld [vmem:[#allocation2 + $0x104] sm:$0xff]
        %v2196 = vld [vmem:[#allocation2 + $0x10c] sm:$0xff]
        %v2197 = vld [vmem:[#allocation2 + $0x114] sm:$0xf]
        %v2198 = vld [vmem:[#allocation2 + $0x118] sm:$0xff]
        %v2199 = vld [vmem:[#allocation2 + $0x120] sm:$0xff]
        %v2200 = vld [vmem:[#allocation2 + $0x128] sm:$0xff]
        %v2201 = vld [vmem:[#allocation2 + $0x130] sm:$0xf]
        %v2202 = vld [vmem:[#allocation2 + $0x134] sm:$0xff]
        %v2203 = vld [vmem:[#allocation2 + $0x13c] sm:$0xff]
        %v2204 = vld [vmem:[#allocation2 + $0x144] sm:$0xff]
        %v2205 = vld [vmem:[#allocation2 + $0x14c] sm:$0xf]
        %v2206 = vld [vmem:[#allocation2 + $0x150] sm:$0xff]
        %v2207 = vld [vmem:[#allocation2 + $0x158] sm:$0xff]
        %v2208 = vld [vmem:[#allocation2 + $0x160] sm:$0xff]
        %v2209 = vld [vmem:[#allocation2 + $0x168] sm:$0xf]
        %v2210 = vld [vmem:[#allocation2 + $0x16c] sm:$0xff]
        %v2211 = vld [vmem:[#allocation2 + $0x174] sm:$0xff]
        %v2212 = vld [vmem:[#allocation2 + $0x17c] sm:$0xff]
        %v2213 = vld [vmem:[#allocation2 + $0x184] sm:$0xf]
        %v2214 = vld [vmem:[#allocation2 + $0x188] sm:$0xff]
        %v2215 = vld [vmem:[#allocation2 + $0x190] sm:$0xff]
        %v2216 = vld [vmem:[#allocation2 + $0x198] sm:$0xff]
        %v2217 = vld [vmem:[#allocation2 + $0x1a0] sm:$0xf]
        %v2218 = vld [vmem:[#allocation2 + $0x1a4] sm:$0xff]
        %v2219 = vld [vmem:[#allocation2 + $0x1ac] sm:$0xff]
        %v2220 = vld [vmem:[#allocation2 + $0x1b4] sm:$0xff]
        %v2221 = vld [vmem:[#allocation2 + $0x1bc] sm:$0xf]
        %v2222 = vld [vmem:[%s2] sm:$0xff]
        %v2223 = vld [vmem:[%s2 + $0x8] sm:$0xff]
        %2225 = vset.pattern.permute.xlu0 0
        %2226 = vperm.xlu0 %2225, %v2222
        %v2227 = vpop.permute.xlu0 %2226
        %2230 = vset.pattern.permute.xlu0 0
        %2231 = vperm.xlu0 %2230, %v2223
        %v2232 = vpop.permute.xlu0 %2231
        %v2236 = vunpack.c.l.b16 %v2156
        %v2237 = vunpack.c.l.b16 %v2157
        %v2238 = vpack.c.b16 %v2237, %v2236
        %v2304 = vunpack.c.l.b16 %v2158
        %v2305 = vunpack.c.h.b16 %v2158
        %v2306 = vunpack.c.l.b16 %v2159
        %v2307 = vunpack.c.h.b16 %v2159
        %v2308 = vunpack.c.l.b16 %v2160
        %v2309 = vunpack.c.h.b16 %v2160
        %v2310 = vunpack.c.l.b16 %v2161
        %v2311 = vunpack.c.l.b16 %v2162
        %v2312 = vunpack.c.h.b16 %v2162
        %v2313 = vunpack.c.l.b16 %v2163
        %v2314 = vunpack.c.h.b16 %v2163
        %v2315 = vunpack.c.l.b16 %v2164
        %v2316 = vunpack.c.h.b16 %v2164
        %v2317 = vunpack.c.l.b16 %v2165
        %v2318 = vunpack.c.l.b16 %v2166
        %v2319 = vunpack.c.h.b16 %v2166
        %v2320 = vunpack.c.l.b16 %v2167
        %v2321 = vunpack.c.h.b16 %v2167
        %v2322 = vunpack.c.l.b16 %v2168
        %v2323 = vunpack.c.h.b16 %v2168
        %v2324 = vunpack.c.l.b16 %v2169
        %v2325 = vunpack.c.l.b16 %v2170
        %v2326 = vunpack.c.h.b16 %v2170
        %v2327 = vunpack.c.l.b16 %v2171
        %v2328 = vunpack.c.h.b16 %v2171
        %v2329 = vunpack.c.l.b16 %v2172
        %v2330 = vunpack.c.h.b16 %v2172
        %v2331 = vunpack.c.l.b16 %v2173
        %v2332 = vunpack.c.l.b16 %v2174
        %v2333 = vunpack.c.h.b16 %v2174
        %v2334 = vunpack.c.l.b16 %v2175
        %v2335 = vunpack.c.h.b16 %v2175
        %v2336 = vunpack.c.l.b16 %v2176
        %v2337 = vunpack.c.h.b16 %v2176
        %v2338 = vunpack.c.l.b16 %v2177
        %v2339 = vunpack.c.l.b16 %v2178
        %v2340 = vunpack.c.h.b16 %v2178
        %v2341 = vunpack.c.l.b16 %v2179
        %v2342 = vunpack.c.h.b16 %v2179
        %v2343 = vunpack.c.l.b16 %v2180
        %v2344 = vunpack.c.h.b16 %v2180
        %v2345 = vunpack.c.l.b16 %v2181
        %v2346 = vunpack.c.l.b16 %v2182
        %v2347 = vunpack.c.h.b16 %v2182
        %v2348 = vunpack.c.l.b16 %v2183
        %v2349 = vunpack.c.h.b16 %v2183
        %v2350 = vunpack.c.l.b16 %v2184
        %v2351 = vunpack.c.h.b16 %v2184
        %v2352 = vunpack.c.l.b16 %v2185
        %v2353 = vunpack.c.l.b16 %v2186
        %v2354 = vunpack.c.h.b16 %v2186
        %v2355 = vunpack.c.l.b16 %v2187
        %v2356 = vunpack.c.h.b16 %v2187
        %v2357 = vunpack.c.l.b16 %v2188
        %v2358 = vunpack.c.h.b16 %v2188
        %v2359 = vunpack.c.l.b16 %v2189
        %v2360 = vunpack.c.l.b16 %v2190
        %v2361 = vunpack.c.h.b16 %v2190
        %v2362 = vunpack.c.l.b16 %v2191
        %v2363 = vunpack.c.h.b16 %v2191
        %v2364 = vunpack.c.l.b16 %v2192
        %v2365 = vunpack.c.h.b16 %v2192
        %v2366 = vunpack.c.l.b16 %v2193
        %v2367 = vunpack.c.l.b16 %v2194
        %v2368 = vunpack.c.h.b16 %v2194
        %v2369 = vunpack.c.l.b16 %v2195
        %v2370 = vunpack.c.h.b16 %v2195
        %v2371 = vunpack.c.l.b16 %v2196
        %v2372 = vunpack.c.h.b16 %v2196
        %v2373 = vunpack.c.l.b16 %v2197
        %v2374 = vunpack.c.l.b16 %v2198
        %v2375 = vunpack.c.h.b16 %v2198
        %v2376 = vunpack.c.l.b16 %v2199
        %v2377 = vunpack.c.h.b16 %v2199
        %v2378 = vunpack.c.l.b16 %v2200
        %v2379 = vunpack.c.h.b16 %v2200
        %v2380 = vunpack.c.l.b16 %v2201
        %v2381 = vunpack.c.l.b16 %v2202
        %v2382 = vunpack.c.h.b16 %v2202
        %v2383 = vunpack.c.l.b16 %v2203
        %v2384 = vunpack.c.h.b16 %v2203
        %v2385 = vunpack.c.l.b16 %v2204
        %v2386 = vunpack.c.h.b16 %v2204
        %v2387 = vunpack.c.l.b16 %v2205
        %v2388 = vunpack.c.l.b16 %v2206
        %v2389 = vunpack.c.h.b16 %v2206
        %v2390 = vunpack.c.l.b16 %v2207
        %v2391 = vunpack.c.h.b16 %v2207
        %v2392 = vunpack.c.l.b16 %v2208
        %v2393 = vunpack.c.h.b16 %v2208
        %v2394 = vunpack.c.l.b16 %v2209
        %v2395 = vunpack.c.l.b16 %v2210
        %v2396 = vunpack.c.h.b16 %v2210
        %v2397 = vunpack.c.l.b16 %v2211
        %v2398 = vunpack.c.h.b16 %v2211
        %v2399 = vunpack.c.l.b16 %v2212
        %v2400 = vunpack.c.h.b16 %v2212
        %v2401 = vunpack.c.l.b16 %v2213
        %v2402 = vunpack.c.l.b16 %v2214
        %v2403 = vunpack.c.h.b16 %v2214
        %v2404 = vunpack.c.l.b16 %v2215
        %v2405 = vunpack.c.h.b16 %v2215
        %v2406 = vunpack.c.l.b16 %v2216
        %v2407 = vunpack.c.h.b16 %v2216
        %v2408 = vunpack.c.l.b16 %v2217
        %v2409 = vunpack.c.l.b16 %v2218
        %v2410 = vunpack.c.h.b16 %v2218
        %v2411 = vunpack.c.l.b16 %v2219
        %v2412 = vunpack.c.h.b16 %v2219
        %v2413 = vunpack.c.l.b16 %v2220
        %v2414 = vunpack.c.h.b16 %v2220
        %v2415 = vunpack.c.l.b16 %v2221
        %v2416 = vpack.c.b16 %v2311, %v2304
        %v2417 = vpack.c.b16 %v2312, %v2305
        %v2418 = vpack.c.b16 %v2313, %v2306
        %v2419 = vpack.c.b16 %v2314, %v2307
        %v2420 = vpack.c.b16 %v2315, %v2308
        %v2421 = vpack.c.b16 %v2316, %v2309
        %v2422 = vpack.c.b16 %v2317, %v2310
        %v2423 = vpack.c.b16 %v2325, %v2318
        %v2424 = vpack.c.b16 %v2326, %v2319
        %v2425 = vpack.c.b16 %v2327, %v2320
        %v2426 = vpack.c.b16 %v2328, %v2321
        %v2427 = vpack.c.b16 %v2329, %v2322
        %v2428 = vpack.c.b16 %v2330, %v2323
        %v2429 = vpack.c.b16 %v2331, %v2324
        %v2430 = vpack.c.b16 %v2339, %v2332
        %v2431 = vpack.c.b16 %v2340, %v2333
        %v2432 = vpack.c.b16 %v2341, %v2334
        %v2433 = vpack.c.b16 %v2342, %v2335
        %v2434 = vpack.c.b16 %v2343, %v2336
        %v2435 = vpack.c.b16 %v2344, %v2337
        %v2436 = vpack.c.b16 %v2345, %v2338
        %v2437 = vpack.c.b16 %v2353, %v2346
        %v2438 = vpack.c.b16 %v2354, %v2347
        %v2439 = vpack.c.b16 %v2355, %v2348
        %v2440 = vpack.c.b16 %v2356, %v2349
        %v2441 = vpack.c.b16 %v2357, %v2350
        %v2442 = vpack.c.b16 %v2358, %v2351
        %v2443 = vpack.c.b16 %v2359, %v2352
        %v2444 = vpack.c.b16 %v2367, %v2360
        %v2445 = vpack.c.b16 %v2368, %v2361
        %v2446 = vpack.c.b16 %v2369, %v2362
        %v2447 = vpack.c.b16 %v2370, %v2363
        %v2448 = vpack.c.b16 %v2371, %v2364
        %v2449 = vpack.c.b16 %v2372, %v2365
        %v2450 = vpack.c.b16 %v2373, %v2366
        %v2451 = vpack.c.b16 %v2381, %v2374
        %v2452 = vpack.c.b16 %v2382, %v2375
        %v2453 = vpack.c.b16 %v2383, %v2376
        %v2454 = vpack.c.b16 %v2384, %v2377
        %v2455 = vpack.c.b16 %v2385, %v2378
        %v2456 = vpack.c.b16 %v2386, %v2379
        %v2457 = vpack.c.b16 %v2387, %v2380
        %v2458 = vpack.c.b16 %v2395, %v2388
        %v2459 = vpack.c.b16 %v2396, %v2389
        %v2460 = vpack.c.b16 %v2397, %v2390
        %v2461 = vpack.c.b16 %v2398, %v2391
        %v2462 = vpack.c.b16 %v2399, %v2392
        %v2463 = vpack.c.b16 %v2400, %v2393
        %v2464 = vpack.c.b16 %v2401, %v2394
        %v2465 = vpack.c.b16 %v2409, %v2402
        %v2466 = vpack.c.b16 %v2410, %v2403
        %v2467 = vpack.c.b16 %v2411, %v2404
        %v2468 = vpack.c.b16 %v2412, %v2405
        %v2469 = vpack.c.b16 %v2413, %v2406
        %v2470 = vpack.c.b16 %v2414, %v2407
        %v2471 = vpack.c.b16 %v2415, %v2408
        %2528 = vmatpush.bf16.msra.mxu0 %v2465
        %2529 = vmatpush.bf16.msra.mxu0 %v2458
        %2530 = vmatpush.bf16.msra.mxu0 %v2451
        %2531 = vmatpush.bf16.msra.mxu0 %v2444
        %2532 = vmatpush.bf16.msra.mxu0 %v2437
        %2533 = vmatpush.bf16.msra.mxu0 %v2430
        %2534 = vmatpush.bf16.msra.mxu0 %v2423
        %2535 = vmatpush.bf16.msra.mxu0 %v2416
        %2536 = vmatmul.bf16.gmra.mxu0 %v2238
        %v2537 = vpop.f32.mrf.mxu0
        %v2538 = vadd.f32 %v2227, %v2537
        %v2539 = vpop.f32.mrf.mxu0
        %v2540 = vadd.f32 %v2232, %v2539
        %2541 = vdwg.mxu0
        %2542 = vmatpush.bf16.msra.mxu0 %v2466
        %2543 = vmatpush.bf16.msra.mxu0 %v2459
        %2544 = vmatpush.bf16.msra.mxu0 %v2452
        %2545 = vmatpush.bf16.msra.mxu0 %v2445
        %2546 = vmatpush.bf16.msra.mxu0 %v2438
        %2547 = vmatpush.bf16.msra.mxu0 %v2431
        %2548 = vmatpush.bf16.msra.mxu0 %v2424
        %2549 = vmatpush.bf16.msra.mxu0 %v2417
        %2550 = vmatmul.bf16.gmra.mxu0 %v2238
        %v2551 = vpop.f32.mrf.mxu0
        %v2552 = vadd.f32 %v2227, %v2551
        %v2553 = vpop.f32.mrf.mxu0
        %v2554 = vadd.f32 %v2232, %v2553
        %2555 = vdwg.mxu0
        %2556 = vmatpush.bf16.msra.mxu0 %v2467
        %2557 = vmatpush.bf16.msra.mxu0 %v2460
        %2558 = vmatpush.bf16.msra.mxu0 %v2453
        %2559 = vmatpush.bf16.msra.mxu0 %v2446
        %2560 = vmatpush.bf16.msra.mxu0 %v2439
        %2561 = vmatpush.bf16.msra.mxu0 %v2432
        %2562 = vmatpush.bf16.msra.mxu0 %v2425
        %2563 = vmatpush.bf16.msra.mxu0 %v2418
        %2564 = vmatmul.bf16.gmra.mxu0 %v2238
        %v2565 = vpop.f32.mrf.mxu0
        %v2566 = vadd.f32 %v2227, %v2565
        %v2567 = vpop.f32.mrf.mxu0
        %v2568 = vadd.f32 %v2232, %v2567
        %2569 = vdwg.mxu0
        %2570 = vmatpush.bf16.msra.mxu0 %v2468
        %2571 = vmatpush.bf16.msra.mxu0 %v2461
        %2572 = vmatpush.bf16.msra.mxu0 %v2454
        %2573 = vmatpush.bf16.msra.mxu0 %v2447
        %2574 = vmatpush.bf16.msra.mxu0 %v2440
        %2575 = vmatpush.bf16.msra.mxu0 %v2433
        %2576 = vmatpush.bf16.msra.mxu0 %v2426
        %2577 = vmatpush.bf16.msra.mxu0 %v2419
        %2578 = vmatmul.bf16.gmra.mxu0 %v2238
        %v2579 = vpop.f32.mrf.mxu0
        %v2580 = vadd.f32 %v2227, %v2579
        %v2581 = vpop.f32.mrf.mxu0
        %v2582 = vadd.f32 %v2232, %v2581
        %2583 = vdwg.mxu0
        %2584 = vmatpush.bf16.msra.mxu0 %v2469
        %2585 = vmatpush.bf16.msra.mxu0 %v2462
        %2586 = vmatpush.bf16.msra.mxu0 %v2455
        %2587 = vmatpush.bf16.msra.mxu0 %v2448
        %2588 = vmatpush.bf16.msra.mxu0 %v2441
        %2589 = vmatpush.bf16.msra.mxu0 %v2434
        %2590 = vmatpush.bf16.msra.mxu0 %v2427
        %2591 = vmatpush.bf16.msra.mxu0 %v2420
        %2592 = vmatmul.bf16.gmra.mxu0 %v2238
        %v2593 = vpop.f32.mrf.mxu0
        %v2594 = vadd.f32 %v2227, %v2593
        %v2595 = vpop.f32.mrf.mxu0
        %v2596 = vadd.f32 %v2232, %v2595
        %2597 = vdwg.mxu0
        %2598 = vmatpush.bf16.msra.mxu0 %v2470
        %2599 = vmatpush.bf16.msra.mxu0 %v2463
        %2600 = vmatpush.bf16.msra.mxu0 %v2456
        %2601 = vmatpush.bf16.msra.mxu0 %v2449
        %2602 = vmatpush.bf16.msra.mxu0 %v2442
        %2603 = vmatpush.bf16.msra.mxu0 %v2435
        %2604 = vmatpush.bf16.msra.mxu0 %v2428
        %2605 = vmatpush.bf16.msra.mxu0 %v2421
        %2606 = vmatmul.bf16.gmra.mxu0 %v2238
        %v2607 = vpop.f32.mrf.mxu0
        %v2608 = vadd.f32 %v2227, %v2607
        %v2609 = vpop.f32.mrf.mxu0
        %v2610 = vadd.f32 %v2232, %v2609
        %2611 = vdwg.mxu0
        %2612 = vmatpush.bf16.msra.mxu0 %v2471
        %2613 = vmatpush.bf16.msra.mxu0 %v2464
        %2614 = vmatpush.bf16.msra.mxu0 %v2457
        %2615 = vmatpush.bf16.msra.mxu0 %v2450
        %2616 = vmatpush.bf16.msra.mxu0 %v2443
        %2617 = vmatpush.bf16.msra.mxu0 %v2436
        %2618 = vmatpush.bf16.msra.mxu0 %v2429
        %2619 = vmatpush.bf16.msra.mxu0 %v2422
        %2620 = vmatmul.bf16.gmra.mxu0 %v2238
        %v2621 = vpop.f32.mrf.mxu0
        %v2622 = vadd.f32 %v2227, %v2621
        %v2623 = vpop.f32.mrf.mxu0
        %v2624 = vadd.f32 %v2232, %v2623
        %2625 = vdwg.mxu0
        %v2626 = vld [vmem:[%s4] sm:$0xff]
        %v2628 = vperm.slane %v2626, 0
        %v2629 = vperm.slane %v2626, 1
        %v2630 = vperm.slane %v2626, 2
        %v2631 = vperm.slane %v2626, 3
        %v2632 = vperm.slane %v2626, 4
        %v2633 = vperm.slane %v2626, 5
        %v2634 = vperm.slane %v2626, 6
        %v2642 = vmul.f32 %v2538, %v2628
        %v2643 = vmul.f32 %v2552, %v2629
        %v2644 = vmul.f32 %v2566, %v2630
        %v2645 = vmul.f32 %v2580, %v2631
        %v2646 = vmul.f32 %v2594, %v2632
        %v2647 = vmul.f32 %v2608, %v2633
        %v2648 = vmul.f32 %v2622, %v2634
        %v2649 = vmul.f32 %v2540, %v2628
        %v2650 = vmul.f32 %v2554, %v2629
        %v2651 = vmul.f32 %v2568, %v2630
        %v2652 = vmul.f32 %v2582, %v2631
        %v2653 = vmul.f32 %v2596, %v2632
        %v2654 = vmul.f32 %v2610, %v2633
        %v2655 = vmul.f32 %v2624, %v2634
        %v2656 = vadd.f32 %v2642, %v2643
        %v2657 = vadd.f32 %v2656, %v2644
        %v2658 = vadd.f32 %v2657, %v2645
        %v2659 = vadd.f32 %v2658, %v2646
        %v2660 = vadd.f32 %v2659, %v2647
        %v2661 = vadd.f32 %v2660, %v2648
        %2662 = vadd.xlane.f32.xlu0 %v2661
        %v2663 = vpop.xlane.xlu0 %2662
        %v2664 = vadd.f32 %v2649, %v2650
        %v2665 = vadd.f32 %v2664, %v2651
        %v2666 = vadd.f32 %v2665, %v2652
        %v2667 = vadd.f32 %v2666, %v2653
        %v2668 = vadd.f32 %v2667, %v2654
        %v2669 = vadd.f32 %v2668, %v2655
        %2670 = vadd.xlane.f32.xlu0 %v2669
        %v2671 = vpop.xlane.xlu0 %2670
        %v2672 = vmul.f32 %v2642, %v2538
        %v2673 = vmul.f32 %v2643, %v2552
        %v2674 = vmul.f32 %v2644, %v2566
        %v2675 = vmul.f32 %v2645, %v2580
        %v2676 = vmul.f32 %v2646, %v2594
        %v2677 = vmul.f32 %v2647, %v2608
        %v2678 = vmul.f32 %v2648, %v2622
        %v2679 = vmul.f32 %v2649, %v2540
        %v2680 = vmul.f32 %v2650, %v2554
        %v2681 = vmul.f32 %v2651, %v2568
        %v2682 = vmul.f32 %v2652, %v2582
        %v2683 = vmul.f32 %v2653, %v2596
        %v2684 = vmul.f32 %v2654, %v2610
        %v2685 = vmul.f32 %v2655, %v2624
        %v2686 = vadd.f32 %v2672, %v2673
        %v2687 = vadd.f32 %v2686, %v2674
        %v2688 = vadd.f32 %v2687, %v2675
        %v2689 = vadd.f32 %v2688, %v2676
        %v2690 = vadd.f32 %v2689, %v2677
        %v2691 = vadd.f32 %v2690, %v2678
        %2692 = vadd.xlane.f32.xlu0 %v2691
        %v2693 = vpop.xlane.xlu0 %2692
        %v2694 = vadd.f32 %v2679, %v2680
        %v2695 = vadd.f32 %v2694, %v2681
        %v2696 = vadd.f32 %v2695, %v2682
        %v2697 = vadd.f32 %v2696, %v2683
        %v2698 = vadd.f32 %v2697, %v2684
        %v2699 = vadd.f32 %v2698, %v2685
        %2700 = vadd.xlane.f32.xlu0 %v2699
        %v2701 = vpop.xlane.xlu0 %2700
        %v2702 = vld [vmem:[%s3] sm:$0xff]
        %v2703 = vld [vmem:[%s3 + $0x8] sm:$0xff]
        %vm2704 = vcmask 130048
        %v2706 = vsel %vm2704, %v2702, 0
        %v2709 = vsel %vm2704, %v2703, 0
        %2711 = vmatpush.msra.mxu0 0.0
        %2712 = vmatpush.msra.mxu0 0.0
        %2713 = vmatpush.msra.mxu0 0.0
        %2714 = vmatpush.msra.mxu0 0.0
        %2715 = vmatpush.msra.mxu0 0.0
        %2716 = vmatpush.msra.mxu0 0.0
        %2717 = vmatpush.msra.mxu0 0.0
        %2718 = vmatpush.msra.mxu0 0.0
        %2719 = vmatpush.msra.mxu0 0.0
        %2720 = vmatpush.msra.mxu0 0.0
        %2721 = vmatpush.msra.mxu0 0.0
        %2722 = vmatpush.msra.mxu0 0.0
        %2723 = vmatpush.msra.mxu0 0.0
        %2724 = vmatpush.msra.mxu0 0.0
        %2725 = vmatpush.msra.mxu0 %v2671
        %2726 = vmatpush.msra.mxu0 %v2663
        %2727 = vmatmul.f32.gmra.mxu0 %v2706
        %v2728 = vpop.f32.mrf.mxu0
        %v2729 = vadd.f32 0.0, %v2728
        %2730 = vmatmul.f32.gmra.mxu0 %v2709
        %v2731 = vpop.f32.mrf.mxu0
        %v2732 = vadd.f32 0.0, %v2731
        %2733 = vdwg.mxu0
        %2734 = vmatpush.msra.mxu0 0.0
        %2735 = vmatpush.msra.mxu0 0.0
        %2736 = vmatpush.msra.mxu0 0.0
        %2737 = vmatpush.msra.mxu0 0.0
        %2738 = vmatpush.msra.mxu0 0.0
        %2739 = vmatpush.msra.mxu0 0.0
        %2740 = vmatpush.msra.mxu0 0.0
        %2741 = vmatpush.msra.mxu0 0.0
        %2742 = vmatpush.msra.mxu0 0.0
        %2743 = vmatpush.msra.mxu0 0.0
        %2744 = vmatpush.msra.mxu0 0.0
        %2745 = vmatpush.msra.mxu0 0.0
        %2746 = vmatpush.msra.mxu0 0.0
        %2747 = vmatpush.msra.mxu0 0.0
        %2748 = vmatpush.msra.mxu0 %v2701
        %2749 = vmatpush.msra.mxu0 %v2693
        %2750 = vmatmul.f32.gmra.mxu0 %v2706
        %v2751 = vpop.f32.mrf.mxu0
        %v2752 = vadd.f32 0.0, %v2751
        %2753 = vmatmul.f32.gmra.mxu0 %v2709
        %v2754 = vpop.f32.mrf.mxu0
        %v2755 = vadd.f32 0.0, %v2754
        %2756 = vdwg.mxu0
        %v2757 = vmul.f32 %v2729, %v2729
        %v2758 = vmul.f32 %v2732, %v2732
        %v2759 = vsub.f32 %v2752, %v2757
        %v2760 = vsub.f32 %v2755, %v2758
        %v2761 = vmax.f32 %v2759, 0.0
        %v2762 = vmax.f32 %v2760, 0.0
        %v2763 = vadd.f32 %v2761, 1e-05
        %v2764 = vadd.f32 %v2762, 1e-05
        %v2765 = vrsqrt.pop %v2763
        %v2766 = vmul.f32 %v2765, %v2763
        %v2767 = vmul.f32 %v2766, %v2765
        %v2768 = vmul.f32 0.5, %v2767
        %v2769 = vsub.f32 1.5, %v2768
        %v2770 = vmul.f32 %v2765, %v2769
        %vm2771 = vweird.f32 %v2763
        %vm2772 = vweird.f32 %v2765
        %vm2773 = vmor %vm2771, %vm2772
        %v2774 = vsel %vm2773, %v2765, %v2770
        %v2775 = vrsqrt.pop %v2764
        %v2776 = vmul.f32 %v2775, %v2764
        %v2777 = vmul.f32 %v2776, %v2775
        %v2778 = vmul.f32 0.5, %v2777
        %v2779 = vsub.f32 1.5, %v2778
        %v2780 = vmul.f32 %v2775, %v2779
        %vm2781 = vweird.f32 %v2764
        %vm2782 = vweird.f32 %v2775
        %vm2783 = vmor %vm2781, %vm2782
        %v2784 = vsel %vm2783, %v2775, %v2780
        %2785 = vrot.lane.b32.xlu0 %v2222, 127
        %v2786 = vpop.permute.xlu0 %2785
        %2787 = vrot.lane.b32.xlu0 %v2223, 127
        %v2788 = vpop.permute.xlu0 %2787
        %v2791 = vmul.f32 %v2774, %v2786
        %v2792 = vmul.f32 %v2784, %v2788
        %v2793 = vmul.f32 %v2729, %v2791
        %v2794 = vmul.f32 %v2732, %v2792
        %2797 = vrot.lane.b32.xlu0 %v2793, 2
        %v2798 = vpop.permute.xlu0 %2797
        %2799 = vrot.lane.b32.xlu0 %v2794, 2
        %v2800 = vpop.permute.xlu0 %2799
        %v2803 = vsub.f32 %v2222, %v2798
        %v2804 = vsub.f32 %v2223, %v2800
        %2806 = vset.pattern.permute.xlu0 0
        %2807 = vperm.xlu0 %2806, %v2791
        %v2808 = vpop.permute.xlu0 %2807
        %2811 = vset.pattern.permute.xlu0 0
        %2812 = vperm.xlu0 %2811, %v2792
        %v2813 = vpop.permute.xlu0 %2812
        %v2815 = vmul.f32 %v2538, %v2808
        %v2816 = vmul.f32 %v2552, %v2808
        %v2817 = vmul.f32 %v2566, %v2808
        %v2818 = vmul.f32 %v2580, %v2808
        %v2819 = vmul.f32 %v2594, %v2808
        %v2820 = vmul.f32 %v2608, %v2808
        %v2821 = vmul.f32 %v2622, %v2808
        %v2822 = vmul.f32 %v2540, %v2813
        %v2823 = vmul.f32 %v2554, %v2813
        %v2824 = vmul.f32 %v2568, %v2813
        %v2825 = vmul.f32 %v2582, %v2813
        %v2826 = vmul.f32 %v2596, %v2813
        %v2827 = vmul.f32 %v2610, %v2813
        %v2828 = vmul.f32 %v2624, %v2813
        %2830 = vset.pattern.permute.xlu0 2
        %2831 = vperm.xlu0 %2830, %v2803
        %v2832 = vpop.permute.xlu0 %2831
        %2835 = vset.pattern.permute.xlu0 2
        %2836 = vperm.xlu0 %2835, %v2804
        %v2837 = vpop.permute.xlu0 %2836
        %v2839 = vadd.f32 %v2815, %v2832
        %v2840 = vadd.f32 %v2816, %v2832
        %v2841 = vadd.f32 %v2817, %v2832
        %v2842 = vadd.f32 %v2818, %v2832
        %v2843 = vadd.f32 %v2819, %v2832
        %v2844 = vadd.f32 %v2820, %v2832
        %v2845 = vadd.f32 %v2821, %v2832
        %v2846 = vadd.f32 %v2822, %v2837
        %v2847 = vadd.f32 %v2823, %v2837
        %v2848 = vadd.f32 %v2824, %v2837
        %v2849 = vadd.f32 %v2825, %v2837
        %v2850 = vadd.f32 %v2826, %v2837
        %v2851 = vadd.f32 %v2827, %v2837
        %v2852 = vadd.f32 %v2828, %v2837
        %vm2853 = vcmp.gt.f32.partialorder %v2839, 0.0
        %vm2854 = vcmp.gt.f32.partialorder %v2840, 0.0
        %vm2855 = vcmp.gt.f32.partialorder %v2841, 0.0
        %vm2856 = vcmp.gt.f32.partialorder %v2842, 0.0
        %vm2857 = vcmp.gt.f32.partialorder %v2843, 0.0
        %vm2858 = vcmp.gt.f32.partialorder %v2844, 0.0
        %vm2859 = vcmp.gt.f32.partialorder %v2845, 0.0
        %vm2860 = vcmp.gt.f32.partialorder %v2846, 0.0
        %vm2861 = vcmp.gt.f32.partialorder %v2847, 0.0
        %vm2862 = vcmp.gt.f32.partialorder %v2848, 0.0
        %vm2863 = vcmp.gt.f32.partialorder %v2849, 0.0
        %vm2864 = vcmp.gt.f32.partialorder %v2850, 0.0
        %vm2865 = vcmp.gt.f32.partialorder %v2851, 0.0
        %vm2866 = vcmp.gt.f32.partialorder %v2852, 0.0
        %v2867 = vmul.f32 %v2839, 0.2
        %v2868 = vmul.f32 %v2840, 0.2
        %v2869 = vmul.f32 %v2841, 0.2
        %v2870 = vmul.f32 %v2842, 0.2
        %v2871 = vmul.f32 %v2843, 0.2
        %v2872 = vmul.f32 %v2844, 0.2
        %v2873 = vmul.f32 %v2845, 0.2
        %v2874 = vmul.f32 %v2846, 0.2
        %v2875 = vmul.f32 %v2847, 0.2
        %v2876 = vmul.f32 %v2848, 0.2
        %v2877 = vmul.f32 %v2849, 0.2
        %v2878 = vmul.f32 %v2850, 0.2
        %v2879 = vmul.f32 %v2851, 0.2
        %v2880 = vmul.f32 %v2852, 0.2
        %v2881 = vsel %vm2853, %v2839, %v2867
        %v2882 = vsel %vm2854, %v2840, %v2868
        %v2883 = vsel %vm2855, %v2841, %v2869
        %v2884 = vsel %vm2856, %v2842, %v2870
        %v2885 = vsel %vm2857, %v2843, %v2871
        %v2886 = vsel %vm2858, %v2844, %v2872
        %v2887 = vsel %vm2859, %v2845, %v2873
        %v2888 = vsel %vm2860, %v2846, %v2874
        %v2889 = vsel %vm2861, %v2847, %v2875
        %v2890 = vsel %vm2862, %v2848, %v2876
        %v2891 = vsel %vm2863, %v2849, %v2877
        %v2892 = vsel %vm2864, %v2850, %v2878
        %v2893 = vsel %vm2865, %v2851, %v2879
        %v2894 = vsel %vm2866, %v2852, %v2880
        %v2895 = vpack.c.bf16 %v2882, %v2881
        %v2896 = vpack.c.bf16 %v2884, %v2883
        %v2897 = vpack.c.bf16 %v2886, %v2885
        %v2898 = vpack.c.bf16 %v2887, %v2887
        %v2899 = vpack.c.bf16 %v2889, %v2888
        %v2900 = vpack.c.bf16 %v2891, %v2890
        %v2901 = vpack.c.bf16 %v2893, %v2892
        %v2902 = vpack.c.bf16 %v2894, %v2894
        %2903 = vst [vmem:[%s259] sm:$0xff] %v2895
        %2904 = vst [vmem:[%s259 + $0x8] sm:$0xff] %v2896
        %2905 = vst [vmem:[%s259 + $0x10] sm:$0xff] %v2897
        %2906 = vst [vmem:[%s259 + $0x18] sm:$0xf] %v2898
        %2907 = vst [vmem:[%s259 + $0x1c] sm:$0xff] %v2899
        %2908 = vst [vmem:[%s259 + $0x24] sm:$0xff] %v2900
        %2909 = vst [vmem:[%s259 + $0x2c] sm:$0xff] %v2901
        %2910 = vst [vmem:[%s259 + $0x34] sm:$0xf] %v2902
        %s2911 = sand.u32 %s141, 1
        %s2912 = scalar_lea.sflag [#allocation5], %s2911
        %s2913 = sand.u32 %s141, 1
        %s2914 = smul.addr %s2913, 56
        %s2915 = scalar_lea.vmem [#allocation8], %s2914
        // Predicated region
        $region49: #{tpu_custom_call.1} parent=39 // pred_check
          %p2916 = pneg %p151
        $region50: #{tpu_custom_call.1} parent=39 // pred_check_branch
          %2918 = sbr.rel (%p2916) target = $region52
        $region51: #{tpu_custom_call.1} parent=39 // pred_region
          %2920 = vsyncadd %s2912, 0
          %s2921 = smul.addr %s23, 14
          %s2922 = smul.addr %s2921, 4
          %s2923 = scalar_lea.hbm %s5, %s2922
          %s2924 = sshll.u32 %s2915, 4
          %s2925 = int_to_ptr.vmem [resolvable:$true] %s2924
          %s2926 = sshll.u32 %s2923, 4
          %s2927 = int_to_ptr.hbm [resolvable:$true] %s2926
          %2932 = dma.vmem_to_hbm [thread:$0]  %s2925, 896, %s2927, %s2912, 448, 448, 28
        $region52: #{tpu_custom_call.1} parent=39 // pred_fallthru
          _
      $region40: #{tpu_custom_call.1} parent=5 // pred_fallthru
        _
      %p2933 = scmp.le.s32.totalorder 2, %s18
      // Predicated region
      $region53: #{tpu_custom_call.1} parent=5 // pred_check
        %p2934 = pneg %p2933
      $region54: #{tpu_custom_call.1} parent=5 // pred_check_branch
        %2936 = sbr.rel (%p2934) target = $region56
      $region55: #{tpu_custom_call.1} parent=5 // pred_region
        %s2937 = ssub.s32 %s18, 2
        // Predicated region
        $region57: #{tpu_custom_call.1} parent=55 // pred_check
          %p2938 = pneg %p157
        $region58: #{tpu_custom_call.1} parent=55 // pred_check_branch
          %2940 = sbr.rel (%p2938) target = $region60
        $region59: #{tpu_custom_call.1} parent=55 // pred_region
          %s2941 = sand.u32 %s142, 1
          %s2942 = scalar_lea.sflag [#allocation5], %s2941
          %s2943 = sand.u32 %s142, 1
          %s2944 = smul.addr %s2943, 56
          %s2945 = scalar_lea.vmem [#allocation8], %s2944
          %2947 = dma.done %s2942, 896
        $region60: #{tpu_custom_call.1} parent=55 // pred_fallthru
          _
      $region56: #{tpu_custom_call.1} parent=5 // pred_fallthru
        _
    $region6: #{tpu_custom_call.1} parent=1 // loop_footer
      %s22 = sadd.s32 1, %s18
    $region7: #{tpu_custom_call.1} parent=1 // loop_footer_branch
      %17 = sbr.rel target = $region3
    $region8: #{tpu_custom_call.1} parent=1 // loop_exit
      _
    %2948 = vsyncpa [#allocation4], 1
    %s2949 = scalar_lea.sflag [#allocation4], 1
    %2950 = vsyncpa %s2949, 1
    %2951 = vsyncpa [#allocation7], 1
    %2952 = vsyncpa [#allocation5], 1
    %s2953 = scalar_lea.sflag [#allocation5], 1
    %2954 = vsyncpa %s2953, 1

// kernel: tpu_custom_call.1
$region0: #{tpu_custom_call.1}
  #allocation0 [shape = 'u32[]', space=smem, size = 0x4, offset = 0x4, fixed_abs, tag = 'smem constant byte address 0x4 - core index']
  #allocation1 [shape = 'u32[72,128]{1,0:T(1,128)}', space=vmem, size = 0x9000, scoped, tag = 'internal scratch']
  #allocation2 [shape = 'bf16[128,896]{1,0:T(8,128)(2,1)}', space=vmem, size = 0x38000, scoped, tag = 'scratch operand']
  %s0 = inlined_call_operand.hbm [shape: bf16[2,4,1200], index: 0, kind: input, shape index: {}]
  %s1 = inlined_call_operand.hbm [shape: bf16[16,128], index: 1, kind: input, shape index: {}]
  %s2 = inlined_call_operand.vmem [shape: f32[16,3], index: 2, kind: input, shape index: {}]
  %s3 = inlined_call_operand.vmem [shape: f32[16,16], index: 3, kind: input, shape index: {}]
  %s4 = inlined_call_operand.vmem [shape: f32[1,896], index: 4, kind: input, shape index: {}]
  %s5 = inlined_call_operand.hbm [shape: bf16[2,16,896], index: 5, kind: output, shape index: {}]
  %s6 = sld [smem:[#allocation0]]
  $region61: #{tpu_custom_call.1} parent=0
    _
  %s8 = ssub.s32 1, %s6
  %s9 = scalar_select 0, %s8, %s6
  $region1: #{tpu_custom_call.1} parent=0
    #allocation3 [shape = 'u8[20480]{0}', space=vmem, size = 0x5000, scoped, tag = 'input window, operand 0']
    #allocation4 [shape = 's32[2]{0}', space=sflag, size = 0x8, scoped, tag = 'scoped memory for tpu_custom_call.1']
    #allocation5 [shape = 's32[2]{0}', space=sflag, size = 0x8, scoped, tag = 'scoped memory for tpu_custom_call.1']
    #allocation6 [shape = 'u8[4096]{0}', space=vmem, size = 0x1000, scoped, tag = 'input window, operand 1, single buffered']
    #allocation7 [shape = 's32[1]{0}', space=sflag, size = 0x4, scoped, tag = 'scoped memory for tpu_custom_call.1']
    #allocation8 [shape = 'u8[57344]{0}', space=vmem, size = 0xe000, scoped, tag = 'output window, operand 0']
    %10 = vsyncpa [#allocation4], 0
    %s11 = scalar_lea.sflag [#allocation4], 1
    %12 = vsyncpa %s11, 0
    %13 = vsyncpa [#allocation7], 0
    %14 = vsyncpa [#allocation5], 0
    %s15 = scalar_lea.sflag [#allocation5], 1
    %16 = vsyncpa %s15, 0
    loop: start=0, step=1, limit=4
    $region2: #{tpu_custom_call.1} parent=1 // loop_pre_header
      _
    $region3: #{tpu_custom_call.1} parent=1 // loop_header
      %s18 = sphi 0, %s22
      %p19 = scmp.ge.s32.totalorder %s18, 4
      %s28 = sphi 0, %s30
      %s31 = sphi 0, %s28
      %s32 = sphi 0, %s31
      %s48 = sphi 0, %s32
      %s52 = sphi 0, %s52
      %s54 = sphi 0, %s52
      %s55 = sphi 0, %s54
      %s69 = sphi 0, %s55
      %s73 = sphi 0, %s73
      %s75 = sphi 0, %s73
      %s76 = sphi 0, %s75
      %s90 = sphi 0, %s76
      %s94 = sphi 0, %s94
      %s96 = sphi 0, %s94
      %s97 = sphi 0, %s96
      %s111 = sphi 0, %s97
      %s115 = sphi 0, %s115
      %s117 = sphi 0, %s115
      %s118 = sphi 0, %s117
      %s132 = sphi 0, %s118
      %s138 = sphi 0, %s140
      %s141 = sphi 0, %s138
      %s142 = sphi 0, %s141
      %s158 = sphi 0, %s142
    $region4: #{tpu_custom_call.1} parent=1 // loop_header_branch
      %21 = sbr.rel (%p19) target = $region8
    $region5: #{tpu_custom_call.1} parent=1 // loop_body
      %s23 = ssub.s32 %s18, 1
      %s24 = ssub.s32 %s18, 2
      %s25 = sadd.s32 %s18, 1
      %s26 = ssub.s32 %s18, %s25
      %p27 = scmp.eq.s32.totalorder %s26, 0
      %s29 = sadd.s32 %s28, 1
      %s30 = scalar_select %p27, %s28, %s29
      %p33 = pneg %p27
      %p34 = scmp.eq.s32.totalorder %s18, 1
      %p35 = por %p33, %p34
      %p36 = scmp.ne.s32.totalorder %s28, %s31
      %p37 = scmp.eq.s32.totalorder %s18, 0
      %p38 = por %p36, %p37
      %p39 = scmp.ne.s32.totalorder %s28, %s31
      %p40 = scmp.eq.s32.totalorder %s23, 1
      %p41 = por %p39, %p40
      %p42 = scmp.ne.s32.totalorder %s31, %s32
      %p43 = scmp.eq.s32.totalorder %s23, 0
      %p44 = por %p42, %p43
      %p45 = scmp.ne.s32.totalorder %s31, %s32
      %p46 = scmp.eq.s32.totalorder %s24, 1
      %p47 = por %p45, %p46
      %p49 = scmp.ne.s32.totalorder %s32, %s48
      %p50 = scmp.eq.s32.totalorder %s24, 0
      %p51 = por %p49, %p50
      %s53 = sadd.s32 %s52, 1
      %p56 = scmp.eq.s32.totalorder %s18, 1
      %p57 = scmp.ne.s32.totalorder %s52, %s54
      %p58 = scmp.eq.s32.totalorder %s18, 0
      %p59 = por %p57, %p58
      %p60 = scmp.ne.s32.totalorder %s52, %s54
      %p61 = scmp.eq.s32.totalorder %s23, 1
      %p62 = por %p60, %p61
      %p63 = scmp.ne.s32.totalorder %s54, %s55
      %p64 = scmp.eq.s32.totalorder %s23, 0
      %p65 = por %p63, %p64
      %p66 = scmp.ne.s32.totalorder %s54, %s55
      %p67 = scmp.eq.s32.totalorder %s24, 1
      %p68 = por %p66, %p67
      %p70 = scmp.ne.s32.totalorder %s55, %s69
      %p71 = scmp.eq.s32.totalorder %s24, 0
      %p72 = por %p70, %p71
      %s74 = sadd.s32 %s73, 1
      %p77 = scmp.eq.s32.totalorder %s18, 1
      %p78 = scmp.ne.s32.totalorder %s73, %s75
      %p79 = scmp.eq.s32.totalorder %s18, 0
      %p80 = por %p78, %p79
      %p81 = scmp.ne.s32.totalorder %s73, %s75
      %p82 = scmp.eq.s32.totalorder %s23, 1
      %p83 = por %p81, %p82
      %p84 = scmp.ne.s32.totalorder %s75, %s76
      %p85 = scmp.eq.s32.totalorder %s23, 0
      %p86 = por %p84, %p85
      %p87 = scmp.ne.s32.totalorder %s75, %s76
      %p88 = scmp.eq.s32.totalorder %s24, 1
      %p89 = por %p87, %p88
      %p91 = scmp.ne.s32.totalorder %s76, %s90
      %p92 = scmp.eq.s32.totalorder %s24, 0
      %p93 = por %p91, %p92
      %s95 = sadd.s32 %s94, 1
      %p98 = scmp.eq.s32.totalorder %s18, 1
      %p99 = scmp.ne.s32.totalorder %s94, %s96
      %p100 = scmp.eq.s32.totalorder %s18, 0
      %p101 = por %p99, %p100
      %p102 = scmp.ne.s32.totalorder %s94, %s96
      %p103 = scmp.eq.s32.totalorder %s23, 1
      %p104 = por %p102, %p103
      %p105 = scmp.ne.s32.totalorder %s96, %s97
      %p106 = scmp.eq.s32.totalorder %s23, 0
      %p107 = por %p105, %p106
      %p108 = scmp.ne.s32.totalorder %s96, %s97
      %p109 = scmp.eq.s32.totalorder %s24, 1
      %p110 = por %p108, %p109
      %p112 = scmp.ne.s32.totalorder %s97, %s111
      %p113 = scmp.eq.s32.totalorder %s24, 0
      %p114 = por %p112, %p113
      %s116 = sadd.s32 %s115, 1
      %p119 = scmp.eq.s32.totalorder %s18, 1
      %p120 = scmp.ne.s32.totalorder %s115, %s117
      %p121 = scmp.eq.s32.totalorder %s18, 0
      %p122 = por %p120, %p121
      %p123 = scmp.ne.s32.totalorder %s115, %s117
      %p124 = scmp.eq.s32.totalorder %s23, 1
      %p125 = por %p123, %p124
      %p126 = scmp.ne.s32.totalorder %s117, %s118
      %p127 = scmp.eq.s32.totalorder %s23, 0
      %p128 = por %p126, %p127
      %p129 = scmp.ne.s32.totalorder %s117, %s118
      %p130 = scmp.eq.s32.totalorder %s24, 1
      %p131 = por %p129, %p130
      %p133 = scmp.ne.s32.totalorder %s118, %s132
      %p134 = scmp.eq.s32.totalorder %s24, 0
      %p135 = por %p133, %p134
      %s136 = ssub.s32 %s18, %s25
      %p137 = scmp.eq.s32.totalorder %s136, 0
      %s139 = sadd.s32 %s138, 1
      %s140 = scalar_select %p137, %s138, %s139
      %p143 = pneg %p137
      %p144 = scmp.eq.s32.totalorder %s18, 1
      %p145 = por %p143, %p144
      %p146 = scmp.ne.s32.totalorder %s138, %s141
      %p147 = scmp.eq.s32.totalorder %s18, 0
      %p148 = por %p146, %p147
      %p149 = scmp.ne.s32.totalorder %s138, %s141
      %p150 = scmp.eq.s32.totalorder %s23, 1
      %p151 = por %p149, %p150
      %p152 = scmp.ne.s32.totalorder %s141, %s142
      %p153 = scmp.eq.s32.totalorder %s23, 0
      %p154 = por %p152, %p153
      %p155 = scmp.ne.s32.totalorder %s141, %s142
      %p156 = scmp.eq.s32.totalorder %s24, 1
      %p157 = por %p155, %p156
      %p159 = scmp.ne.s32.totalorder %s142, %s158
      %p160 = scmp.eq.s32.totalorder %s24, 0
      %p161 = por %p159, %p160
      %p162 = scmp.le.s32.totalorder 1, %s18
      %p163 = scmp.lt.s32.totalorder %s18, 3
      %p164 = pnand %p162, %p163
      %p165 = pneg %p164
      // Predicated region
      $region9: #{tpu_custom_call.1} parent=5 // pred_check
        _
      $region10: #{tpu_custom_call.1} parent=5 // pred_check_branch
        %167 = sbr.rel (%p164) target = $region12
      $region11: #{tpu_custom_call.1} parent=5 // pred_region
        %s168 = ssub.s32 %s18, 1
        // Predicated region
        $region13: #{tpu_custom_call.1} parent=11 // pred_check
          %p169 = pneg %p65
        $region14: #{tpu_custom_call.1} parent=11 // pred_check_branch
          %171 = sbr.rel (%p169) target = $region16
        $region15: #{tpu_custom_call.1} parent=11 // pred_region
          %173 = vsyncadd [#allocation7], 0
          %s174 = sshll.u32 %s1, 4
          %s175 = int_to_ptr.hbm [resolvable:$true] %s174
          %s176 = sshll.u32 [#allocation6], 4
          %s177 = int_to_ptr.vmem [resolvable:$true] %s176
          %182 = dma.hbm_to_vmem [thread:$0]  %s175, 128, %s177, [#allocation7], 64, 64, 4
        $region16: #{tpu_custom_call.1} parent=11 // pred_fallthru
          _
        // Predicated region
        $region17: #{tpu_custom_call.1} parent=11 // pred_check
          %p183 = pneg %p86
        $region18: #{tpu_custom_call.1} parent=11 // pred_check_branch
          %185 = sbr.rel (%p183) target = $region20
        $region19: #{tpu_custom_call.1} parent=11 // pred_region
          _
        $region20: #{tpu_custom_call.1} parent=11 // pred_fallthru
          _
        // Predicated region
        $region21: #{tpu_custom_call.1} parent=11 // pred_check
          %p186 = pneg %p107
        $region22: #{tpu_custom_call.1} parent=11 // pred_check_branch
          %188 = sbr.rel (%p186) target = $region24
        $region23: #{tpu_custom_call.1} parent=11 // pred_region
          _
        $region24: #{tpu_custom_call.1} parent=11 // pred_fallthru
          _
        // Predicated region
        $region25: #{tpu_custom_call.1} parent=11 // pred_check
          %p189 = pneg %p128
        $region26: #{tpu_custom_call.1} parent=11 // pred_check_branch
          %191 = sbr.rel (%p189) target = $region28
        $region27: #{tpu_custom_call.1} parent=11 // pred_region
          _
        $region28: #{tpu_custom_call.1} parent=11 // pred_fallthru
          _
      $region12: #{tpu_custom_call.1} parent=5 // pred_fallthru
        _
      %p192 = scmp.lt.s32.totalorder %s18, 2
      // Predicated region
      $region29: #{tpu_custom_call.1} parent=5 // pred_check
        %p193 = pneg %p192
      $region30: #{tpu_custom_call.1} parent=5 // pred_check_branch
        %195 = sbr.rel (%p193) target = $region32
      $region31: #{tpu_custom_call.1} parent=5 // pred_region
        // Predicated region
        $region33: #{tpu_custom_call.1} parent=31 // pred_check
          %p196 = pneg %p38
        $region34: #{tpu_custom_call.1} parent=31 // pred_check_branch
          %198 = sbr.rel (%p196) target = $region36
        $region35: #{tpu_custom_call.1} parent=31 // pred_region
          %s199 = sand.u32 %s28, 1
          %s200 = scalar_lea.sflag [#allocation4], %s199
          %s201 = sand.u32 %s28, 1
          %s202 = smul.addr %s201, 20
          %s203 = scalar_lea.vmem [#allocation3], %s202
          %205 = vsyncadd %s200, 0
          %s206 = smul.addr %s18, 10
          %s207 = smul.addr %s206, 2
          %s208 = scalar_lea.hbm %s0, %s207
          %s210 = sshll.u32 %s208, 4
          %s211 = int_to_ptr.hbm [resolvable:$true] %s210
          %s212 = sshll.u32 %s203, 4
          %s213 = int_to_ptr.vmem [resolvable:$true] %s212
          %215 = dma.hbm_to_vmem [thread:$0]  %s211, 320, %s213, %s200
        $region36: #{tpu_custom_call.1} parent=31 // pred_fallthru
          _
      $region32: #{tpu_custom_call.1} parent=5 // pred_fallthru
        _
      %p216 = scmp.le.s32.totalorder 1, %s18
      %p217 = scmp.lt.s32.totalorder %s18, 3
      %p218 = pnand %p216, %p217
      %p219 = pneg %p218
      // Predicated region
      $region37: #{tpu_custom_call.1} parent=5 // pred_check
        _
      $region38: #{tpu_custom_call.1} parent=5 // pred_check_branch
        %221 = sbr.rel (%p218) target = $region40
      $region39: #{tpu_custom_call.1} parent=5 // pred_region
        %s222 = ssub.s32 %s18, 1
        %s223 = sand.u32 %s31, 1
        %s224 = scalar_lea.sflag [#allocation4], %s223
        %s225 = sand.u32 %s31, 1
        %s226 = smul.addr %s225, 20
        %s227 = scalar_lea.vmem [#allocation3], %s226
        // Predicated region
        $region41: #{tpu_custom_call.1} parent=39 // pred_check
          %p228 = pneg %p44
        $region42: #{tpu_custom_call.1} parent=39 // pred_check_branch
          %230 = sbr.rel (%p228) target = $region44
        $region43: #{tpu_custom_call.1} parent=39 // pred_region
          %232 = dma.done %s224, 320
        $region44: #{tpu_custom_call.1} parent=39 // pred_fallthru
          _
        // Predicated region
        $region45: #{tpu_custom_call.1} parent=39 // pred_check
          %p233 = pneg %p65
        $region46: #{tpu_custom_call.1} parent=39 // pred_check_branch
          %235 = sbr.rel (%p233) target = $region48
        $region47: #{tpu_custom_call.1} parent=39 // pred_region
          %237 = dma.done [#allocation7], 128
        $region48: #{tpu_custom_call.1} parent=39 // pred_fallthru
          _
        %s238 = sand.u32 %s31, 1
        %s239 = scalar_lea.sflag [#allocation4], %s238
        %s240 = sand.u32 %s31, 1
        %s241 = smul.addr %s240, 20
        %s242 = scalar_lea.vmem [#allocation3], %s241
        %p243 = pneg %p44
        %p244 = pneg %p41
        %p245 = pneg %p65
        %p246 = pneg %p62
        %p247 = pneg %p86
        %p248 = pneg %p83
        %p249 = pneg %p107
        %p250 = pneg %p104
        %p251 = pneg %p128
        %p252 = pneg %p125
        %p253 = pneg %p154
        %p254 = pneg %p151
        %s255 = sand.u32 %s141, 1
        %s256 = scalar_lea.sflag [#allocation5], %s255
        %s257 = sand.u32 %s141, 1
        %s258 = smul.addr %s257, 56
        %s259 = scalar_lea.vmem [#allocation8], %s258
        %261 = vst [vmem:[#allocation2 + $0x16c] sm:$0xcc] 0
        %262 = vst [vmem:[#allocation2 + $0x174] sm:$0xcc] 0
        %263 = vst [vmem:[#allocation2 + $0x17c] sm:$0xcc] 0
        %264 = vst [vmem:[#allocation2 + $0x184] sm:$0xc] 0
        %265 = vst [vmem:[#allocation2 + $0x188] sm:$0xff] 0
        %266 = vst [vmem:[#allocation2 + $0x190] sm:$0xff] 0
        %267 = vst [vmem:[#allocation2 + $0x198] sm:$0xff] 0
        %268 = vst [vmem:[#allocation2 + $0x1a0] sm:$0xf] 0
        %269 = vst [vmem:[#allocation2 + $0x1a4] sm:$0xff] 0
        %270 = vst [vmem:[#allocation2 + $0x1ac] sm:$0xff] 0
        %271 = vst [vmem:[#allocation2 + $0x1b4] sm:$0xff] 0
        %272 = vst [vmem:[#allocation2 + $0x1bc] sm:$0xf] 0
        %v273 = vld [vmem:[%s227] sm:$0xff]
        %v274 = vld [vmem:[%s227 + $0x8] sm:$0x3f]
        %276 = vst [vmem:[#allocation1] ss:$2 sm:$0xff] %v273
        %s278 = scalar_lea.vmem [#allocation1], 16
        %279 = vst [vmem:[%s278] ss:$2 sm:$0xff] %v274
        %v280 = vld.sshfl [vmem:[#allocation1] sm:$0xff pattern:$0x75643120]
        %v281 = vld.sshfl [vmem:[#allocation1 + $0x8] sm:$0xff pattern:$0x75643120]
        %v282 = vld.sshfl [vmem:[#allocation1 + $0x10] sm:$0xff pattern:$0x75643120]
        %v283 = vld.sshfl [vmem:[#allocation1 + $0x18] sm:$0xff pattern:$0x75643120]
        %288 = vst [vmem:[#allocation2] sm:$0x33] %v280
        %289 = vst [vmem:[#allocation2 + $0x8] sm:$0x33] %v281
        %290 = vst [vmem:[#allocation2 + $0x10] sm:$0x33] %v282
        %291 = vst [vmem:[#allocation2 + $0x18] sm:$0x3] %v283
        %v292 = vld [vmem:[%s227] sm:$0xff]
        %v293 = vld [vmem:[%s227 + $0x8] sm:$0xff]
        %s295 = scalar_lea.vmem [#allocation1], 1
        %296 = vst [vmem:[%s295] ss:$2 sm:$0xff] %v292
        %s298 = scalar_lea.vmem [#allocation1], 17
        %299 = vst [vmem:[%s298] ss:$2 sm:$0xff] %v293
        %v300 = vld.sshfl [vmem:[#allocation1] sm:$0xff pattern:$0x75643120]
        %v302 = vld.sshfl [vmem:[#allocation1 + $0x8] sm:$0xff pattern:$0x75643120]
        %v304 = vld.sshfl [vmem:[#allocation1 + $0x10] sm:$0xff pattern:$0x75643120]
        %v306 = vld.sshfl [vmem:[#allocation1 + $0x18] sm:$0xff pattern:$0x75643120]
        %308 = vrot.lane.b32.xlu0 %v300, 127
        %v309 = vpop.permute.xlu0 %308
        %310 = vrot.lane.b32.xlu0 %v302, 127
        %v311 = vpop.permute.xlu0 %310
        %312 = vrot.lane.b32.xlu0 %v304, 127
        %v313 = vpop.permute.xlu0 %312
        %314 = vrot.lane.b32.xlu0 %v306, 127
        %v315 = vpop.permute.xlu0 %314
        %v316 = vrot.slane %v309, 4
        %v317 = vrot.slane %v311, 4
        %v318 = vrot.slane %v313, 4
        %v319 = vrot.slane %v315, 4
        %vm320 = vcmask 1043456
        %v321 = vsel %vm320, %v316, %v317
        %vm322 = vcmask 1039360
        %v323 = vsel %vm322, %v309, %v321
        %v324 = vsel %vm320, %v317, %v318
        %v325 = vsel %vm322, %v311, %v324
        %v326 = vsel %vm320, %v318, %v319
        %v327 = vsel %vm322, %v313, %v326
        %v328 = vsel %vm322, %v315, %v319
        %333 = vst [vmem:[#allocation2] sm:$0xcc] %v323
        %334 = vst [vmem:[#allocation2 + $0x8] sm:$0xcc] %v325
        %335 = vst [vmem:[#allocation2 + $0x10] sm:$0xcc] %v327
        %336 = vst [vmem:[#allocation2 + $0x18] sm:$0xc] %v328
        %v337 = vld [vmem:[%s227] sm:$0xff]
        %v338 = vld [vmem:[%s227 + $0x8] sm:$0xff]
        %340 = vst [vmem:[#allocation1] ss:$2 sm:$0xff] %v337
        %s342 = scalar_lea.vmem [#allocation1], 16
        %343 = vst [vmem:[%s342] ss:$2 sm:$0xff] %v338
        %v344 = vld.sshfl [vmem:[#allocation1] sm:$0xff pattern:$0x75643120]
        %v346 = vld.sshfl [vmem:[#allocation1 + $0x8] sm:$0xff pattern:$0x75643120]
        %v348 = vld.sshfl [vmem:[#allocation1 + $0x10] sm:$0xff pattern:$0x75643120]
        %v350 = vld.sshfl [vmem:[#allocation1 + $0x18] sm:$0xff pattern:$0x75643120]
        %352 = vrot.lane.b32.xlu0 %v344, 126
        %v353 = vpop.permute.xlu0 %352
        %354 = vrot.lane.b32.xlu0 %v346, 126
        %v355 = vpop.permute.xlu0 %354
        %356 = vrot.lane.b32.xlu0 %v348, 126
        %v357 = vpop.permute.xlu0 %356
        %358 = vrot.lane.b32.xlu0 %v350, 126
        %v359 = vpop.permute.xlu0 %358
        %v360 = vrot.slane %v353, 4
        %v361 = vrot.slane %v355, 4
        %v362 = vrot.slane %v357, 4
        %v363 = vrot.slane %v359, 4
        %v364 = vsel %vm320, %v360, %v361
        %vm365 = vcmask 1031168
        %v366 = vsel %vm365, %v353, %v364
        %v367 = vsel %vm320, %v361, %v362
        %v368 = vsel %vm365, %v355, %v367
        %v369 = vsel %vm320, %v362, %v363
        %v370 = vsel %vm365, %v357, %v369
        %v371 = vsel %vm365, %v359, %v363
        %376 = vst [vmem:[#allocation2 + $0x1c] sm:$0x33] %v366
        %377 = vst [vmem:[#allocation2 + $0x24] sm:$0x33] %v368
        %378 = vst [vmem:[#allocation2 + $0x2c] sm:$0x33] %v370
        %379 = vst [vmem:[#allocation2 + $0x34] sm:$0x3] %v371
        %v380 = vld [vmem:[%s227] sm:$0xff]
        %v381 = vld [vmem:[%s227 + $0x8] sm:$0xff]
        %s383 = scalar_lea.vmem [#allocation1], 1
        %384 = vst [vmem:[%s383] ss:$2 sm:$0xff] %v380
        %s386 = scalar_lea.vmem [#allocation1], 17
        %387 = vst [vmem:[%s386] ss:$2 sm:$0xff] %v381
        %v388 = vld.sshfl [vmem:[#allocation1] sm:$0xff pattern:$0x75643120]
        %v390 = vld.sshfl [vmem:[#allocation1 + $0x8] sm:$0xff pattern:$0x75643120]
        %v392 = vld.sshfl [vmem:[#allocation1 + $0x10] sm:$0xff pattern:$0x75643120]
        %v394 = vld.sshfl [vmem:[#allocation1 + $0x18] sm:$0xff pattern:$0x75643120]
        %396 = vrot.lane.b32.xlu0 %v388, 118
        %v397 = vpop.permute.xlu0 %396
        %398 = vrot.lane.b32.xlu0 %v390, 118
        %v399 = vpop.permute.xlu0 %398
        %400 = vrot.lane.b32.xlu0 %v392, 118
        %v401 = vpop.permute.xlu0 %400
        %402 = vrot.lane.b32.xlu0 %v394, 118
        %v403 = vpop.permute.xlu0 %402
        %v404 = vrot.slane %v397, 4
        %v405 = vrot.slane %v399, 4
        %v406 = vrot.slane %v401, 4
        %v407 = vrot.slane %v403, 4
        %v408 = vsel %vm320, %v404, %v405
        %vm409 = vcmask 965632
        %v410 = vsel %vm409, %v397, %v408
        %v411 = vsel %vm320, %v405, %v406
        %v412 = vsel %vm409, %v399, %v411
        %v413 = vsel %vm320, %v406, %v407
        %v414 = vsel %vm409, %v401, %v413
        %v415 = vsel %vm409, %v403, %v407
        %420 = vst [vmem:[#allocation2 + $0x1c] sm:$0xcc] %v410
        %421 = vst [vmem:[#allocation2 + $0x24] sm:$0xcc] %v412
        %422 = vst [vmem:[#allocation2 + $0x2c] sm:$0xcc] %v414
        %423 = vst [vmem:[#allocation2 + $0x34] sm:$0xc] %v415
        %v424 = vld [vmem:[%s227] sm:$0xff]
        %v425 = vld [vmem:[%s227 + $0x8] sm:$0xff]
        %427 = vst [vmem:[#allocation1] ss:$2 sm:$0xff] %v424
        %s429 = scalar_lea.vmem [#allocation1], 16
        %430 = vst [vmem:[%s429] ss:$2 sm:$0xff] %v425
        %v431 = vld.sshfl [vmem:[#allocation1] sm:$0xff pattern:$0x75643120]
        %v433 = vld.sshfl [vmem:[#allocation1 + $0x8] sm:$0xff pattern:$0x75643120]
        %v435 = vld.sshfl [vmem:[#allocation1 + $0x10] sm:$0xff pattern:$0x75643120]
        %v437 = vld.sshfl [vmem:[#allocation1 + $0x18] sm:$0xff pattern:$0x75643120]
        %439 = vrot.lane.b32.xlu0 %v431, 117
        %v440 = vpop.permute.xlu0 %439
        %441 = vrot.lane.b32.xlu0 %v433, 117
        %v442 = vpop.permute.xlu0 %441
        %443 = vrot.lane.b32.xlu0 %v435, 117
        %v444 = vpop.permute.xlu0 %443
        %445 = vrot.lane.b32.xlu0 %v437, 117
        %v446 = vpop.permute.xlu0 %445
        %v447 = vrot.slane %v440, 4
        %v448 = vrot.slane %v442, 4
        %v449 = vrot.slane %v444, 4
        %v450 = vrot.slane %v446, 4
        %v451 = vsel %vm320, %v447, %v448
        %vm452 = vcmask 957440
        %v453 = vsel %vm452, %v440, %v451
        %v454 = vsel %vm320, %v448, %v449
        %v455 = vsel %vm452, %v442, %v454
        %v456 = vsel %vm320, %v449, %v450
        %v457 = vsel %vm452, %v444, %v456
        %v458 = vsel %vm452, %v446, %v450
        %463 = vst [vmem:[#allocation2 + $0x38] sm:$0x33] %v453
        %464 = vst [vmem:[#allocation2 + $0x40] sm:$0x33] %v455
        %465 = vst [vmem:[#allocation2 + $0x48] sm:$0x33] %v457
        %466 = vst [vmem:[#allocation2 + $0x50] sm:$0x3] %v458
        %v467 = vld [vmem:[%s227] sm:$0xff]
        %v468 = vld [vmem:[%s227 + $0x8] sm:$0xff]
        %s470 = scalar_lea.vmem [#allocation1], 1
        %471 = vst [vmem:[%s470] ss:$2 sm:$0xff] %v467
        %s473 = scalar_lea.vmem [#allocation1], 17
        %474 = vst [vmem:[%s473] ss:$2 sm:$0xff] %v468
        %v475 = vld.sshfl [vmem:[#allocation1] sm:$0xff pattern:$0x75643120]
        %v477 = vld.sshfl [vmem:[#allocation1 + $0x8] sm:$0xff pattern:$0x75643120]
        %v479 = vld.sshfl [vmem:[#allocation1 + $0x10] sm:$0xff pattern:$0x75643120]
        %v481 = vld.sshfl [vmem:[#allocation1 + $0x18] sm:$0xff pattern:$0x75643120]
        %483 = vrot.lane.b32.xlu0 %v475, 116
        %v484 = vpop.permute.xlu0 %483
        %485 = vrot.lane.b32.xlu0 %v477, 116
        %v486 = vpop.permute.xlu0 %485
        %487 = vrot.lane.b32.xlu0 %v479, 116
        %v488 = vpop.permute.xlu0 %487
        %489 = vrot.lane.b32.xlu0 %v481, 116
        %v490 = vpop.permute.xlu0 %489
        %v491 = vrot.slane %v484, 4
        %v492 = vrot.slane %v486, 4
        %v493 = vrot.slane %v488, 4
        %v494 = vrot.slane %v490, 4
        %v495 = vsel %vm320, %v491, %v492
        %vm496 = vcmask 949248
        %v497 = vsel %vm496, %v484, %v495
        %v498 = vsel %vm320, %v492, %v493
        %v499 = vsel %vm496, %v486, %v498
        %v500 = vsel %vm320, %v493, %v494
        %v501 = vsel %vm496, %v488, %v500
        %v502 = vsel %vm496, %v490, %v494
        %507 = vst [vmem:[#allocation2 + $0x38] sm:$0xcc] %v497
        %508 = vst [vmem:[#allocation2 + $0x40] sm:$0xcc] %v499
        %509 = vst [vmem:[#allocation2 + $0x48] sm:$0xcc] %v501
        %510 = vst [vmem:[#allocation2 + $0x50] sm:$0xc] %v502
        %v511 = vld [vmem:[%s227] sm:$0xff]
        %v512 = vld [vmem:[%s227 + $0x8] sm:$0xff]
        %514 = vst [vmem:[#allocation1] ss:$2 sm:$0xff] %v511
        %s516 = scalar_lea.vmem [#allocation1], 16
        %517 = vst [vmem:[%s516] ss:$2 sm:$0xff] %v512
        %v518 = vld.sshfl [vmem:[#allocation1] sm:$0xff pattern:$0x75643120]
        %v520 = vld.sshfl [vmem:[#allocation1 + $0x8] sm:$0xff pattern:$0x75643120]
        %v522 = vld.sshfl [vmem:[#allocation1 + $0x10] sm:$0xff pattern:$0x75643120]
        %v524 = vld.sshfl [vmem:[#allocation1 + $0x18] sm:$0xff pattern:$0x75643120]
        %526 = vrot.lane.b32.xlu0 %v518, 108
        %v527 = vpop.permute.xlu0 %526
        %528 = vrot.lane.b32.xlu0 %v520, 108
        %v529 = vpop.permute.xlu0 %528
        %530 = vrot.lane.b32.xlu0 %v522, 108
        %v531 = vpop.permute.xlu0 %530
        %532 = vrot.lane.b32.xlu0 %v524, 108
        %v533 = vpop.permute.xlu0 %532
        %v534 = vrot.slane %v527, 4
        %v535 = vrot.slane %v529, 4
        %v536 = vrot.slane %v531, 4
        %v537 = vrot.slane %v533, 4
        %v538 = vsel %vm320, %v534, %v535
        %vm539 = vcmask 883712
        %v540 = vsel %vm539, %v527, %v538
        %v541 = vsel %vm320, %v535, %v536
        %v542 = vsel %vm539, %v529, %v541
        %v543 = vsel %vm320, %v536, %v537
        %v544 = vsel %vm539, %v531, %v543
        %v545 = vsel %vm539, %v533, %v537
        %550 = vst [vmem:[#allocation2 + $0x54] sm:$0x33] %v540
        %551 = vst [vmem:[#allocation2 + $0x5c] sm:$0x33] %v542
        %552 = vst [vmem:[#allocation2 + $0x64] sm:$0x33] %v544
        %553 = vst [vmem:[#allocation2 + $0x6c] sm:$0x3] %v545
        %v554 = vld [vmem:[%s227] sm:$0xff]
        %v555 = vld [vmem:[%s227 + $0x8] sm:$0xff]
        %s557 = scalar_lea.vmem [#allocation1], 1
        %558 = vst [vmem:[%s557] ss:$2 sm:$0xff] %v554
        %s560 = scalar_lea.vmem [#allocation1], 17
        %561 = vst [vmem:[%s560] ss:$2 sm:$0xff] %v555
        %v562 = vld.sshfl [vmem:[#allocation1] sm:$0xff pattern:$0x75643120]
        %v564 = vld.sshfl [vmem:[#allocation1 + $0x8] sm:$0xff pattern:$0x75643120]
        %v566 = vld.sshfl [vmem:[#allocation1 + $0x10] sm:$0xff pattern:$0x75643120]
        %v568 = vld.sshfl [vmem:[#allocation1 + $0x18] sm:$0xff pattern:$0x75643120]
        %570 = vrot.lane.b32.xlu0 %v562, 107
        %v571 = vpop.permute.xlu0 %570
        %572 = vrot.lane.b32.xlu0 %v564, 107
        %v573 = vpop.permute.xlu0 %572
        %574 = vrot.lane.b32.xlu0 %v566, 107
        %v575 = vpop.permute.xlu0 %574
        %576 = vrot.lane.b32.xlu0 %v568, 107
        %v577 = vpop.permute.xlu0 %576
        %v578 = vrot.slane %v571, 4
        %v579 = vrot.slane %v573, 4
        %v580 = vrot.slane %v575, 4
        %v581 = vrot.slane %v577, 4
        %v582 = vsel %vm320, %v578, %v579
        %vm583 = vcmask 875520
        %v584 = vsel %vm583, %v571, %v582
        %v585 = vsel %vm320, %v579, %v580
        %v586 = vsel %vm583, %v573, %v585
        %v587 = vsel %vm320, %v580, %v581
        %v588 = vsel %vm583, %v575, %v587
        %v589 = vsel %vm583, %v577, %v581
        %594 = vst [vmem:[#allocation2 + $0x54] sm:$0xcc] %v584
        %595 = vst [vmem:[#allocation2 + $0x5c] sm:$0xcc] %v586
        %596 = vst [vmem:[#allocation2 + $0x64] sm:$0xcc] %v588
        %597 = vst [vmem:[#allocation2 + $0x6c] sm:$0xc] %v589
        %v598 = vld [vmem:[%s227] sm:$0xff]
        %v599 = vld [vmem:[%s227 + $0x8] sm:$0xff]
        %601 = vst [vmem:[#allocation1] ss:$2 sm:$0xff] %v598
        %s603 = scalar_lea.vmem [#allocation1], 16
        %604 = vst [vmem:[%s603] ss:$2 sm:$0xff] %v599
        %v605 = vld.sshfl [vmem:[#allocation1] sm:$0xff pattern:$0x75643120]
        %v607 = vld.sshfl [vmem:[#allocation1 + $0x8] sm:$0xff pattern:$0x75643120]
        %v609 = vld.sshfl [vmem:[#allocation1 + $0x10] sm:$0xff pattern:$0x75643120]
        %v611 = vld.sshfl [vmem:[#allocation1 + $0x18] sm:$0xff pattern:$0x75643120]
        %613 = vrot.lane.b32.xlu0 %v605, 106
        %v614 = vpop.permute.xlu0 %613
        %615 = vrot.lane.b32.xlu0 %v607, 106
        %v616 = vpop.permute.xlu0 %615
        %617 = vrot.lane.b32.xlu0 %v609, 106
        %v618 = vpop.permute.xlu0 %617
        %619 = vrot.lane.b32.xlu0 %v611, 106
        %v620 = vpop.permute.xlu0 %619
        %v621 = vrot.slane %v614, 4
        %v622 = vrot.slane %v616, 4
        %v623 = vrot.slane %v618, 4
        %v624 = vrot.slane %v620, 4
        %v625 = vsel %vm320, %v621, %v622
        %vm626 = vcmask 867328
        %v627 = vsel %vm626, %v614, %v625
        %v628 = vsel %vm320, %v622, %v623
        %v629 = vsel %vm626, %v616, %v628
        %v630 = vsel %vm320, %v623, %v624
        %v631 = vsel %vm626, %v618, %v630
        %v632 = vsel %vm626, %v620, %v624
        %637 = vst [vmem:[#allocation2 + $0x70] sm:$0x33] %v627
        %638 = vst [vmem:[#allocation2 + $0x78] sm:$0x33] %v629
        %639 = vst [vmem:[#allocation2 + $0x80] sm:$0x33] %v631
        %640 = vst [vmem:[#allocation2 + $0x88] sm:$0x3] %v632
        %v641 = vld [vmem:[%s227] sm:$0xff]
        %v642 = vld [vmem:[%s227 + $0x8] sm:$0xff]
        %s644 = scalar_lea.vmem [#allocation1], 1
        %645 = vst [vmem:[%s644] ss:$2 sm:$0xff] %v641
        %s647 = scalar_lea.vmem [#allocation1], 17
        %648 = vst [vmem:[%s647] ss:$2 sm:$0xff] %v642
        %v649 = vld.sshfl [vmem:[#allocation1] sm:$0xff pattern:$0x75643120]
        %v651 = vld.sshfl [vmem:[#allocation1 + $0x8] sm:$0xff pattern:$0x75643120]
        %v653 = vld.sshfl [vmem:[#allocation1 + $0x10] sm:$0xff pattern:$0x75643120]
        %v655 = vld.sshfl [vmem:[#allocation1 + $0x18] sm:$0xff pattern:$0x75643120]
        %657 = vrot.lane.b32.xlu0 %v649, 28
        %v658 = vpop.permute.xlu0 %657
        %659 = vrot.lane.b32.xlu0 %v651, 28
        %v660 = vpop.permute.xlu0 %659
        %661 = vrot.lane.b32.xlu0 %v653, 28
        %v662 = vpop.permute.xlu0 %661
        %663 = vrot.lane.b32.xlu0 %v655, 28
        %v664 = vpop.permute.xlu0 %663
        %v665 = vrot.slane %v658, 4
        %v666 = vrot.slane %v660, 4
        %v667 = vrot.slane %v662, 4
        %v668 = vrot.slane %v664, 4
        %v669 = vsel %vm320, %v665, %v666
        %vm670 = vcmask 228352
        %v671 = vsel %vm670, %v658, %v669
        %v672 = vsel %vm320, %v666, %v667
        %v673 = vsel %vm670, %v660, %v672
        %v674 = vsel %vm320, %v667, %v668
        %v675 = vsel %vm670, %v662, %v674
        %v676 = vsel %vm670, %v664, %v668
        %681 = vst [vmem:[#allocation2 + $0x70] sm:$0xcc] %v671
        %682 = vst [vmem:[#allocation2 + $0x78] sm:$0xcc] %v673
        %683 = vst [vmem:[#allocation2 + $0x80] sm:$0xcc] %v675
        %684 = vst [vmem:[#allocation2 + $0x88] sm:$0xc] %v676
        %v685 = vld [vmem:[%s227] sm:$0xff]
        %v686 = vld [vmem:[%s227 + $0x8] sm:$0xff]
        %688 = vst [vmem:[#allocation1] ss:$2 sm:$0xff] %v685
        %s690 = scalar_lea.vmem [#allocation1], 16
        %691 = vst [vmem:[%s690] ss:$2 sm:$0xff] %v686
        %v692 = vld.sshfl [vmem:[#allocation1] sm:$0xff pattern:$0x75643120]
        %v694 = vld.sshfl [vmem:[#allocation1 + $0x8] sm:$0xff pattern:$0x75643120]
        %v696 = vld.sshfl [vmem:[#allocation1 + $0x10] sm:$0xff pattern:$0x75643120]
        %v698 = vld.sshfl [vmem:[#allocation1 + $0x18] sm:$0xff pattern:$0x75643120]
        %700 = vrot.lane.b32.xlu0 %v692, 27
        %v701 = vpop.permute.xlu0 %700
        %702 = vrot.lane.b32.xlu0 %v694, 27
        %v703 = vpop.permute.xlu0 %702
        %704 = vrot.lane.b32.xlu0 %v696, 27
        %v705 = vpop.permute.xlu0 %704
        %706 = vrot.lane.b32.xlu0 %v698, 27
        %v707 = vpop.permute.xlu0 %706
        %v708 = vrot.slane %v701, 4
        %v709 = vrot.slane %v703, 4
        %v710 = vrot.slane %v705, 4
        %v711 = vrot.slane %v707, 4
        %v712 = vsel %vm320, %v708, %v709
        %vm713 = vcmask 220160
        %v714 = vsel %vm713, %v701, %v712
        %v715 = vsel %vm320, %v709, %v710
        %v716 = vsel %vm713, %v703, %v715
        %v717 = vsel %vm320, %v710, %v711
        %v718 = vsel %vm713, %v705, %v717
        %v719 = vsel %vm713, %v707, %v711
        %724 = vst [vmem:[#allocation2 + $0x8c] sm:$0x33] %v714
        %725 = vst [vmem:[#allocation2 + $0x94] sm:$0x33] %v716
        %726 = vst [vmem:[#allocation2 + $0x9c] sm:$0x33] %v718
        %727 = vst [vmem:[#allocation2 + $0xa4] sm:$0x3] %v719
        %v728 = vld [vmem:[%s227] sm:$0xff]
        %v729 = vld [vmem:[%s227 + $0x8] sm:$0xff]
        %s731 = scalar_lea.vmem [#allocation1], 1
        %732 = vst [vmem:[%s731] ss:$2 sm:$0xff] %v728
        %s734 = scalar_lea.vmem [#allocation1], 17
        %735 = vst [vmem:[%s734] ss:$2 sm:$0xff] %v729
        %v736 = vld.sshfl [vmem:[#allocation1] sm:$0xff pattern:$0x75643120]
        %v738 = vld.sshfl [vmem:[#allocation1 + $0x8] sm:$0xff pattern:$0x75643120]
        %v740 = vld.sshfl [vmem:[#allocation1 + $0x10] sm:$0xff pattern:$0x75643120]
        %v742 = vld.sshfl [vmem:[#allocation1 + $0x18] sm:$0xff pattern:$0x75643120]
        %744 = vrot.lane.b32.xlu0 %v736, 26
        %v745 = vpop.permute.xlu0 %744
        %746 = vrot.lane.b32.xlu0 %v738, 26
        %v747 = vpop.permute.xlu0 %746
        %748 = vrot.lane.b32.xlu0 %v740, 26
        %v749 = vpop.permute.xlu0 %748
        %750 = vrot.lane.b32.xlu0 %v742, 26
        %v751 = vpop.permute.xlu0 %750
        %v752 = vrot.slane %v745, 4
        %v753 = vrot.slane %v747, 4
        %v754 = vrot.slane %v749, 4
        %v755 = vrot.slane %v751, 4
        %v756 = vsel %vm320, %v752, %v753
        %vm757 = vcmask 211968
        %v758 = vsel %vm757, %v745, %v756
        %v759 = vsel %vm320, %v753, %v754
        %v760 = vsel %vm757, %v747, %v759
        %v761 = vsel %vm320, %v754, %v755
        %v762 = vsel %vm757, %v749, %v761
        %v763 = vsel %vm757, %v751, %v755
        %768 = vst [vmem:[#allocation2 + $0x8c] sm:$0xcc] %v758
        %769 = vst [vmem:[#allocation2 + $0x94] sm:$0xcc] %v760
        %770 = vst [vmem:[#allocation2 + $0x9c] sm:$0xcc] %v762
        %771 = vst [vmem:[#allocation2 + $0xa4] sm:$0xc] %v763
        %v772 = vld [vmem:[%s227] sm:$0xff]
        %v773 = vld [vmem:[%s227 + $0x8] sm:$0xff]
        %775 = vst [vmem:[#allocation1] ss:$2 sm:$0xff] %v772
        %s777 = scalar_lea.vmem [#allocation1], 16
        %778 = vst [vmem:[%s777] ss:$2 sm:$0xff] %v773
        %v779 = vld.sshfl [vmem:[#allocation1] sm:$0xff pattern:$0x75643120]
        %v781 = vld.sshfl [vmem:[#allocation1 + $0x8] sm:$0xff pattern:$0x75643120]
        %v783 = vld.sshfl [vmem:[#allocation1 + $0x10] sm:$0xff pattern:$0x75643120]
        %v785 = vld.sshfl [vmem:[#allocation1 + $0x18] sm:$0xff pattern:$0x75643120]
        %787 = vrot.lane.b32.xlu0 %v779, 18
        %v788 = vpop.permute.xlu0 %787
        %789 = vrot.lane.b32.xlu0 %v781, 18
        %v790 = vpop.permute.xlu0 %789
        %791 = vrot.lane.b32.xlu0 %v783, 18
        %v792 = vpop.permute.xlu0 %791
        %793 = vrot.lane.b32.xlu0 %v785, 18
        %v794 = vpop.permute.xlu0 %793
        %v795 = vrot.slane %v788, 4
        %v796 = vrot.slane %v790, 4
        %v797 = vrot.slane %v792, 4
        %v798 = vrot.slane %v794, 4
        %v799 = vsel %vm320, %v795, %v796
        %vm800 = vcmask 146432
        %v801 = vsel %vm800, %v788, %v799
        %v802 = vsel %vm320, %v796, %v797
        %v803 = vsel %vm800, %v790, %v802
        %v804 = vsel %vm320, %v797, %v798
        %v805 = vsel %vm800, %v792, %v804
        %v806 = vsel %vm800, %v794, %v798
        %811 = vst [vmem:[#allocation2 + $0xa8] sm:$0x33] %v801
        %812 = vst [vmem:[#allocation2 + $0xb0] sm:$0x33] %v803
        %813 = vst [vmem:[#allocation2 + $0xb8] sm:$0x33] %v805
        %814 = vst [vmem:[#allocation2 + $0xc0] sm:$0x3] %v806
        %v815 = vld [vmem:[%s227] sm:$0xff]
        %v816 = vld [vmem:[%s227 + $0x8] sm:$0xff]
        %s818 = scalar_lea.vmem [#allocation1], 1
        %819 = vst [vmem:[%s818] ss:$2 sm:$0xff] %v815
        %s821 = scalar_lea.vmem [#allocation1], 17
        %822 = vst [vmem:[%s821] ss:$2 sm:$0xff] %v816
        %v823 = vld.sshfl [vmem:[#allocation1] sm:$0xff pattern:$0x75643120]
        %v825 = vld.sshfl [vmem:[#allocation1 + $0x8] sm:$0xff pattern:$0x75643120]
        %v827 = vld.sshfl [vmem:[#allocation1 + $0x10] sm:$0xff pattern:$0x75643120]
        %v829 = vld.sshfl [vmem:[#allocation1 + $0x18] sm:$0xff pattern:$0x75643120]
        %831 = vrot.lane.b32.xlu0 %v823, 17
        %v832 = vpop.permute.xlu0 %831
        %833 = vrot.lane.b32.xlu0 %v825, 17
        %v834 = vpop.permute.xlu0 %833
        %835 = vrot.lane.b32.xlu0 %v827, 17
        %v836 = vpop.permute.xlu0 %835
        %837 = vrot.lane.b32.xlu0 %v829, 17
        %v838 = vpop.permute.xlu0 %837
        %v839 = vrot.slane %v832, 4
        %v840 = vrot.slane %v834, 4
        %v841 = vrot.slane %v836, 4
        %v842 = vrot.slane %v838, 4
        %v843 = vsel %vm320, %v839, %v840
        %vm844 = vcmask 138240
        %v845 = vsel %vm844, %v832, %v843
        %v846 = vsel %vm320, %v840, %v841
        %v847 = vsel %vm844, %v834, %v846
        %v848 = vsel %vm320, %v841, %v842
        %v849 = vsel %vm844, %v836, %v848
        %v850 = vsel %vm844, %v838, %v842
        %855 = vst [vmem:[#allocation2 + $0xa8] sm:$0xcc] %v845
        %856 = vst [vmem:[#allocation2 + $0xb0] sm:$0xcc] %v847
        %857 = vst [vmem:[#allocation2 + $0xb8] sm:$0xcc] %v849
        %858 = vst [vmem:[#allocation2 + $0xc0] sm:$0xc] %v850
        %v859 = vld [vmem:[%s227] sm:$0xff]
        %v860 = vld [vmem:[%s227 + $0x8] sm:$0xff]
        %862 = vst [vmem:[#allocation1] ss:$2 sm:$0xff] %v859
        %s864 = scalar_lea.vmem [#allocation1], 16
        %865 = vst [vmem:[%s864] ss:$2 sm:$0xff] %v860
        %v866 = vld.sshfl [vmem:[#allocation1] sm:$0xff pattern:$0x75643120]
        %v868 = vld.sshfl [vmem:[#allocation1 + $0x8] sm:$0xff pattern:$0x75643120]
        %v870 = vld.sshfl [vmem:[#allocation1 + $0x10] sm:$0xff pattern:$0x75643120]
        %v872 = vld.sshfl [vmem:[#allocation1 + $0x18] sm:$0xff pattern:$0x75643120]
        %874 = vrot.lane.b32.xlu0 %v866, 16
        %v875 = vpop.permute.xlu0 %874
        %876 = vrot.lane.b32.xlu0 %v868, 16
        %v877 = vpop.permute.xlu0 %876
        %878 = vrot.lane.b32.xlu0 %v870, 16
        %v879 = vpop.permute.xlu0 %878
        %880 = vrot.lane.b32.xlu0 %v872, 16
        %v881 = vpop.permute.xlu0 %880
        %v882 = vrot.slane %v875, 4
        %v883 = vrot.slane %v877, 4
        %v884 = vrot.slane %v879, 4
        %v885 = vrot.slane %v881, 4
        %v886 = vsel %vm320, %v882, %v883
        %vm887 = vcmask 130048
        %v888 = vsel %vm887, %v875, %v886
        %v889 = vsel %vm320, %v883, %v884
        %v890 = vsel %vm887, %v877, %v889
        %v891 = vsel %vm320, %v884, %v885
        %v892 = vsel %vm887, %v879, %v891
        %v893 = vsel %vm887, %v881, %v885
        %898 = vst [vmem:[#allocation2 + $0xc4] sm:$0x33] %v888
        %899 = vst [vmem:[#allocation2 + $0xcc] sm:$0x33] %v890
        %900 = vst [vmem:[#allocation2 + $0xd4] sm:$0x33] %v892
        %901 = vst [vmem:[#allocation2 + $0xdc] sm:$0x3] %v893
        %v902 = vld [vmem:[%s227] sm:$0xff]
        %v903 = vld [vmem:[%s227 + $0x8] sm:$0xff]
        %s905 = scalar_lea.vmem [#allocation1], 1
        %906 = vst [vmem:[%s905] ss:$2 sm:$0xff] %v902
        %s908 = scalar_lea.vmem [#allocation1], 17
        %909 = vst [vmem:[%s908] ss:$2 sm:$0xff] %v903
        %v910 = vld.sshfl [vmem:[#allocation1] sm:$0xff pattern:$0x75643120]
        %v912 = vld.sshfl [vmem:[#allocation1 + $0x8] sm:$0xff pattern:$0x75643120]
        %v914 = vld.sshfl [vmem:[#allocation1 + $0x10] sm:$0xff pattern:$0x75643120]
        %v916 = vld.sshfl [vmem:[#allocation1 + $0x18] sm:$0xff pattern:$0x75643120]
        %918 = vrot.lane.b32.xlu0 %v910, 8
        %v919 = vpop.permute.xlu0 %918
        %920 = vrot.lane.b32.xlu0 %v912, 8
        %v921 = vpop.permute.xlu0 %920
        %922 = vrot.lane.b32.xlu0 %v914, 8
        %v923 = vpop.permute.xlu0 %922
        %924 = vrot.lane.b32.xlu0 %v916, 8
        %v925 = vpop.permute.xlu0 %924
        %v926 = vrot.slane %v919, 4
        %v927 = vrot.slane %v921, 4
        %v928 = vrot.slane %v923, 4
        %v929 = vrot.slane %v925, 4
        %v930 = vsel %vm320, %v926, %v927
        %vm931 = vcmask 64512
        %v932 = vsel %vm931, %v919, %v930
        %v933 = vsel %vm320, %v927, %v928
        %v934 = vsel %vm931, %v921, %v933
        %v935 = vsel %vm320, %v928, %v929
        %v936 = vsel %vm931, %v923, %v935
        %v937 = vsel %vm931, %v925, %v929
        %942 = vst [vmem:[#allocation2 + $0xc4] sm:$0xcc] %v932
        %943 = vst [vmem:[#allocation2 + $0xcc] sm:$0xcc] %v934
        %944 = vst [vmem:[#allocation2 + $0xd4] sm:$0xcc] %v936
        %945 = vst [vmem:[#allocation2 + $0xdc] sm:$0xc] %v937
        %v946 = vld [vmem:[%s227] sm:$0xff]
        %v947 = vld [vmem:[%s227 + $0x8] sm:$0xff]
        %949 = vst [vmem:[#allocation1] ss:$2 sm:$0xff] %v946
        %s951 = scalar_lea.vmem [#allocation1], 16
        %952 = vst [vmem:[%s951] ss:$2 sm:$0xff] %v947
        %v953 = vld.sshfl [vmem:[#allocation1] sm:$0xff pattern:$0x75643120]
        %v955 = vld.sshfl [vmem:[#allocation1 + $0x8] sm:$0xff pattern:$0x75643120]
        %v957 = vld.sshfl [vmem:[#allocation1 + $0x10] sm:$0xff pattern:$0x75643120]
        %v959 = vld.sshfl [vmem:[#allocation1 + $0x18] sm:$0xff pattern:$0x75643120]
        %961 = vrot.lane.b32.xlu0 %v953, 7
        %v962 = vpop.permute.xlu0 %961
        %963 = vrot.lane.b32.xlu0 %v955, 7
        %v964 = vpop.permute.xlu0 %963
        %965 = vrot.lane.b32.xlu0 %v957, 7
        %v966 = vpop.permute.xlu0 %965
        %967 = vrot.lane.b32.xlu0 %v959, 7
        %v968 = vpop.permute.xlu0 %967
        %v969 = vrot.slane %v962, 4
        %v970 = vrot.slane %v964, 4
        %v971 = vrot.slane %v966, 4
        %v972 = vrot.slane %v968, 4
        %v973 = vsel %vm320, %v969, %v970
        %vm974 = vcmask 56320
        %v975 = vsel %vm974, %v962, %v973
        %v976 = vsel %vm320, %v970, %v971
        %v977 = vsel %vm974, %v964, %v976
        %v978 = vsel %vm320, %v971, %v972
        %v979 = vsel %vm974, %v966, %v978
        %v980 = vsel %vm974, %v968, %v972
        %985 = vst [vmem:[#allocation2 + $0xe0] sm:$0x33] %v975
        %986 = vst [vmem:[#allocation2 + $0xe8] sm:$0x33] %v977
        %987 = vst [vmem:[#allocation2 + $0xf0] sm:$0x33] %v979
        %988 = vst [vmem:[#allocation2 + $0xf8] sm:$0x3] %v980
        %v989 = vld [vmem:[%s227] sm:$0xff]
        %v990 = vld [vmem:[%s227 + $0x8] sm:$0xff]
        %s992 = scalar_lea.vmem [#allocation1], 1
        %993 = vst [vmem:[%s992] ss:$2 sm:$0xff] %v989
        %s995 = scalar_lea.vmem [#allocation1], 17
        %996 = vst [vmem:[%s995] ss:$2 sm:$0xff] %v990
        %v997 = vld.sshfl [vmem:[#allocation1] sm:$0xff pattern:$0x75643120]
        %v999 = vld.sshfl [vmem:[#allocation1 + $0x8] sm:$0xff pattern:$0x75643120]
        %v1001 = vld.sshfl [vmem:[#allocation1 + $0x10] sm:$0xff pattern:$0x75643120]
        %v1003 = vld.sshfl [vmem:[#allocation1 + $0x18] sm:$0xff pattern:$0x75643120]
        %1005 = vrot.lane.b32.xlu0 %v997, 6
        %v1006 = vpop.permute.xlu0 %1005
        %1007 = vrot.lane.b32.xlu0 %v999, 6
        %v1008 = vpop.permute.xlu0 %1007
        %1009 = vrot.lane.b32.xlu0 %v1001, 6
        %v1010 = vpop.permute.xlu0 %1009
        %1011 = vrot.lane.b32.xlu0 %v1003, 6
        %v1012 = vpop.permute.xlu0 %1011
        %v1013 = vrot.slane %v1006, 4
        %v1014 = vrot.slane %v1008, 4
        %v1015 = vrot.slane %v1010, 4
        %v1016 = vrot.slane %v1012, 4
        %v1017 = vsel %vm320, %v1013, %v1014
        %vm1018 = vcmask 48128
        %v1019 = vsel %vm1018, %v1006, %v1017
        %v1020 = vsel %vm320, %v1014, %v1015
        %v1021 = vsel %vm1018, %v1008, %v1020
        %v1022 = vsel %vm320, %v1015, %v1016
        %v1023 = vsel %vm1018, %v1010, %v1022
        %v1024 = vsel %vm1018, %v1012, %v1016
        %1029 = vst [vmem:[#allocation2 + $0xe0] sm:$0xcc] %v1019
        %1030 = vst [vmem:[#allocation2 + $0xe8] sm:$0xcc] %v1021
        %1031 = vst [vmem:[#allocation2 + $0xf0] sm:$0xcc] %v1023
        %1032 = vst [vmem:[#allocation2 + $0xf8] sm:$0xc] %v1024
        %v1033 = vld [vmem:[%s227 + $0x2] sm:$0xff]
        %v1034 = vld [vmem:[%s227 + $0xa] sm:$0xff]
        %1036 = vst [vmem:[#allocation1] ss:$2 sm:$0xff] %v1033
        %s1038 = scalar_lea.vmem [#allocation1], 16
        %1039 = vst [vmem:[%s1038] ss:$2 sm:$0xff] %v1034
        %v1040 = vld.sshfl [vmem:[#allocation1] sm:$0xff pattern:$0x75643120]
        %v1042 = vld.sshfl [vmem:[#allocation1 + $0x8] sm:$0xff pattern:$0x75643120]
        %v1044 = vld.sshfl [vmem:[#allocation1 + $0x10] sm:$0xff pattern:$0x75643120]
        %v1046 = vld.sshfl [vmem:[#allocation1 + $0x18] sm:$0xff pattern:$0x75643120]
        %1048 = vrot.lane.b32.xlu0 %v1040, 56
        %v1049 = vpop.permute.xlu0 %1048
        %1050 = vrot.lane.b32.xlu0 %v1042, 56
        %v1051 = vpop.permute.xlu0 %1050
        %1052 = vrot.lane.b32.xlu0 %v1044, 56
        %v1053 = vpop.permute.xlu0 %1052
        %1054 = vrot.lane.b32.xlu0 %v1046, 56
        %v1055 = vpop.permute.xlu0 %1054
        %v1056 = vrot.slane %v1049, 4
        %v1057 = vrot.slane %v1051, 4
        %v1058 = vrot.slane %v1053, 4
        %v1059 = vrot.slane %v1055, 4
        %v1060 = vsel %vm320, %v1056, %v1057
        %vm1061 = vcmask 457728
        %v1062 = vsel %vm1061, %v1049, %v1060
        %v1063 = vsel %vm320, %v1057, %v1058
        %v1064 = vsel %vm1061, %v1051, %v1063
        %v1065 = vsel %vm320, %v1058, %v1059
        %v1066 = vsel %vm1061, %v1053, %v1065
        %v1067 = vsel %vm1061, %v1055, %v1059
        %1072 = vst [vmem:[#allocation2 + $0xfc] sm:$0x33] %v1062
        %1073 = vst [vmem:[#allocation2 + $0x104] sm:$0x33] %v1064
        %1074 = vst [vmem:[#allocation2 + $0x10c] sm:$0x33] %v1066
        %1075 = vst [vmem:[#allocation2 + $0x114] sm:$0x3] %v1067
        %v1076 = vld [vmem:[%s227 + $0x2] sm:$0xff]
        %v1077 = vld [vmem:[%s227 + $0xa] sm:$0xff]
        %s1079 = scalar_lea.vmem [#allocation1], 1
        %1080 = vst [vmem:[%s1079] ss:$2 sm:$0xff] %v1076
        %s1082 = scalar_lea.vmem [#allocation1], 17
        %1083 = vst [vmem:[%s1082] ss:$2 sm:$0xff] %v1077
        %v1084 = vld.sshfl [vmem:[#allocation1] sm:$0xff pattern:$0x75643120]
        %v1086 = vld.sshfl [vmem:[#allocation1 + $0x8] sm:$0xff pattern:$0x75643120]
        %v1088 = vld.sshfl [vmem:[#allocation1 + $0x10] sm:$0xff pattern:$0x75643120]
        %v1090 = vld.sshfl [vmem:[#allocation1 + $0x18] sm:$0xff pattern:$0x75643120]
        %1092 = vrot.lane.b32.xlu0 %v1084, 55
        %v1093 = vpop.permute.xlu0 %1092
        %1094 = vrot.lane.b32.xlu0 %v1086, 55
        %v1095 = vpop.permute.xlu0 %1094
        %1096 = vrot.lane.b32.xlu0 %v1088, 55
        %v1097 = vpop.permute.xlu0 %1096
        %1098 = vrot.lane.b32.xlu0 %v1090, 55
        %v1099 = vpop.permute.xlu0 %1098
        %v1100 = vrot.slane %v1093, 4
        %v1101 = vrot.slane %v1095, 4
        %v1102 = vrot.slane %v1097, 4
        %v1103 = vrot.slane %v1099, 4
        %v1104 = vsel %vm320, %v1100, %v1101
        %vm1105 = vcmask 449536
        %v1106 = vsel %vm1105, %v1093, %v1104
        %v1107 = vsel %vm320, %v1101, %v1102
        %v1108 = vsel %vm1105, %v1095, %v1107
        %v1109 = vsel %vm320, %v1102, %v1103
        %v1110 = vsel %vm1105, %v1097, %v1109
        %v1111 = vsel %vm1105, %v1099, %v1103
        %1116 = vst [vmem:[#allocation2 + $0xfc] sm:$0xcc] %v1106
        %1117 = vst [vmem:[#allocation2 + $0x104] sm:$0xcc] %v1108
        %1118 = vst [vmem:[#allocation2 + $0x10c] sm:$0xcc] %v1110
        %1119 = vst [vmem:[#allocation2 + $0x114] sm:$0xc] %v1111
        %v1120 = vld [vmem:[%s227 + $0x2] sm:$0xff]
        %v1121 = vld [vmem:[%s227 + $0xa] sm:$0xff]
        %1123 = vst [vmem:[#allocation1] ss:$2 sm:$0xff] %v1120
        %s1125 = scalar_lea.vmem [#allocation1], 16
        %1126 = vst [vmem:[%s1125] ss:$2 sm:$0xff] %v1121
        %v1127 = vld.sshfl [vmem:[#allocation1] sm:$0xff pattern:$0x75643120]
        %v1129 = vld.sshfl [vmem:[#allocation1 + $0x8] sm:$0xff pattern:$0x75643120]
        %v1131 = vld.sshfl [vmem:[#allocation1 + $0x10] sm:$0xff pattern:$0x75643120]
        %v1133 = vld.sshfl [vmem:[#allocation1 + $0x18] sm:$0xff pattern:$0x75643120]
        %1135 = vrot.lane.b32.xlu0 %v1127, 54
        %v1136 = vpop.permute.xlu0 %1135
        %1137 = vrot.lane.b32.xlu0 %v1129, 54
        %v1138 = vpop.permute.xlu0 %1137
        %1139 = vrot.lane.b32.xlu0 %v1131, 54
        %v1140 = vpop.permute.xlu0 %1139
        %1141 = vrot.lane.b32.xlu0 %v1133, 54
        %v1142 = vpop.permute.xlu0 %1141
        %v1143 = vrot.slane %v1136, 4
        %v1144 = vrot.slane %v1138, 4
        %v1145 = vrot.slane %v1140, 4
        %v1146 = vrot.slane %v1142, 4
        %v1147 = vsel %vm320, %v1143, %v1144
        %vm1148 = vcmask 441344
        %v1149 = vsel %vm1148, %v1136, %v1147
        %v1150 = vsel %vm320, %v1144, %v1145
        %v1151 = vsel %vm1148, %v1138, %v1150
        %v1152 = vsel %vm320, %v1145, %v1146
        %v1153 = vsel %vm1148, %v1140, %v1152
        %v1154 = vsel %vm1148, %v1142, %v1146
        %1159 = vst [vmem:[#allocation2 + $0x118] sm:$0x33] %v1149
        %1160 = vst [vmem:[#allocation2 + $0x120] sm:$0x33] %v1151
        %1161 = vst [vmem:[#allocation2 + $0x128] sm:$0x33] %v1153
        %1162 = vst [vmem:[#allocation2 + $0x130] sm:$0x3] %v1154
        %v1163 = vld [vmem:[%s227 + $0x2] sm:$0xff]
        %v1164 = vld [vmem:[%s227 + $0xa] sm:$0xff]
        %s1166 = scalar_lea.vmem [#allocation1], 1
        %1167 = vst [vmem:[%s1166] ss:$2 sm:$0xff] %v1163
        %s1169 = scalar_lea.vmem [#allocation1], 17
        %1170 = vst [vmem:[%s1169] ss:$2 sm:$0xff] %v1164
        %v1171 = vld.sshfl [vmem:[#allocation1] sm:$0xff pattern:$0x75643120]
        %v1173 = vld.sshfl [vmem:[#allocation1 + $0x8] sm:$0xff pattern:$0x75643120]
        %v1175 = vld.sshfl [vmem:[#allocation1 + $0x10] sm:$0xff pattern:$0x75643120]
        %v1177 = vld.sshfl [vmem:[#allocation1 + $0x18] sm:$0xff pattern:$0x75643120]
        %1179 = vrot.lane.b32.xlu0 %v1171, 46
        %v1180 = vpop.permute.xlu0 %1179
        %1181 = vrot.lane.b32.xlu0 %v1173, 46
        %v1182 = vpop.permute.xlu0 %1181
        %1183 = vrot.lane.b32.xlu0 %v1175, 46
        %v1184 = vpop.permute.xlu0 %1183
        %1185 = vrot.lane.b32.xlu0 %v1177, 46
        %v1186 = vpop.permute.xlu0 %1185
        %v1187 = vrot.slane %v1180, 4
        %v1188 = vrot.slane %v1182, 4
        %v1189 = vrot.slane %v1184, 4
        %v1190 = vrot.slane %v1186, 4
        %v1191 = vsel %vm320, %v1187, %v1188
        %vm1192 = vcmask 375808
        %v1193 = vsel %vm1192, %v1180, %v1191
        %v1194 = vsel %vm320, %v1188, %v1189
        %v1195 = vsel %vm1192, %v1182, %v1194
        %v1196 = vsel %vm320, %v1189, %v1190
        %v1197 = vsel %vm1192, %v1184, %v1196
        %v1198 = vsel %vm1192, %v1186, %v1190
        %1203 = vst [vmem:[#allocation2 + $0x118] sm:$0xcc] %v1193
        %1204 = vst [vmem:[#allocation2 + $0x120] sm:$0xcc] %v1195
        %1205 = vst [vmem:[#allocation2 + $0x128] sm:$0xcc] %v1197
        %1206 = vst [vmem:[#allocation2 + $0x130] sm:$0xc] %v1198
        %v1207 = vld [vmem:[%s227 + $0x2] sm:$0xff]
        %v1208 = vld [vmem:[%s227 + $0xa] sm:$0xff]
        %1210 = vst [vmem:[#allocation1] ss:$2 sm:$0xff] %v1207
        %s1212 = scalar_lea.vmem [#allocation1], 16
        %1213 = vst [vmem:[%s1212] ss:$2 sm:$0xff] %v1208
        %v1214 = vld.sshfl [vmem:[#allocation1] sm:$0xff pattern:$0x75643120]
        %v1216 = vld.sshfl [vmem:[#allocation1 + $0x8] sm:$0xff pattern:$0x75643120]
        %v1218 = vld.sshfl [vmem:[#allocation1 + $0x10] sm:$0xff pattern:$0x75643120]
        %v1220 = vld.sshfl [vmem:[#allocation1 + $0x18] sm:$0xff pattern:$0x75643120]
        %1222 = vrot.lane.b32.xlu0 %v1214, 45
        %v1223 = vpop.permute.xlu0 %1222
        %1224 = vrot.lane.b32.xlu0 %v1216, 45
        %v1225 = vpop.permute.xlu0 %1224
        %1226 = vrot.lane.b32.xlu0 %v1218, 45
        %v1227 = vpop.permute.xlu0 %1226
        %1228 = vrot.lane.b32.xlu0 %v1220, 45
        %v1229 = vpop.permute.xlu0 %1228
        %v1230 = vrot.slane %v1223, 4
        %v1231 = vrot.slane %v1225, 4
        %v1232 = vrot.slane %v1227, 4
        %v1233 = vrot.slane %v1229, 4
        %v1234 = vsel %vm320, %v1230, %v1231
        %vm1235 = vcmask 367616
        %v1236 = vsel %vm1235, %v1223, %v1234
        %v1237 = vsel %vm320, %v1231, %v1232
        %v1238 = vsel %vm1235, %v1225, %v1237
        %v1239 = vsel %vm320, %v1232, %v1233
        %v1240 = vsel %vm1235, %v1227, %v1239
        %v1241 = vsel %vm1235, %v1229, %v1233
        %1246 = vst [vmem:[#allocation2 + $0x134] sm:$0x33] %v1236
        %1247 = vst [vmem:[#allocation2 + $0x13c] sm:$0x33] %v1238
        %1248 = vst [vmem:[#allocation2 + $0x144] sm:$0x33] %v1240
        %1249 = vst [vmem:[#allocation2 + $0x14c] sm:$0x3] %v1241
        %v1250 = vld [vmem:[%s227 + $0x2] sm:$0xff]
        %v1251 = vld [vmem:[%s227 + $0xa] sm:$0xff]
        %s1253 = scalar_lea.vmem [#allocation1], 1
        %1254 = vst [vmem:[%s1253] ss:$2 sm:$0xff] %v1250
        %s1256 = scalar_lea.vmem [#allocation1], 17
        %1257 = vst [vmem:[%s1256] ss:$2 sm:$0xff] %v1251
        %v1258 = vld.sshfl [vmem:[#allocation1] sm:$0xff pattern:$0x75643120]
        %v1260 = vld.sshfl [vmem:[#allocation1 + $0x8] sm:$0xff pattern:$0x75643120]
        %v1262 = vld.sshfl [vmem:[#allocation1 + $0x10] sm:$0xff pattern:$0x75643120]
        %v1264 = vld.sshfl [vmem:[#allocation1 + $0x18] sm:$0xff pattern:$0x75643120]
        %1266 = vrot.lane.b32.xlu0 %v1258, 44
        %v1267 = vpop.permute.xlu0 %1266
        %1268 = vrot.lane.b32.xlu0 %v1260, 44
        %v1269 = vpop.permute.xlu0 %1268
        %1270 = vrot.lane.b32.xlu0 %v1262, 44
        %v1271 = vpop.permute.xlu0 %1270
        %1272 = vrot.lane.b32.xlu0 %v1264, 44
        %v1273 = vpop.permute.xlu0 %1272
        %v1274 = vrot.slane %v1267, 4
        %v1275 = vrot.slane %v1269, 4
        %v1276 = vrot.slane %v1271, 4
        %v1277 = vrot.slane %v1273, 4
        %v1278 = vsel %vm320, %v1274, %v1275
        %vm1279 = vcmask 359424
        %v1280 = vsel %vm1279, %v1267, %v1278
        %v1281 = vsel %vm320, %v1275, %v1276
        %v1282 = vsel %vm1279, %v1269, %v1281
        %v1283 = vsel %vm320, %v1276, %v1277
        %v1284 = vsel %vm1279, %v1271, %v1283
        %v1285 = vsel %vm1279, %v1273, %v1277
        %1290 = vst [vmem:[#allocation2 + $0x134] sm:$0xcc] %v1280
        %1291 = vst [vmem:[#allocation2 + $0x13c] sm:$0xcc] %v1282
        %1292 = vst [vmem:[#allocation2 + $0x144] sm:$0xcc] %v1284
        %1293 = vst [vmem:[#allocation2 + $0x14c] sm:$0xc] %v1285
        %v1294 = vld [vmem:[%s227 + $0x2] sm:$0xff]
        %v1295 = vld [vmem:[%s227 + $0xa] sm:$0xff]
        %1297 = vst [vmem:[#allocation1] ss:$2 sm:$0xff] %v1294
        %s1299 = scalar_lea.vmem [#allocation1], 16
        %1300 = vst [vmem:[%s1299] ss:$2 sm:$0xff] %v1295
        %v1301 = vld.sshfl [vmem:[#allocation1] sm:$0xff pattern:$0x75643120]
        %v1303 = vld.sshfl [vmem:[#allocation1 + $0x8] sm:$0xff pattern:$0x75643120]
        %v1305 = vld.sshfl [vmem:[#allocation1 + $0x10] sm:$0xff pattern:$0x75643120]
        %v1307 = vld.sshfl [vmem:[#allocation1 + $0x18] sm:$0xff pattern:$0x75643120]
        %1309 = vrot.lane.b32.xlu0 %v1301, 36
        %v1310 = vpop.permute.xlu0 %1309
        %1311 = vrot.lane.b32.xlu0 %v1303, 36
        %v1312 = vpop.permute.xlu0 %1311
        %1313 = vrot.lane.b32.xlu0 %v1305, 36
        %v1314 = vpop.permute.xlu0 %1313
        %1315 = vrot.lane.b32.xlu0 %v1307, 36
        %v1316 = vpop.permute.xlu0 %1315
        %v1317 = vrot.slane %v1310, 4
        %v1318 = vrot.slane %v1312, 4
        %v1319 = vrot.slane %v1314, 4
        %v1320 = vrot.slane %v1316, 4
        %v1321 = vsel %vm320, %v1317, %v1318
        %vm1322 = vcmask 293888
        %v1323 = vsel %vm1322, %v1310, %v1321
        %v1324 = vsel %vm320, %v1318, %v1319
        %v1325 = vsel %vm1322, %v1312, %v1324
        %v1326 = vsel %vm320, %v1319, %v1320
        %v1327 = vsel %vm1322, %v1314, %v1326
        %v1328 = vsel %vm1322, %v1316, %v1320
        %1333 = vst [vmem:[#allocation2 + $0x150] sm:$0x33] %v1323
        %1334 = vst [vmem:[#allocation2 + $0x158] sm:$0x33] %v1325
        %1335 = vst [vmem:[#allocation2 + $0x160] sm:$0x33] %v1327
        %1336 = vst [vmem:[#allocation2 + $0x168] sm:$0x3] %v1328
        %v1337 = vld [vmem:[%s227 + $0x2] sm:$0xff]
        %v1338 = vld [vmem:[%s227 + $0xa] sm:$0xff]
        %s1340 = scalar_lea.vmem [#allocation1], 1
        %1341 = vst [vmem:[%s1340] ss:$2 sm:$0xff] %v1337
        %s1343 = scalar_lea.vmem [#allocation1], 17
        %1344 = vst [vmem:[%s1343] ss:$2 sm:$0xff] %v1338
        %v1345 = vld.sshfl [vmem:[#allocation1] sm:$0xff pattern:$0x75643120]
        %v1347 = vld.sshfl [vmem:[#allocation1 + $0x8] sm:$0xff pattern:$0x75643120]
        %v1349 = vld.sshfl [vmem:[#allocation1 + $0x10] sm:$0xff pattern:$0x75643120]
        %v1351 = vld.sshfl [vmem:[#allocation1 + $0x18] sm:$0xff pattern:$0x75643120]
        %1353 = vrot.lane.b32.xlu0 %v1345, 35
        %v1354 = vpop.permute.xlu0 %1353
        %1355 = vrot.lane.b32.xlu0 %v1347, 35
        %v1356 = vpop.permute.xlu0 %1355
        %1357 = vrot.lane.b32.xlu0 %v1349, 35
        %v1358 = vpop.permute.xlu0 %1357
        %1359 = vrot.lane.b32.xlu0 %v1351, 35
        %v1360 = vpop.permute.xlu0 %1359
        %v1361 = vrot.slane %v1354, 4
        %v1362 = vrot.slane %v1356, 4
        %v1363 = vrot.slane %v1358, 4
        %v1364 = vrot.slane %v1360, 4
        %v1365 = vsel %vm320, %v1361, %v1362
        %vm1366 = vcmask 285696
        %v1367 = vsel %vm1366, %v1354, %v1365
        %v1368 = vsel %vm320, %v1362, %v1363
        %v1369 = vsel %vm1366, %v1356, %v1368
        %v1370 = vsel %vm320, %v1363, %v1364
        %v1371 = vsel %vm1366, %v1358, %v1370
        %v1372 = vsel %vm1366, %v1360, %v1364
        %1377 = vst [vmem:[#allocation2 + $0x150] sm:$0xcc] %v1367
        %1378 = vst [vmem:[#allocation2 + $0x158] sm:$0xcc] %v1369
        %1379 = vst [vmem:[#allocation2 + $0x160] sm:$0xcc] %v1371
        %1380 = vst [vmem:[#allocation2 + $0x168] sm:$0xc] %v1372
        %v1381 = vld [vmem:[%s227 + $0x2] sm:$0xff]
        %v1382 = vld [vmem:[%s227 + $0xa] sm:$0xff]
        %1384 = vst [vmem:[#allocation1] ss:$2 sm:$0xff] %v1381
        %s1386 = scalar_lea.vmem [#allocation1], 16
        %1387 = vst [vmem:[%s1386] ss:$2 sm:$0xff] %v1382
        %v1388 = vld.sshfl [vmem:[#allocation1] sm:$0xff pattern:$0x75643120]
        %v1390 = vld.sshfl [vmem:[#allocation1 + $0x8] sm:$0xff pattern:$0x75643120]
        %v1392 = vld.sshfl [vmem:[#allocation1 + $0x10] sm:$0xff pattern:$0x75643120]
        %v1394 = vld.sshfl [vmem:[#allocation1 + $0x18] sm:$0xff pattern:$0x75643120]
        %1396 = vrot.lane.b32.xlu0 %v1388, 34
        %v1397 = vpop.permute.xlu0 %1396
        %1398 = vrot.lane.b32.xlu0 %v1390, 34
        %v1399 = vpop.permute.xlu0 %1398
        %1400 = vrot.lane.b32.xlu0 %v1392, 34
        %v1401 = vpop.permute.xlu0 %1400
        %1402 = vrot.lane.b32.xlu0 %v1394, 34
        %v1403 = vpop.permute.xlu0 %1402
        %v1404 = vrot.slane %v1397, 4
        %v1405 = vrot.slane %v1399, 4
        %v1406 = vrot.slane %v1401, 4
        %v1407 = vrot.slane %v1403, 4
        %v1408 = vsel %vm320, %v1404, %v1405
        %vm1409 = vcmask 277504
        %v1410 = vsel %vm1409, %v1397, %v1408
        %v1411 = vsel %vm320, %v1405, %v1406
        %v1412 = vsel %vm1409, %v1399, %v1411
        %v1413 = vsel %vm320, %v1406, %v1407
        %v1414 = vsel %vm1409, %v1401, %v1413
        %v1415 = vsel %vm1409, %v1403, %v1407
        %1420 = vst [vmem:[#allocation2 + $0x16c] sm:$0x33] %v1410
        %1421 = vst [vmem:[#allocation2 + $0x174] sm:$0x33] %v1412
        %1422 = vst [vmem:[#allocation2 + $0x17c] sm:$0x33] %v1414
        %1423 = vst [vmem:[#allocation2 + $0x184] sm:$0x3] %v1415
        %v1424 = vld [vmem:[#allocation6] sm:$0xf]
        %v1425 = vld [vmem:[#allocation6 + $0x4] sm:$0xf]
        %v1426 = vld [vmem:[#allocation2] sm:$0xff]
        %v1427 = vld [vmem:[#allocation2 + $0x8] sm:$0xff]
        %v1428 = vld [vmem:[#allocation2 + $0x10] sm:$0xff]
        %v1429 = vld [vmem:[#allocation2 + $0x18] sm:$0xf]
        %v1430 = vld [vmem:[#allocation2 + $0x1c] sm:$0xff]
        %v1431 = vld [vmem:[#allocation2 + $0x24] sm:$0xff]
        %v1432 = vld [vmem:[#allocation2 + $0x2c] sm:$0xff]
        %v1433 = vld [vmem:[#allocation2 + $0x34] sm:$0xf]
        %v1434 = vld [vmem:[#allocation2 + $0x38] sm:$0xff]
        %v1435 = vld [vmem:[#allocation2 + $0x40] sm:$0xff]
        %v1436 = vld [vmem:[#allocation2 + $0x48] sm:$0xff]
        %v1437 = vld [vmem:[#allocation2 + $0x50] sm:$0xf]
        %v1438 = vld [vmem:[#allocation2 + $0x54] sm:$0xff]
        %v1439 = vld [vmem:[#allocation2 + $0x5c] sm:$0xff]
        %v1440 = vld [vmem:[#allocation2 + $0x64] sm:$0xff]
        %v1441 = vld [vmem:[#allocation2 + $0x6c] sm:$0xf]
        %v1442 = vld [vmem:[#allocation2 + $0x70] sm:$0xff]
        %v1443 = vld [vmem:[#allocation2 + $0x78] sm:$0xff]
        %v1444 = vld [vmem:[#allocation2 + $0x80] sm:$0xff]
        %v1445 = vld [vmem:[#allocation2 + $0x88] sm:$0xf]
        %v1446 = vld [vmem:[#allocation2 + $0x8c] sm:$0xff]
        %v1447 = vld [vmem:[#allocation2 + $0x94] sm:$0xff]
        %v1448 = vld [vmem:[#allocation2 + $0x9c] sm:$0xff]
        %v1449 = vld [vmem:[#allocation2 + $0xa4] sm:$0xf]
        %v1450 = vld [vmem:[#allocation2 + $0xa8] sm:$0xff]
        %v1451 = vld [vmem:[#allocation2 + $0xb0] sm:$0xff]
        %v1452 = vld [vmem:[#allocation2 + $0xb8] sm:$0xff]
        %v1453 = vld [vmem:[#allocation2 + $0xc0] sm:$0xf]
        %v1454 = vld [vmem:[#allocation2 + $0xc4] sm:$0xff]
        %v1455 = vld [vmem:[#allocation2 + $0xcc] sm:$0xff]
        %v1456 = vld [vmem:[#allocation2 + $0xd4] sm:$0xff]
        %v1457 = vld [vmem:[#allocation2 + $0xdc] sm:$0xf]
        %v1458 = vld [vmem:[#allocation2 + $0xe0] sm:$0xff]
        %v1459 = vld [vmem:[#allocation2 + $0xe8] sm:$0xff]
        %v1460 = vld [vmem:[#allocation2 + $0xf0] sm:$0xff]
        %v1461 = vld [vmem:[#allocation2 + $0xf8] sm:$0xf]
        %v1462 = vld [vmem:[#allocation2 + $0xfc] sm:$0xff]
        %v1463 = vld [vmem:[#allocation2 + $0x104] sm:$0xff]
        %v1464 = vld [vmem:[#allocation2 + $0x10c] sm:$0xff]
        %v1465 = vld [vmem:[#allocation2 + $0x114] sm:$0xf]
        %v1466 = vld [vmem:[#allocation2 + $0x118] sm:$0xff]
        %v1467 = vld [vmem:[#allocation2 + $0x120] sm:$0xff]
        %v1468 = vld [vmem:[#allocation2 + $0x128] sm:$0xff]
        %v1469 = vld [vmem:[#allocation2 + $0x130] sm:$0xf]
        %v1470 = vld [vmem:[#allocation2 + $0x134] sm:$0xff]
        %v1471 = vld [vmem:[#allocation2 + $0x13c] sm:$0xff]
        %v1472 = vld [vmem:[#allocation2 + $0x144] sm:$0xff]
        %v1473 = vld [vmem:[#allocation2 + $0x14c] sm:$0xf]
        %v1474 = vld [vmem:[#allocation2 + $0x150] sm:$0xff]
        %v1475 = vld [vmem:[#allocation2 + $0x158] sm:$0xff]
        %v1476 = vld [vmem:[#allocation2 + $0x160] sm:$0xff]
        %v1477 = vld [vmem:[#allocation2 + $0x168] sm:$0xf]
        %v1478 = vld [vmem:[#allocation2 + $0x16c] sm:$0xff]
        %v1479 = vld [vmem:[#allocation2 + $0x174] sm:$0xff]
        %v1480 = vld [vmem:[#allocation2 + $0x17c] sm:$0xff]
        %v1481 = vld [vmem:[#allocation2 + $0x184] sm:$0xf]
        %v1482 = vld [vmem:[#allocation2 + $0x188] sm:$0xff]
        %v1483 = vld [vmem:[#allocation2 + $0x190] sm:$0xff]
        %v1484 = vld [vmem:[#allocation2 + $0x198] sm:$0xff]
        %v1485 = vld [vmem:[#allocation2 + $0x1a0] sm:$0xf]
        %v1486 = vld [vmem:[#allocation2 + $0x1a4] sm:$0xff]
        %v1487 = vld [vmem:[#allocation2 + $0x1ac] sm:$0xff]
        %v1488 = vld [vmem:[#allocation2 + $0x1b4] sm:$0xff]
        %v1489 = vld [vmem:[#allocation2 + $0x1bc] sm:$0xf]
        %v1490 = vld [vmem:[%s2] sm:$0xff]
        %v1491 = vld [vmem:[%s2 + $0x8] sm:$0xff]
        %1493 = vset.pattern.permute.xlu0 0
        %1494 = vperm.xlu0 %1493, %v1490
        %v1495 = vpop.permute.xlu0 %1494
        %1498 = vset.pattern.permute.xlu0 0
        %1499 = vperm.xlu0 %1498, %v1491
        %v1500 = vpop.permute.xlu0 %1499
        %v1504 = vunpack.c.l.b16 %v1424
        %v1505 = vunpack.c.l.b16 %v1425
        %v1506 = vpack.c.b16 %v1505, %v1504
        %v1572 = vunpack.c.l.b16 %v1426
        %v1573 = vunpack.c.h.b16 %v1426
        %v1574 = vunpack.c.l.b16 %v1427
        %v1575 = vunpack.c.h.b16 %v1427
        %v1576 = vunpack.c.l.b16 %v1428
        %v1577 = vunpack.c.h.b16 %v1428
        %v1578 = vunpack.c.l.b16 %v1429
        %v1579 = vunpack.c.l.b16 %v1430
        %v1580 = vunpack.c.h.b16 %v1430
        %v1581 = vunpack.c.l.b16 %v1431
        %v1582 = vunpack.c.h.b16 %v1431
        %v1583 = vunpack.c.l.b16 %v1432
        %v1584 = vunpack.c.h.b16 %v1432
        %v1585 = vunpack.c.l.b16 %v1433
        %v1586 = vunpack.c.l.b16 %v1434
        %v1587 = vunpack.c.h.b16 %v1434
        %v1588 = vunpack.c.l.b16 %v1435
        %v1589 = vunpack.c.h.b16 %v1435
        %v1590 = vunpack.c.l.b16 %v1436
        %v1591 = vunpack.c.h.b16 %v1436
        %v1592 = vunpack.c.l.b16 %v1437
        %v1593 = vunpack.c.l.b16 %v1438
        %v1594 = vunpack.c.h.b16 %v1438
        %v1595 = vunpack.c.l.b16 %v1439
        %v1596 = vunpack.c.h.b16 %v1439
        %v1597 = vunpack.c.l.b16 %v1440
        %v1598 = vunpack.c.h.b16 %v1440
        %v1599 = vunpack.c.l.b16 %v1441
        %v1600 = vunpack.c.l.b16 %v1442
        %v1601 = vunpack.c.h.b16 %v1442
        %v1602 = vunpack.c.l.b16 %v1443
        %v1603 = vunpack.c.h.b16 %v1443
        %v1604 = vunpack.c.l.b16 %v1444
        %v1605 = vunpack.c.h.b16 %v1444
        %v1606 = vunpack.c.l.b16 %v1445
        %v1607 = vunpack.c.l.b16 %v1446
        %v1608 = vunpack.c.h.b16 %v1446
        %v1609 = vunpack.c.l.b16 %v1447
        %v1610 = vunpack.c.h.b16 %v1447
        %v1611 = vunpack.c.l.b16 %v1448
        %v1612 = vunpack.c.h.b16 %v1448
        %v1613 = vunpack.c.l.b16 %v1449
        %v1614 = vunpack.c.l.b16 %v1450
        %v1615 = vunpack.c.h.b16 %v1450
        %v1616 = vunpack.c.l.b16 %v1451
        %v1617 = vunpack.c.h.b16 %v1451
        %v1618 = vunpack.c.l.b16 %v1452
        %v1619 = vunpack.c.h.b16 %v1452
        %v1620 = vunpack.c.l.b16 %v1453
        %v1621 = vunpack.c.l.b16 %v1454
        %v1622 = vunpack.c.h.b16 %v1454
        %v1623 = vunpack.c.l.b16 %v1455
        %v1624 = vunpack.c.h.b16 %v1455
        %v1625 = vunpack.c.l.b16 %v1456
        %v1626 = vunpack.c.h.b16 %v1456
        %v1627 = vunpack.c.l.b16 %v1457
        %v1628 = vunpack.c.l.b16 %v1458
        %v1629 = vunpack.c.h.b16 %v1458
        %v1630 = vunpack.c.l.b16 %v1459
        %v1631 = vunpack.c.h.b16 %v1459
        %v1632 = vunpack.c.l.b16 %v1460
        %v1633 = vunpack.c.h.b16 %v1460
        %v1634 = vunpack.c.l.b16 %v1461
        %v1635 = vunpack.c.l.b16 %v1462
        %v1636 = vunpack.c.h.b16 %v1462
        %v1637 = vunpack.c.l.b16 %v1463
        %v1638 = vunpack.c.h.b16 %v1463
        %v1639 = vunpack.c.l.b16 %v1464
        %v1640 = vunpack.c.h.b16 %v1464
        %v1641 = vunpack.c.l.b16 %v1465
        %v1642 = vunpack.c.l.b16 %v1466
        %v1643 = vunpack.c.h.b16 %v1466
        %v1644 = vunpack.c.l.b16 %v1467
        %v1645 = vunpack.c.h.b16 %v1467
        %v1646 = vunpack.c.l.b16 %v1468
        %v1647 = vunpack.c.h.b16 %v1468
        %v1648 = vunpack.c.l.b16 %v1469
        %v1649 = vunpack.c.l.b16 %v1470
        %v1650 = vunpack.c.h.b16 %v1470
        %v1651 = vunpack.c.l.b16 %v1471
        %v1652 = vunpack.c.h.b16 %v1471
        %v1653 = vunpack.c.l.b16 %v1472
        %v1654 = vunpack.c.h.b16 %v1472
        %v1655 = vunpack.c.l.b16 %v1473
        %v1656 = vunpack.c.l.b16 %v1474
        %v1657 = vunpack.c.h.b16 %v1474
        %v1658 = vunpack.c.l.b16 %v1475
        %v1659 = vunpack.c.h.b16 %v1475
        %v1660 = vunpack.c.l.b16 %v1476
        %v1661 = vunpack.c.h.b16 %v1476
        %v1662 = vunpack.c.l.b16 %v1477
        %v1663 = vunpack.c.l.b16 %v1478
        %v1664 = vunpack.c.h.b16 %v1478
        %v1665 = vunpack.c.l.b16 %v1479
        %v1666 = vunpack.c.h.b16 %v1479
        %v1667 = vunpack.c.l.b16 %v1480
        %v1668 = vunpack.c.h.b16 %v1480
        %v1669 = vunpack.c.l.b16 %v1481
        %v1670 = vunpack.c.l.b16 %v1482
        %v1671 = vunpack.c.h.b16 %v1482
        %v1672 = vunpack.c.l.b16 %v1483
        %v1673 = vunpack.c.h.b16 %v1483
        %v1674 = vunpack.c.l.b16 %v1484
        %v1675 = vunpack.c.h.b16 %v1484
        %v1676 = vunpack.c.l.b16 %v1485
        %v1677 = vunpack.c.l.b16 %v1486
        %v1678 = vunpack.c.h.b16 %v1486
        %v1679 = vunpack.c.l.b16 %v1487
        %v1680 = vunpack.c.h.b16 %v1487
        %v1681 = vunpack.c.l.b16 %v1488
        %v1682 = vunpack.c.h.b16 %v1488
        %v1683 = vunpack.c.l.b16 %v1489
        %v1684 = vpack.c.b16 %v1579, %v1572
        %v1685 = vpack.c.b16 %v1580, %v1573
        %v1686 = vpack.c.b16 %v1581, %v1574
        %v1687 = vpack.c.b16 %v1582, %v1575
        %v1688 = vpack.c.b16 %v1583, %v1576
        %v1689 = vpack.c.b16 %v1584, %v1577
        %v1690 = vpack.c.b16 %v1585, %v1578
        %v1691 = vpack.c.b16 %v1593, %v1586
        %v1692 = vpack.c.b16 %v1594, %v1587
        %v1693 = vpack.c.b16 %v1595, %v1588
        %v1694 = vpack.c.b16 %v1596, %v1589
        %v1695 = vpack.c.b16 %v1597, %v1590
        %v1696 = vpack.c.b16 %v1598, %v1591
        %v1697 = vpack.c.b16 %v1599, %v1592
        %v1698 = vpack.c.b16 %v1607, %v1600
        %v1699 = vpack.c.b16 %v1608, %v1601
        %v1700 = vpack.c.b16 %v1609, %v1602
        %v1701 = vpack.c.b16 %v1610, %v1603
        %v1702 = vpack.c.b16 %v1611, %v1604
        %v1703 = vpack.c.b16 %v1612, %v1605
        %v1704 = vpack.c.b16 %v1613, %v1606
        %v1705 = vpack.c.b16 %v1621, %v1614
        %v1706 = vpack.c.b16 %v1622, %v1615
        %v1707 = vpack.c.b16 %v1623, %v1616
        %v1708 = vpack.c.b16 %v1624, %v1617
        %v1709 = vpack.c.b16 %v1625, %v1618
        %v1710 = vpack.c.b16 %v1626, %v1619
        %v1711 = vpack.c.b16 %v1627, %v1620
        %v1712 = vpack.c.b16 %v1635, %v1628
        %v1713 = vpack.c.b16 %v1636, %v1629
        %v1714 = vpack.c.b16 %v1637, %v1630
        %v1715 = vpack.c.b16 %v1638, %v1631
        %v1716 = vpack.c.b16 %v1639, %v1632
        %v1717 = vpack.c.b16 %v1640, %v1633
        %v1718 = vpack.c.b16 %v1641, %v1634
        %v1719 = vpack.c.b16 %v1649, %v1642
        %v1720 = vpack.c.b16 %v1650, %v1643
        %v1721 = vpack.c.b16 %v1651, %v1644
        %v1722 = vpack.c.b16 %v1652, %v1645
        %v1723 = vpack.c.b16 %v1653, %v1646
        %v1724 = vpack.c.b16 %v1654, %v1647
        %v1725 = vpack.c.b16 %v1655, %v1648
        %v1726 = vpack.c.b16 %v1663, %v1656
        %v1727 = vpack.c.b16 %v1664, %v1657
        %v1728 = vpack.c.b16 %v1665, %v1658
        %v1729 = vpack.c.b16 %v1666, %v1659
        %v1730 = vpack.c.b16 %v1667, %v1660
        %v1731 = vpack.c.b16 %v1668, %v1661
        %v1732 = vpack.c.b16 %v1669, %v1662
        %v1733 = vpack.c.b16 %v1677, %v1670
        %v1734 = vpack.c.b16 %v1678, %v1671
        %v1735 = vpack.c.b16 %v1679, %v1672
        %v1736 = vpack.c.b16 %v1680, %v1673
        %v1737 = vpack.c.b16 %v1681, %v1674
        %v1738 = vpack.c.b16 %v1682, %v1675
        %v1739 = vpack.c.b16 %v1683, %v1676
        %1796 = vmatpush.bf16.msra.mxu0 %v1733
        %1797 = vmatpush.bf16.msra.mxu0 %v1726
        %1798 = vmatpush.bf16.msra.mxu0 %v1719
        %1799 = vmatpush.bf16.msra.mxu0 %v1712
        %1800 = vmatpush.bf16.msra.mxu0 %v1705
        %1801 = vmatpush.bf16.msra.mxu0 %v1698
        %1802 = vmatpush.bf16.msra.mxu0 %v1691
        %1803 = vmatpush.bf16.msra.mxu0 %v1684
        %1804 = vmatmul.bf16.gmra.mxu0 %v1506
        %v1805 = vpop.f32.mrf.mxu0
        %v1806 = vadd.f32 %v1495, %v1805
        %v1807 = vpop.f32.mrf.mxu0
        %v1808 = vadd.f32 %v1500, %v1807
        %1809 = vdwg.mxu0
        %1810 = vmatpush.bf16.msra.mxu0 %v1734
        %1811 = vmatpush.bf16.msra.mxu0 %v1727
        %1812 = vmatpush.bf16.msra.mxu0 %v1720
        %1813 = vmatpush.bf16.msra.mxu0 %v1713
        %1814 = vmatpush.bf16.msra.mxu0 %v1706
        %1815 = vmatpush.bf16.msra.mxu0 %v1699
        %1816 = vmatpush.bf16.msra.mxu0 %v1692
        %1817 = vmatpush.bf16.msra.mxu0 %v1685
        %1818 = vmatmul.bf16.gmra.mxu0 %v1506
        %v1819 = vpop.f32.mrf.mxu0
        %v1820 = vadd.f32 %v1495, %v1819
        %v1821 = vpop.f32.mrf.mxu0
        %v1822 = vadd.f32 %v1500, %v1821
        %1823 = vdwg.mxu0
        %1824 = vmatpush.bf16.msra.mxu0 %v1735
        %1825 = vmatpush.bf16.msra.mxu0 %v1728
        %1826 = vmatpush.bf16.msra.mxu0 %v1721
        %1827 = vmatpush.bf16.msra.mxu0 %v1714
        %1828 = vmatpush.bf16.msra.mxu0 %v1707
        %1829 = vmatpush.bf16.msra.mxu0 %v1700
        %1830 = vmatpush.bf16.msra.mxu0 %v1693
        %1831 = vmatpush.bf16.msra.mxu0 %v1686
        %1832 = vmatmul.bf16.gmra.mxu0 %v1506
        %v1833 = vpop.f32.mrf.mxu0
        %v1834 = vadd.f32 %v1495, %v1833
        %v1835 = vpop.f32.mrf.mxu0
        %v1836 = vadd.f32 %v1500, %v1835
        %1837 = vdwg.mxu0
        %1838 = vmatpush.bf16.msra.mxu0 %v1736
        %1839 = vmatpush.bf16.msra.mxu0 %v1729
        %1840 = vmatpush.bf16.msra.mxu0 %v1722
        %1841 = vmatpush.bf16.msra.mxu0 %v1715
        %1842 = vmatpush.bf16.msra.mxu0 %v1708
        %1843 = vmatpush.bf16.msra.mxu0 %v1701
        %1844 = vmatpush.bf16.msra.mxu0 %v1694
        %1845 = vmatpush.bf16.msra.mxu0 %v1687
        %1846 = vmatmul.bf16.gmra.mxu0 %v1506
        %v1847 = vpop.f32.mrf.mxu0
        %v1848 = vadd.f32 %v1495, %v1847
        %v1849 = vpop.f32.mrf.mxu0
        %v1850 = vadd.f32 %v1500, %v1849
        %1851 = vdwg.mxu0
        %1852 = vmatpush.bf16.msra.mxu0 %v1737
        %1853 = vmatpush.bf16.msra.mxu0 %v1730
        %1854 = vmatpush.bf16.msra.mxu0 %v1723
        %1855 = vmatpush.bf16.msra.mxu0 %v1716
        %1856 = vmatpush.bf16.msra.mxu0 %v1709
        %1857 = vmatpush.bf16.msra.mxu0 %v1702
        %1858 = vmatpush.bf16.msra.mxu0 %v1695
        %1859 = vmatpush.bf16.msra.mxu0 %v1688
        %1860 = vmatmul.bf16.gmra.mxu0 %v1506
        %v1861 = vpop.f32.mrf.mxu0
        %v1862 = vadd.f32 %v1495, %v1861
        %v1863 = vpop.f32.mrf.mxu0
        %v1864 = vadd.f32 %v1500, %v1863
        %1865 = vdwg.mxu0
        %1866 = vmatpush.bf16.msra.mxu0 %v1738
        %1867 = vmatpush.bf16.msra.mxu0 %v1731
        %1868 = vmatpush.bf16.msra.mxu0 %v1724
        %1869 = vmatpush.bf16.msra.mxu0 %v1717
        %1870 = vmatpush.bf16.msra.mxu0 %v1710
        %1871 = vmatpush.bf16.msra.mxu0 %v1703
        %1872 = vmatpush.bf16.msra.mxu0 %v1696
        %1873 = vmatpush.bf16.msra.mxu0 %v1689
        %1874 = vmatmul.bf16.gmra.mxu0 %v1506
        %v1875 = vpop.f32.mrf.mxu0
        %v1876 = vadd.f32 %v1495, %v1875
        %v1877 = vpop.f32.mrf.mxu0
        %v1878 = vadd.f32 %v1500, %v1877
        %1879 = vdwg.mxu0
        %1880 = vmatpush.bf16.msra.mxu0 %v1739
        %1881 = vmatpush.bf16.msra.mxu0 %v1732
        %1882 = vmatpush.bf16.msra.mxu0 %v1725
        %1883 = vmatpush.bf16.msra.mxu0 %v1718
        %1884 = vmatpush.bf16.msra.mxu0 %v1711
        %1885 = vmatpush.bf16.msra.mxu0 %v1704
        %1886 = vmatpush.bf16.msra.mxu0 %v1697
        %1887 = vmatpush.bf16.msra.mxu0 %v1690
        %1888 = vmatmul.bf16.gmra.mxu0 %v1506
        %v1889 = vpop.f32.mrf.mxu0
        %v1890 = vadd.f32 %v1495, %v1889
        %v1891 = vpop.f32.mrf.mxu0
        %v1892 = vadd.f32 %v1500, %v1891
        %1893 = vdwg.mxu0
        %v1894 = vld [vmem:[%s4] sm:$0xff]
        %v1896 = vperm.slane %v1894, 0
        %v1897 = vperm.slane %v1894, 1
        %v1898 = vperm.slane %v1894, 2
        %v1899 = vperm.slane %v1894, 3
        %v1900 = vperm.slane %v1894, 4
        %v1901 = vperm.slane %v1894, 5
        %v1902 = vperm.slane %v1894, 6
        %v1910 = vmul.f32 %v1806, %v1896
        %v1911 = vmul.f32 %v1820, %v1897
        %v1912 = vmul.f32 %v1834, %v1898
        %v1913 = vmul.f32 %v1848, %v1899
        %v1914 = vmul.f32 %v1862, %v1900
        %v1915 = vmul.f32 %v1876, %v1901
        %v1916 = vmul.f32 %v1890, %v1902
        %v1917 = vmul.f32 %v1808, %v1896
        %v1918 = vmul.f32 %v1822, %v1897
        %v1919 = vmul.f32 %v1836, %v1898
        %v1920 = vmul.f32 %v1850, %v1899
        %v1921 = vmul.f32 %v1864, %v1900
        %v1922 = vmul.f32 %v1878, %v1901
        %v1923 = vmul.f32 %v1892, %v1902
        %v1924 = vadd.f32 %v1910, %v1911
        %v1925 = vadd.f32 %v1924, %v1912
        %v1926 = vadd.f32 %v1925, %v1913
        %v1927 = vadd.f32 %v1926, %v1914
        %v1928 = vadd.f32 %v1927, %v1915
        %v1929 = vadd.f32 %v1928, %v1916
        %1930 = vadd.xlane.f32.xlu0 %v1929
        %v1931 = vpop.xlane.xlu0 %1930
        %v1932 = vadd.f32 %v1917, %v1918
        %v1933 = vadd.f32 %v1932, %v1919
        %v1934 = vadd.f32 %v1933, %v1920
        %v1935 = vadd.f32 %v1934, %v1921
        %v1936 = vadd.f32 %v1935, %v1922
        %v1937 = vadd.f32 %v1936, %v1923
        %1938 = vadd.xlane.f32.xlu0 %v1937
        %v1939 = vpop.xlane.xlu0 %1938
        %v1940 = vmul.f32 %v1910, %v1806
        %v1941 = vmul.f32 %v1911, %v1820
        %v1942 = vmul.f32 %v1912, %v1834
        %v1943 = vmul.f32 %v1913, %v1848
        %v1944 = vmul.f32 %v1914, %v1862
        %v1945 = vmul.f32 %v1915, %v1876
        %v1946 = vmul.f32 %v1916, %v1890
        %v1947 = vmul.f32 %v1917, %v1808
        %v1948 = vmul.f32 %v1918, %v1822
        %v1949 = vmul.f32 %v1919, %v1836
        %v1950 = vmul.f32 %v1920, %v1850
        %v1951 = vmul.f32 %v1921, %v1864
        %v1952 = vmul.f32 %v1922, %v1878
        %v1953 = vmul.f32 %v1923, %v1892
        %v1954 = vadd.f32 %v1940, %v1941
        %v1955 = vadd.f32 %v1954, %v1942
        %v1956 = vadd.f32 %v1955, %v1943
        %v1957 = vadd.f32 %v1956, %v1944
        %v1958 = vadd.f32 %v1957, %v1945
        %v1959 = vadd.f32 %v1958, %v1946
        %1960 = vadd.xlane.f32.xlu0 %v1959
        %v1961 = vpop.xlane.xlu0 %1960
        %v1962 = vadd.f32 %v1947, %v1948
        %v1963 = vadd.f32 %v1962, %v1949
        %v1964 = vadd.f32 %v1963, %v1950
        %v1965 = vadd.f32 %v1964, %v1951
        %v1966 = vadd.f32 %v1965, %v1952
        %v1967 = vadd.f32 %v1966, %v1953
        %1968 = vadd.xlane.f32.xlu0 %v1967
        %v1969 = vpop.xlane.xlu0 %1968
        %v1970 = vld [vmem:[%s3] sm:$0xff]
        %v1971 = vld [vmem:[%s3 + $0x8] sm:$0xff]
        %vm1972 = vcmask 130048
        %v1974 = vsel %vm1972, %v1970, 0
        %v1977 = vsel %vm1972, %v1971, 0
        %1979 = vmatpush.msra.mxu0 0.0
        %1980 = vmatpush.msra.mxu0 0.0
        %1981 = vmatpush.msra.mxu0 0.0
        %1982 = vmatpush.msra.mxu0 0.0
        %1983 = vmatpush.msra.mxu0 0.0
        %1984 = vmatpush.msra.mxu0 0.0
        %1985 = vmatpush.msra.mxu0 0.0
        %1986 = vmatpush.msra.mxu0 0.0
        %1987 = vmatpush.msra.mxu0 0.0
        %1988 = vmatpush.msra.mxu0 0.0
        %1989 = vmatpush.msra.mxu0 0.0
        %1990 = vmatpush.msra.mxu0 0.0
        %1991 = vmatpush.msra.mxu0 0.0
        %1992 = vmatpush.msra.mxu0 0.0
        %1993 = vmatpush.msra.mxu0 %v1939
        %1994 = vmatpush.msra.mxu0 %v1931
        %1995 = vmatmul.f32.gmra.mxu0 %v1974
        %v1996 = vpop.f32.mrf.mxu0
        %v1997 = vadd.f32 0.0, %v1996
        %1998 = vmatmul.f32.gmra.mxu0 %v1977
        %v1999 = vpop.f32.mrf.mxu0
        %v2000 = vadd.f32 0.0, %v1999
        %2001 = vdwg.mxu0
        %2002 = vmatpush.msra.mxu0 0.0
        %2003 = vmatpush.msra.mxu0 0.0
        %2004 = vmatpush.msra.mxu0 0.0
        %2005 = vmatpush.msra.mxu0 0.0
        %2006 = vmatpush.msra.mxu0 0.0
        %2007 = vmatpush.msra.mxu0 0.0
        %2008 = vmatpush.msra.mxu0 0.0
        %2009 = vmatpush.msra.mxu0 0.0
        %2010 = vmatpush.msra.mxu0 0.0
        %2011 = vmatpush.msra.mxu0 0.0
        %2012 = vmatpush.msra.mxu0 0.0
        %2013 = vmatpush.msra.mxu0 0.0
        %2014 = vmatpush.msra.mxu0 0.0
        %2015 = vmatpush.msra.mxu0 0.0
        %2016 = vmatpush.msra.mxu0 %v1969
        %2017 = vmatpush.msra.mxu0 %v1961
        %2018 = vmatmul.f32.gmra.mxu0 %v1974
        %v2019 = vpop.f32.mrf.mxu0
        %v2020 = vadd.f32 0.0, %v2019
        %2021 = vmatmul.f32.gmra.mxu0 %v1977
        %v2022 = vpop.f32.mrf.mxu0
        %v2023 = vadd.f32 0.0, %v2022
        %2024 = vdwg.mxu0
        %v2025 = vmul.f32 %v1997, %v1997
        %v2026 = vmul.f32 %v2000, %v2000
        %v2027 = vsub.f32 %v2020, %v2025
        %v2028 = vsub.f32 %v2023, %v2026
        %v2029 = vmax.f32 %v2027, 0.0
        %v2030 = vmax.f32 %v2028, 0.0
        %v2031 = vadd.f32 %v2029, 1e-05
        %v2032 = vadd.f32 %v2030, 1e-05
        %v2033 = vrsqrt.pop %v2031
        %v2034 = vmul.f32 %v2033, %v2031
        %v2035 = vmul.f32 %v2034, %v2033
        %v2036 = vmul.f32 0.5, %v2035
        %v2037 = vsub.f32 1.5, %v2036
        %v2038 = vmul.f32 %v2033, %v2037
        %vm2039 = vweird.f32 %v2031
        %vm2040 = vweird.f32 %v2033
        %vm2041 = vmor %vm2039, %vm2040
        %v2042 = vsel %vm2041, %v2033, %v2038
        %v2043 = vrsqrt.pop %v2032
        %v2044 = vmul.f32 %v2043, %v2032
        %v2045 = vmul.f32 %v2044, %v2043
        %v2046 = vmul.f32 0.5, %v2045
        %v2047 = vsub.f32 1.5, %v2046
        %v2048 = vmul.f32 %v2043, %v2047
        %vm2049 = vweird.f32 %v2032
        %vm2050 = vweird.f32 %v2043
        %vm2051 = vmor %vm2049, %vm2050
        %v2052 = vsel %vm2051, %v2043, %v2048
        %2053 = vrot.lane.b32.xlu0 %v1490, 127
        %v2054 = vpop.permute.xlu0 %2053
        %2055 = vrot.lane.b32.xlu0 %v1491, 127
        %v2056 = vpop.permute.xlu0 %2055
        %v2059 = vmul.f32 %v2042, %v2054
        %v2060 = vmul.f32 %v2052, %v2056
        %v2061 = vmul.f32 %v1997, %v2059
        %v2062 = vmul.f32 %v2000, %v2060
        %2065 = vrot.lane.b32.xlu0 %v2061, 2
        %v2066 = vpop.permute.xlu0 %2065
        %2067 = vrot.lane.b32.xlu0 %v2062, 2
        %v2068 = vpop.permute.xlu0 %2067
        %v2071 = vsub.f32 %v1490, %v2066
        %v2072 = vsub.f32 %v1491, %v2068
        %2074 = vset.pattern.permute.xlu0 0
        %2075 = vperm.xlu0 %2074, %v2059
        %v2076 = vpop.permute.xlu0 %2075
        %2079 = vset.pattern.permute.xlu0 0
        %2080 = vperm.xlu0 %2079, %v2060
        %v2081 = vpop.permute.xlu0 %2080
        %v2083 = vmul.f32 %v1806, %v2076
        %v2084 = vmul.f32 %v1820, %v2076
        %v2085 = vmul.f32 %v1834, %v2076
        %v2086 = vmul.f32 %v1848, %v2076
        %v2087 = vmul.f32 %v1862, %v2076
        %v2088 = vmul.f32 %v1876, %v2076
        %v2089 = vmul.f32 %v1890, %v2076
        %v2090 = vmul.f32 %v1808, %v2081
        %v2091 = vmul.f32 %v1822, %v2081
        %v2092 = vmul.f32 %v1836, %v2081
        %v2093 = vmul.f32 %v1850, %v2081
        %v2094 = vmul.f32 %v1864, %v2081
        %v2095 = vmul.f32 %v1878, %v2081
        %v2096 = vmul.f32 %v1892, %v2081
        %2098 = vset.pattern.permute.xlu0 2
        %2099 = vperm.xlu0 %2098, %v2071
        %v2100 = vpop.permute.xlu0 %2099
        %2103 = vset.pattern.permute.xlu0 2
        %2104 = vperm.xlu0 %2103, %v2072
        %v2105 = vpop.permute.xlu0 %2104
        %v2107 = vadd.f32 %v2083, %v2100
        %v2108 = vadd.f32 %v2084, %v2100
        %v2109 = vadd.f32 %v2085, %v2100
        %v2110 = vadd.f32 %v2086, %v2100
        %v2111 = vadd.f32 %v2087, %v2100
        %v2112 = vadd.f32 %v2088, %v2100
        %v2113 = vadd.f32 %v2089, %v2100
        %v2114 = vadd.f32 %v2090, %v2105
        %v2115 = vadd.f32 %v2091, %v2105
        %v2116 = vadd.f32 %v2092, %v2105
        %v2117 = vadd.f32 %v2093, %v2105
        %v2118 = vadd.f32 %v2094, %v2105
        %v2119 = vadd.f32 %v2095, %v2105
        %v2120 = vadd.f32 %v2096, %v2105
        %vm2121 = vcmp.gt.f32.partialorder %v2107, 0.0
        %vm2122 = vcmp.gt.f32.partialorder %v2108, 0.0
        %vm2123 = vcmp.gt.f32.partialorder %v2109, 0.0
        %vm2124 = vcmp.gt.f32.partialorder %v2110, 0.0
        %vm2125 = vcmp.gt.f32.partialorder %v2111, 0.0
        %vm2126 = vcmp.gt.f32.partialorder %v2112, 0.0
        %vm2127 = vcmp.gt.f32.partialorder %v2113, 0.0
        %vm2128 = vcmp.gt.f32.partialorder %v2114, 0.0
        %vm2129 = vcmp.gt.f32.partialorder %v2115, 0.0
        %vm2130 = vcmp.gt.f32.partialorder %v2116, 0.0
        %vm2131 = vcmp.gt.f32.partialorder %v2117, 0.0
        %vm2132 = vcmp.gt.f32.partialorder %v2118, 0.0
        %vm2133 = vcmp.gt.f32.partialorder %v2119, 0.0
        %vm2134 = vcmp.gt.f32.partialorder %v2120, 0.0
        %v2135 = vmul.f32 %v2107, 0.2
        %v2136 = vmul.f32 %v2108, 0.2
        %v2137 = vmul.f32 %v2109, 0.2
        %v2138 = vmul.f32 %v2110, 0.2
        %v2139 = vmul.f32 %v2111, 0.2
        %v2140 = vmul.f32 %v2112, 0.2
        %v2141 = vmul.f32 %v2113, 0.2
        %v2142 = vmul.f32 %v2114, 0.2
        %v2143 = vmul.f32 %v2115, 0.2
        %v2144 = vmul.f32 %v2116, 0.2
        %v2145 = vmul.f32 %v2117, 0.2
        %v2146 = vmul.f32 %v2118, 0.2
        %v2147 = vmul.f32 %v2119, 0.2
        %v2148 = vmul.f32 %v2120, 0.2
        %v2149 = vsel %vm2121, %v2107, %v2135
        %v2150 = vsel %vm2122, %v2108, %v2136
        %v2151 = vsel %vm2123, %v2109, %v2137
        %v2152 = vsel %vm2124, %v2110, %v2138
        %v2153 = vsel %vm2125, %v2111, %v2139
        %v2154 = vsel %vm2126, %v2112, %v2140
        %v2155 = vsel %vm2127, %v2113, %v2141
        %v2156 = vsel %vm2128, %v2114, %v2142
        %v2157 = vsel %vm2129, %v2115, %v2143
        %v2158 = vsel %vm2130, %v2116, %v2144
        %v2159 = vsel %vm2131, %v2117, %v2145
        %v2160 = vsel %vm2132, %v2118, %v2146
        %v2161 = vsel %vm2133, %v2119, %v2147
        %v2162 = vsel %vm2134, %v2120, %v2148
        %v2163 = vpack.c.bf16 %v2150, %v2149
        %v2164 = vpack.c.bf16 %v2152, %v2151
        %v2165 = vpack.c.bf16 %v2154, %v2153
        %v2166 = vpack.c.bf16 %v2155, %v2155
        %v2167 = vpack.c.bf16 %v2157, %v2156
        %v2168 = vpack.c.bf16 %v2159, %v2158
        %v2169 = vpack.c.bf16 %v2161, %v2160
        %v2170 = vpack.c.bf16 %v2162, %v2162
        %2171 = vst [vmem:[%s259] sm:$0xff] %v2163
        %2172 = vst [vmem:[%s259 + $0x8] sm:$0xff] %v2164
        %2173 = vst [vmem:[%s259 + $0x10] sm:$0xff] %v2165
        %2174 = vst [vmem:[%s259 + $0x18] sm:$0xf] %v2166
        %2175 = vst [vmem:[%s259 + $0x1c] sm:$0xff] %v2167
        %2176 = vst [vmem:[%s259 + $0x24] sm:$0xff] %v2168
        %2177 = vst [vmem:[%s259 + $0x2c] sm:$0xff] %v2169
        %2178 = vst [vmem:[%s259 + $0x34] sm:$0xf] %v2170
        %s2179 = sand.u32 %s141, 1
        %s2180 = scalar_lea.sflag [#allocation5], %s2179
        %s2181 = sand.u32 %s141, 1
        %s2182 = smul.addr %s2181, 56
        %s2183 = scalar_lea.vmem [#allocation8], %s2182
        // Predicated region
        $region49: #{tpu_custom_call.1} parent=39 // pred_check
          %p2184 = pneg %p151
        $region50: #{tpu_custom_call.1} parent=39 // pred_check_branch
          %2186 = sbr.rel (%p2184) target = $region52
        $region51: #{tpu_custom_call.1} parent=39 // pred_region
          %2188 = vsyncadd %s2180, 0
          %s2189 = smul.addr %s23, 14
          %s2190 = smul.addr %s2189, 4
          %s2191 = scalar_lea.hbm %s5, %s2190
          %s2192 = sshll.u32 %s2183, 4
          %s2193 = int_to_ptr.vmem [resolvable:$true] %s2192
          %s2194 = sshll.u32 %s2191, 4
          %s2195 = int_to_ptr.hbm [resolvable:$true] %s2194
          %2200 = dma.vmem_to_hbm [thread:$0]  %s2193, 896, %s2195, %s2180, 448, 448, 28
        $region52: #{tpu_custom_call.1} parent=39 // pred_fallthru
          _
      $region40: #{tpu_custom_call.1} parent=5 // pred_fallthru
        _
      %p2201 = scmp.le.s32.totalorder 2, %s18
      // Predicated region
      $region53: #{tpu_custom_call.1} parent=5 // pred_check
        %p2202 = pneg %p2201
      $region54: #{tpu_custom_call.1} parent=5 // pred_check_branch
        %2204 = sbr.rel (%p2202) target = $region56
      $region55: #{tpu_custom_call.1} parent=5 // pred_region
        %s2205 = ssub.s32 %s18, 2
        // Predicated region
        $region57: #{tpu_custom_call.1} parent=55 // pred_check
          %p2206 = pneg %p157
        $region58: #{tpu_custom_call.1} parent=55 // pred_check_branch
          %2208 = sbr.rel (%p2206) target = $region60
        $region59: #{tpu_custom_call.1} parent=55 // pred_region
          %s2209 = sand.u32 %s142, 1
          %s2210 = scalar_lea.sflag [#allocation5], %s2209
          %s2211 = sand.u32 %s142, 1
          %s2212 = smul.addr %s2211, 56
          %s2213 = scalar_lea.vmem [#allocation8], %s2212
          %2215 = dma.done %s2210, 896
        $region60: #{tpu_custom_call.1} parent=55 // pred_fallthru
          _
      $region56: #{tpu_custom_call.1} parent=5 // pred_fallthru
        _
    $region6: #{tpu_custom_call.1} parent=1 // loop_footer
      %s22 = sadd.s32 1, %s18
    $region7: #{tpu_custom_call.1} parent=1 // loop_footer_branch
      %17 = sbr.rel target = $region3
    $region8: #{tpu_custom_call.1} parent=1 // loop_exit
      _
    %2216 = vsyncpa [#allocation4], 1
    %s2217 = scalar_lea.sflag [#allocation4], 1
    %2218 = vsyncpa %s2217, 1
    %2219 = vsyncpa [#allocation7], 1
    %2220 = vsyncpa [#allocation5], 1
    %s2221 = scalar_lea.sflag [#allocation5], 1
    %2222 = vsyncpa %s2221, 1

</llo_original>
